<compile_context>
chip_gen: v6e
topology: v6e:2x2x1
jax: 0.10.0
libtpu: 0.0.40
codegen_flags: <defaults>
</compile_context>

<pallas_src>
import functools

import jax
import jax.numpy as jnp
from jax.experimental import pallas as pl
from jax.experimental.pallas import tpu as pltpu


def _round_up(n, m):
    return (n + m - 1) // m * m


# -----------------------------------------------------------------------------
# Kernel
# -----------------------------------------------------------------------------
def ivae_fused_kernel(x_ref, y_ref, eps_ref,
                      w1_ref, b1_ref, wenc_ref, benc_ref,
                      wl1_ref, bl1_ref, wpri_ref, bpri_ref,
                      w3_ref, b3_ref, w4_ref, b4_ref,
                      recon_ref, enc_ref, pri_ref,
                      *, latent_dim):
    f32 = jnp.float32
    bf16 = jnp.bfloat16

    def lrelu(v):  # F.leaky_relu default slope 0.01; mul+max (2 VALU ops)
        return jnp.maximum(v, 0.01 * v)

    # ---- encode: h1 = lrelu(x@W1+b1); enc = h1@Wenc + benc  (= [mu | logvar]) --
    h1 = jnp.dot(x_ref[...].astype(bf16), w1_ref[...],
                 preferred_element_type=f32) + b1_ref[...]
    h1 = lrelu(h1)
    enc = jnp.dot(h1.astype(bf16), wenc_ref[...],
                  preferred_element_type=f32) + benc_ref[...]
    enc_ref[...] = enc                       # one lane-dense (tb, 2L) store

    # ---- prior: h2 = relu(y@Wl1+bl1); pri = h2@Wpri + bpri  (= [mup | logl]) --
    # TODO(synk): y is one-hot in the demo; a row-gather of Wl1 would skip the
    # K=10 MXU pass, but the matmul keeps the kernel correct for arbitrary y.
    h2 = jnp.maximum(jnp.dot(y_ref[...].astype(bf16), wl1_ref[...],
                             preferred_element_type=f32) + bl1_ref[...], 0.0)
    pri_ref[...] = jnp.dot(h2.astype(bf16), wpri_ref[...],
                           preferred_element_type=f32) + bpri_ref[...]

    # ---- reparameterize: z = mu + eps * exp(0.5*logvar)  (f32, EUP exp) -------
    mu = enc[:, :latent_dim]
    logvar = enc[:, latent_dim:]
    z = mu + eps_ref[...] * jnp.exp(0.5 * logvar)

    # ---- decode: sigmoid(lrelu(z@W3+b3) @ W4 + b4) ----------------------------
    h3 = jnp.dot(z.astype(bf16), w3_ref[...],
                 preferred_element_type=f32) + b3_ref[...]
    h3 = lrelu(h3)
    logits = jnp.dot(h3.astype(bf16), w4_ref[...],
                     preferred_element_type=f32) + b4_ref[...]
    # sigmoid via EUP exp + EUP approx reciprocal; clamp keeps exp finite.
    recon_ref[...] = pl.reciprocal(
        1.0 + jnp.exp(jnp.minimum(-logits, 80.0)), approx=True)


# -----------------------------------------------------------------------------
# Wrapper
# -----------------------------------------------------------------------------
def ivae_forward(params, x, y, eps):
    """params = (w1,b1, wenc,benc, wl1,bl1, wpri,bpri, w3,b3, w4,b4)."""
    (w1, b1, wenc, benc, wl1, bl1, wpri, bpri, w3, b3, w4, b4) = params

    x2d = x.reshape(-1, 784).astype(jnp.float32)     # mirrors x.view(-1, 784)
    B, data_dim = x2d.shape
    aux_dim = y.shape[1]
    latent_dim = eps.shape[1]
    two_l = 2 * latent_dim

    # Batch tile: multiple of 8, capped at 256 rows (fits default scoped VMEM on
    # v5e/v6e/v7x with double buffering); for B >= 16 we get >= 2 grid steps so
    # the "parallel" axis spans both TensorCores on v7x.
    tb = min(max(8, _round_up(pl.cdiv(B, 2), 8)), 256)
    Bp = _round_up(B, tb)
    grid = (Bp // tb,)

    if Bp != B:
        pad = Bp - B
        x2d = jnp.pad(x2d, ((0, pad), (0, 0)))
        y = jnp.pad(y, ((0, pad), (0, 0)))
        eps = jnp.pad(eps, ((0, pad), (0, 0)))

    def btile(d):
        return pl.BlockSpec((tb, d), lambda i: (i, 0))

    def resident(arr):   # weights/biases: same block every grid step (VMEM-resident)
        return pl.BlockSpec(arr.shape, lambda i: (0, 0))

    weights = (w1, b1, wenc, benc, wl1, bl1, wpri, bpri, w3, b3, w4, b4)

    out_shape = (
        jax.ShapeDtypeStruct((Bp, w4.shape[1]), jnp.float32),   # recon
        jax.ShapeDtypeStruct((Bp, two_l), jnp.float32),         # enc = [mu|logvar]
        jax.ShapeDtypeStruct((Bp, two_l), jnp.float32),         # pri = [mup|logl]
    )

    flops = 2 * Bp * (data_dim * 400 + 400 * two_l + aux_dim * 200
                      + 200 * two_l + latent_dim * 400 + 400 * data_dim)
    transcendentals = Bp * (data_dim + latent_dim)
    bytes_accessed = ((x2d.size + y.size + eps.size) * 4
                      + sum(int(w.size) * int(w.dtype.itemsize) for w in weights)
                      + (Bp * data_dim + 2 * Bp * two_l) * 4)

    recon, enc, pri = pl.pallas_call(
        functools.partial(ivae_fused_kernel, latent_dim=latent_dim),
        out_shape=out_shape,
        grid=grid,
        in_specs=[btile(data_dim), btile(aux_dim), btile(latent_dim)]
                 + [resident(w) for w in weights],
        out_specs=(btile(w4.shape[1]), btile(two_l), btile(two_l)),
        compiler_params=pltpu.CompilerParams(
            dimension_semantics=("parallel",),
            vmem_limit_bytes=48 * 1024 * 1024),
        cost_estimate=pl.CostEstimate(
            flops=int(flops),
            transcendentals=int(transcendentals),
            bytes_accessed=int(bytes_accessed)),
    )(x2d, y, eps, *weights)

    # Split the merged heads in XLA (free at this size), drop batch padding.
    recon = recon[:B]
    mu, logvar = enc[:B, :latent_dim], enc[:B, latent_dim:]
    mup, logl = pri[:B, :latent_dim], pri[:B, latent_dim:]
    return recon, mu, logvar, mup, logl


# -----------------------------------------------------------------------------
# Parameter init (deterministic; mirrors nn.Linear shapes, stored as (in,out);
# matmul weights kept in bf16 for the MXU, biases in f32)
# -----------------------------------------------------------------------------
def _init_linear(key, fan_in, fan_out):
    kw, kb = jax.random.split(key)
    bound = 1.0 / (fan_in ** 0.5)
    w = jax.random.uniform(kw, (fan_in, fan_out), jnp.float32, -bound, bound)
    b = jax.random.uniform(kb, (1, fan_out), jnp.float32, -bound, bound)
    return w, b


def init_ivae_params(key, latent_dim, hidden_prior=200):
    ks = jax.random.split(key, 8)
    w1, b1 = _init_linear(ks[0], 784, 400)             # fc1
    w21, b21 = _init_linear(ks[1], 400, latent_dim)    # fc21
    w22, b22 = _init_linear(ks[2], 400, latent_dim)    # fc22
    w3, b3 = _init_linear(ks[3], latent_dim, 400)      # fc3
    w4, b4 = _init_linear(ks[4], 400, 784)              # fc4
    wl1, bl1 = _init_linear(ks[5], 10, hidden_prior)            # l1
    wl21, bl21 = _init_linear(ks[6], hidden_prior, latent_dim)  # l21
    wl22, bl22 = _init_linear(ks[7], hidden_prior, latent_dim)  # l22
    # Merge encoder heads and prior heads into single matmuls.
    wenc = jnp.concatenate([w21, w22], axis=1)    # (400, 2L)
    benc = jnp.concatenate([b21, b22], axis=1)
    wpri = jnp.concatenate([wl21, wl22], axis=1)  # (200, 2L)
    bpri = jnp.concatenate([bl21, bl22], axis=1)
    bf = jnp.bfloat16
    return (w1.astype(bf), b1, wenc.astype(bf), benc, wl1.astype(bf), bl1,
            wpri.astype(bf), bpri, w3.astype(bf), b3, w4.astype(bf), b4)


# -----------------------------------------------------------------------------
# Pure-JAX reference (f32 math on the same bf16-valued weights)
# -----------------------------------------------------------------------------
def ivae_reference(params, x, y, eps):
    (w1, b1, wenc, benc, wl1, bl1, wpri, bpri, w3, b3, w4, b4) = params
    f32 = jnp.float32
    w1, wenc, wl1, wpri, w3, w4 = (w.astype(f32) for w in
                                   (w1, wenc, wl1, wpri, w3, w4))
    L = eps.shape[1]
    hp = jax.lax.Precision.HIGHEST
    x2d = x.reshape(-1, 784).astype(f32)
    h1 = jnp.dot(x2d, w1, precision=hp) + b1
    h1 = jnp.maximum(h1, 0.01 * h1)
    enc = jnp.dot(h1, wenc, precision=hp) + benc
    mu, logvar = enc[:, :L], enc[:, L:]
    h2 = jnp.maximum(jnp.dot(y, wl1, precision=hp) + bl1, 0.0)
    pri = jnp.dot(h2, wpri, precision=hp) + bpri
    mup, logl = pri[:, :L], pri[:, L:]
    z = mu + eps * jnp.exp(0.5 * logvar)
    h3 = jnp.dot(z, w3, precision=hp) + b3
    h3 = jnp.maximum(h3, 0.01 * h3)
    recon = jax.nn.sigmoid(jnp.dot(h3, w4, precision=hp) + b4)
    return recon, mu, logvar, mup, logl


# -----------------------------------------------------------------------------
if __name__ == "__main__":
    B, LATENT = 8, 8

    key = jax.random.PRNGKey(0)
    k_param, k_x, k_y, k_eps = jax.random.split(key, 4)

    params = init_ivae_params(k_param, LATENT)

    x = jax.random.uniform(k_x, (B, 1, 28, 28), jnp.float32)    # MNIST-like image
    y = jax.nn.one_hot(jax.random.randint(k_y, (B,), 0, 10), 10,
                       dtype=jnp.float32)                       # label one-hot
    # TODO(synk): torch.randn_like inside reparameterize has no matching RNG
    # stream; the Gaussian noise eps is drawn with jax.random and passed in.
    eps = jax.random.normal(k_eps, (B, LATENT), jnp.float32)

    recon, mu, logvar, mup, logl = ivae_forward(params, x, y, eps)
    jax.block_until_ready((recon, mu, logvar, mup, logl))

    # shape checks
    assert recon.shape == (B, 784)
    assert mu.shape == (B, LATENT) and logvar.shape == (B, LATENT)
    assert mup.shape == (B, LATENT) and logl.shape == (B, LATENT)

    # numeric sanity check against a pure-JAX reference
    ref = ivae_reference(params, x, y, eps)
    for got, want in zip((recon, mu, logvar, mup, logl), ref):
        assert bool(jnp.all(jnp.isfinite(got)))
        assert bool(jnp.allclose(got, want, atol=5e-2, rtol=5e-2))

    print("KERNEL_OK")
</pallas_src>

<mosaic_0001>
module attributes {stable_mosaic.version = 11 : i64} {
  func.func @ivae_fused_kernel(%arg0: i32, %arg1: memref<8x784xf32, #tpu.memory_space<vmem>>, %arg2: memref<8x10xf32, #tpu.memory_space<vmem>>, %arg3: memref<8x8xf32, #tpu.memory_space<vmem>>, %arg4: memref<784x400xbf16, #tpu.memory_space<vmem>>, %arg5: memref<1x400xf32, #tpu.memory_space<vmem>>, %arg6: memref<400x16xbf16, #tpu.memory_space<vmem>>, %arg7: memref<1x16xf32, #tpu.memory_space<vmem>>, %arg8: memref<10x200xbf16, #tpu.memory_space<vmem>>, %arg9: memref<1x200xf32, #tpu.memory_space<vmem>>, %arg10: memref<200x16xbf16, #tpu.memory_space<vmem>>, %arg11: memref<1x16xf32, #tpu.memory_space<vmem>>, %arg12: memref<8x400xbf16, #tpu.memory_space<vmem>>, %arg13: memref<1x400xf32, #tpu.memory_space<vmem>>, %arg14: memref<400x784xbf16, #tpu.memory_space<vmem>>, %arg15: memref<1x784xf32, #tpu.memory_space<vmem>>, %arg16: memref<8x784xf32, #tpu.memory_space<vmem>>, %arg17: memref<8x16xf32, #tpu.memory_space<vmem>>, %arg18: memref<8x16xf32, #tpu.memory_space<vmem>>) attributes {dimension_semantics = [#tpu.dimension_semantics<parallel>], iteration_bounds = array<i64: 1>, scalar_prefetch = 0 : i64, scratch_operands = 0 : i64, tpu.core_type = #tpu.core_type<tc>, window_params = [{transform_indices = @transform_0, window_bounds = array<i64: 8, 784>}, {transform_indices = @transform_1, window_bounds = array<i64: 8, 10>}, {transform_indices = @transform_2, window_bounds = array<i64: 8, 8>}, {pipeline_mode = #tpu.pipeline_mode<synchronous>, transform_indices = @transform_3, window_bounds = array<i64: 784, 400>}, {pipeline_mode = #tpu.pipeline_mode<synchronous>, transform_indices = @transform_4, window_bounds = array<i64: 1, 400>}, {pipeline_mode = #tpu.pipeline_mode<synchronous>, transform_indices = @transform_5, window_bounds = array<i64: 400, 16>}, {pipeline_mode = #tpu.pipeline_mode<synchronous>, transform_indices = @transform_6, window_bounds = array<i64: 1, 16>}, {pipeline_mode = #tpu.pipeline_mode<synchronous>, transform_indices = @transform_7, window_bounds = array<i64: 10, 200>}, {pipeline_mode = #tpu.pipeline_mode<synchronous>, transform_indices = @transform_8, window_bounds = array<i64: 1, 200>}, {pipeline_mode = #tpu.pipeline_mode<synchronous>, transform_indices = @transform_9, window_bounds = array<i64: 200, 16>}, {pipeline_mode = #tpu.pipeline_mode<synchronous>, transform_indices = @transform_10, window_bounds = array<i64: 1, 16>}, {pipeline_mode = #tpu.pipeline_mode<synchronous>, transform_indices = @transform_11, window_bounds = array<i64: 8, 400>}, {pipeline_mode = #tpu.pipeline_mode<synchronous>, transform_indices = @transform_12, window_bounds = array<i64: 1, 400>}, {pipeline_mode = #tpu.pipeline_mode<synchronous>, transform_indices = @transform_13, window_bounds = array<i64: 400, 784>}, {pipeline_mode = #tpu.pipeline_mode<synchronous>, transform_indices = @transform_14, window_bounds = array<i64: 1, 784>}, {transform_indices = @transform_15, window_bounds = array<i64: 8, 784>}, {transform_indices = @transform_16, window_bounds = array<i64: 8, 16>}, {transform_indices = @transform_17, window_bounds = array<i64: 8, 16>}]} {
    %c0 = arith.constant 0 : index
    %c0_0 = arith.constant 0 : index
    %0 = vector.load %arg1[%c0, %c0_0] : memref<8x784xf32, #tpu.memory_space<vmem>>, vector<8x784xf32>
    %1 = arith.truncf %0 : vector<8x784xf32> to vector<8x784xbf16>
    %c0_1 = arith.constant 0 : index
    %c0_2 = arith.constant 0 : index
    %2 = vector.load %arg4[%c0_1, %c0_2] : memref<784x400xbf16, #tpu.memory_space<vmem>>, vector<784x400xbf16>
    %cst = arith.constant dense<0.000000e+00> : vector<8x400xf32>
    %3 = tpu.matmul %1, %2, %cst {dimension_numbers = #tpu.dot_dimension_numbers<[1], [0], [0], [1], [0, 0, 1, 1], [], []>} : vector<8x784xbf16>, vector<784x400xbf16>, vector<8x400xf32> -> vector<8x400xf32>
    %c0_3 = arith.constant 0 : index
    %c0_4 = arith.constant 0 : index
    %4 = vector.load %arg5[%c0_3, %c0_4] : memref<1x400xf32, #tpu.memory_space<vmem>>, vector<1x400xf32>
    %5 = vector.broadcast %4 : vector<1x400xf32> to vector<8x400xf32>
    %6 = arith.addf %3, %5 : vector<8x400xf32>
    %cst_5 = arith.constant 0.00999999977 : f32
    %7 = vector.broadcast %cst_5 : f32 to vector<8x400xf32>
    %8 = arith.mulf %7, %6 : vector<8x400xf32>
    %9 = arith.maximumf %6, %8 : vector<8x400xf32>
    %10 = arith.truncf %9 : vector<8x400xf32> to vector<8x400xbf16>
    %c0_6 = arith.constant 0 : index
    %c0_7 = arith.constant 0 : index
    %11 = vector.load %arg6[%c0_6, %c0_7] : memref<400x16xbf16, #tpu.memory_space<vmem>>, vector<400x16xbf16>
    %cst_8 = arith.constant dense<0.000000e+00> : vector<8x16xf32>
    %12 = tpu.matmul %10, %11, %cst_8 {dimension_numbers = #tpu.dot_dimension_numbers<[1], [0], [0], [1], [0, 0, 1, 1], [], []>} : vector<8x400xbf16>, vector<400x16xbf16>, vector<8x16xf32> -> vector<8x16xf32>
    %c0_9 = arith.constant 0 : index
    %c0_10 = arith.constant 0 : index
    %13 = vector.load %arg7[%c0_9, %c0_10] : memref<1x16xf32, #tpu.memory_space<vmem>>, vector<1x16xf32>
    %14 = vector.broadcast %13 : vector<1x16xf32> to vector<8x16xf32>
    %15 = arith.addf %12, %14 : vector<8x16xf32>
    %c0_11 = arith.constant 0 : index
    %c0_12 = arith.constant 0 : index
    %16 = vector.load %arg17[%c0_11, %c0_12] : memref<8x16xf32, #tpu.memory_space<vmem>>, vector<8x16xf32>
    tpu.vector_store %arg17[%c0_11, %c0_12], %15 {strides = array<i32>} : memref<8x16xf32, #tpu.memory_space<vmem>>, vector<8x16xf32>,
    %c0_13 = arith.constant 0 : index
    %c0_14 = arith.constant 0 : index
    %17 = vector.load %arg2[%c0_13, %c0_14] : memref<8x10xf32, #tpu.memory_space<vmem>>, vector<8x10xf32>
    %18 = arith.truncf %17 : vector<8x10xf32> to vector<8x10xbf16>
    %c0_15 = arith.constant 0 : index
    %c0_16 = arith.constant 0 : index
    %19 = vector.load %arg8[%c0_15, %c0_16] : memref<10x200xbf16, #tpu.memory_space<vmem>>, vector<10x200xbf16>
    %cst_17 = arith.constant dense<0.000000e+00> : vector<8x200xf32>
    %20 = tpu.matmul %18, %19, %cst_17 {dimension_numbers = #tpu.dot_dimension_numbers<[1], [0], [0], [1], [0, 0, 1, 1], [], []>} : vector<8x10xbf16>, vector<10x200xbf16>, vector<8x200xf32> -> vector<8x200xf32>
    %c0_18 = arith.constant 0 : index
    %c0_19 = arith.constant 0 : index
    %21 = vector.load %arg9[%c0_18, %c0_19] : memref<1x200xf32, #tpu.memory_space<vmem>>, vector<1x200xf32>
    %22 = vector.broadcast %21 : vector<1x200xf32> to vector<8x200xf32>
    %23 = arith.addf %20, %22 : vector<8x200xf32>
    %cst_20 = arith.constant 0.000000e+00 : f32
    %24 = vector.broadcast %cst_20 : f32 to vector<8x200xf32>
    %25 = arith.maximumf %23, %24 : vector<8x200xf32>
    %26 = arith.truncf %25 : vector<8x200xf32> to vector<8x200xbf16>
    %c0_21 = arith.constant 0 : index
    %c0_22 = arith.constant 0 : index
    %27 = vector.load %arg10[%c0_21, %c0_22] : memref<200x16xbf16, #tpu.memory_space<vmem>>, vector<200x16xbf16>
    %cst_23 = arith.constant dense<0.000000e+00> : vector<8x16xf32>
    %28 = tpu.matmul %26, %27, %cst_23 {dimension_numbers = #tpu.dot_dimension_numbers<[1], [0], [0], [1], [0, 0, 1, 1], [], []>} : vector<8x200xbf16>, vector<200x16xbf16>, vector<8x16xf32> -> vector<8x16xf32>
    %c0_24 = arith.constant 0 : index
    %c0_25 = arith.constant 0 : index
    %29 = vector.load %arg11[%c0_24, %c0_25] : memref<1x16xf32, #tpu.memory_space<vmem>>, vector<1x16xf32>
    %30 = vector.broadcast %29 : vector<1x16xf32> to vector<8x16xf32>
    %31 = arith.addf %28, %30 : vector<8x16xf32>
    %c0_26 = arith.constant 0 : index
    %c0_27 = arith.constant 0 : index
    %32 = vector.load %arg18[%c0_26, %c0_27] : memref<8x16xf32, #tpu.memory_space<vmem>>, vector<8x16xf32>
    tpu.vector_store %arg18[%c0_26, %c0_27], %31 {strides = array<i32>} : memref<8x16xf32, #tpu.memory_space<vmem>>, vector<8x16xf32>,
    %33 = vector.extract_strided_slice %15 {offsets = [0, 0], sizes = [8, 8], strides = [1, 1]} : vector<8x16xf32> to vector<8x8xf32>
    %34 = vector.extract_strided_slice %15 {offsets = [0, 8], sizes = [8, 8], strides = [1, 1]} : vector<8x16xf32> to vector<8x8xf32>
    %c0_28 = arith.constant 0 : index
    %c0_29 = arith.constant 0 : index
    %35 = vector.load %arg3[%c0_28, %c0_29] : memref<8x8xf32, #tpu.memory_space<vmem>>, vector<8x8xf32>
    %cst_30 = arith.constant 5.000000e-01 : f32
    %36 = vector.broadcast %cst_30 : f32 to vector<8x8xf32>
    %37 = arith.mulf %36, %34 : vector<8x8xf32>
    %38 = math.exp %37 : vector<8x8xf32>
    %39 = arith.mulf %35, %38 : vector<8x8xf32>
    %40 = arith.addf %33, %39 : vector<8x8xf32>
    %41 = arith.truncf %40 : vector<8x8xf32> to vector<8x8xbf16>
    %c0_31 = arith.constant 0 : index
    %c0_32 = arith.constant 0 : index
    %42 = vector.load %arg12[%c0_31, %c0_32] : memref<8x400xbf16, #tpu.memory_space<vmem>>, vector<8x400xbf16>
    %cst_33 = arith.constant dense<0.000000e+00> : vector<8x400xf32>
    %43 = tpu.matmul %41, %42, %cst_33 {dimension_numbers = #tpu.dot_dimension_numbers<[1], [0], [0], [1], [0, 0, 1, 1], [], []>} : vector<8x8xbf16>, vector<8x400xbf16>, vector<8x400xf32> -> vector<8x400xf32>
    %c0_34 = arith.constant 0 : index
    %c0_35 = arith.constant 0 : index
    %44 = vector.load %arg13[%c0_34, %c0_35] : memref<1x400xf32, #tpu.memory_space<vmem>>, vector<1x400xf32>
    %45 = vector.broadcast %44 : vector<1x400xf32> to vector<8x400xf32>
    %46 = arith.addf %43, %45 : vector<8x400xf32>
    %cst_36 = arith.constant 0.00999999977 : f32
    %47 = vector.broadcast %cst_36 : f32 to vector<8x400xf32>
    %48 = arith.mulf %47, %46 : vector<8x400xf32>
    %49 = arith.maximumf %46, %48 : vector<8x400xf32>
    %50 = arith.truncf %49 : vector<8x400xf32> to vector<8x400xbf16>
    %c0_37 = arith.constant 0 : index
    %c0_38 = arith.constant 0 : index
    %51 = vector.load %arg14[%c0_37, %c0_38] : memref<400x784xbf16, #tpu.memory_space<vmem>>, vector<400x784xbf16>
    %cst_39 = arith.constant dense<0.000000e+00> : vector<8x784xf32>
    %52 = tpu.matmul %50, %51, %cst_39 {dimension_numbers = #tpu.dot_dimension_numbers<[1], [0], [0], [1], [0, 0, 1, 1], [], []>} : vector<8x400xbf16>, vector<400x784xbf16>, vector<8x784xf32> -> vector<8x784xf32>
    %c0_40 = arith.constant 0 : index
    %c0_41 = arith.constant 0 : index
    %53 = vector.load %arg15[%c0_40, %c0_41] : memref<1x784xf32, #tpu.memory_space<vmem>>, vector<1x784xf32>
    %54 = vector.broadcast %53 : vector<1x784xf32> to vector<8x784xf32>
    %55 = arith.addf %52, %54 : vector<8x784xf32>
    %cst_42 = arith.constant 0.000000e+00 : f32
    %56 = vector.broadcast %cst_42 : f32 to vector<8x784xf32>
    %57 = arith.subf %56, %55 : vector<8x784xf32>
    %cst_43 = arith.constant 8.000000e+01 : f32
    %58 = vector.broadcast %cst_43 : f32 to vector<8x784xf32>
    %59 = arith.minimumf %57, %58 : vector<8x784xf32>
    %60 = math.exp %59 : vector<8x784xf32>
    %cst_44 = arith.constant 1.000000e+00 : f32
    %61 = vector.broadcast %cst_44 : f32 to vector<8x784xf32>
    %62 = arith.addf %61, %60 : vector<8x784xf32>
    %63 = tpu.reciprocal %62 {approx = true} : vector<8x784xf32> -> vector<8x784xf32>
    %c0_45 = arith.constant 0 : index
    %c0_46 = arith.constant 0 : index
    %64 = vector.load %arg16[%c0_45, %c0_46] : memref<8x784xf32, #tpu.memory_space<vmem>>, vector<8x784xf32>
    tpu.vector_store %arg16[%c0_45, %c0_46], %63 {strides = array<i32>} : memref<8x784xf32, #tpu.memory_space<vmem>>, vector<8x784xf32>,
    return
  }
  func.func @transform_0(%arg0: i32) -> (i32, i32) {
    %c0_i32 = arith.constant 0 : i32
    %c0_i32_0 = arith.constant 0 : i32
    return %arg0, %c0_i32 : i32, i32
  }
  func.func @transform_1(%arg0: i32) -> (i32, i32) {
    %c0_i32 = arith.constant 0 : i32
    %c0_i32_0 = arith.constant 0 : i32
    return %arg0, %c0_i32 : i32, i32
  }
  func.func @transform_2(%arg0: i32) -> (i32, i32) {
    %c0_i32 = arith.constant 0 : i32
    %c0_i32_0 = arith.constant 0 : i32
    return %arg0, %c0_i32 : i32, i32
  }
  func.func @transform_3(%arg0: i32) -> (i32, i32) {
    %c0_i32 = arith.constant 0 : i32
    %c0_i32_0 = arith.constant 0 : i32
    %c0_i32_1 = arith.constant 0 : i32
    return %c0_i32, %c0_i32_0 : i32, i32
  }
  func.func @transform_4(%arg0: i32) -> (i32, i32) {
    %c0_i32 = arith.constant 0 : i32
    %c0_i32_0 = arith.constant 0 : i32
    %c0_i32_1 = arith.constant 0 : i32
    return %c0_i32, %c0_i32_0 : i32, i32
  }
  func.func @transform_5(%arg0: i32) -> (i32, i32) {
    %c0_i32 = arith.constant 0 : i32
    %c0_i32_0 = arith.constant 0 : i32
    %c0_i32_1 = arith.constant 0 : i32
    return %c0_i32, %c0_i32_0 : i32, i32
  }
  func.func @transform_6(%arg0: i32) -> (i32, i32) {
    %c0_i32 = arith.constant 0 : i32
    %c0_i32_0 = arith.constant 0 : i32
    %c0_i32_1 = arith.constant 0 : i32
    return %c0_i32, %c0_i32_0 : i32, i32
  }
  func.func @transform_7(%arg0: i32) -> (i32, i32) {
    %c0_i32 = arith.constant 0 : i32
    %c0_i32_0 = arith.constant 0 : i32
    %c0_i32_1 = arith.constant 0 : i32
    return %c0_i32, %c0_i32_0 : i32, i32
  }
  func.func @transform_8(%arg0: i32) -> (i32, i32) {
    %c0_i32 = arith.constant 0 : i32
    %c0_i32_0 = arith.constant 0 : i32
    %c0_i32_1 = arith.constant 0 : i32
    return %c0_i32, %c0_i32_0 : i32, i32
  }
  func.func @transform_9(%arg0: i32) -> (i32, i32) {
    %c0_i32 = arith.constant 0 : i32
    %c0_i32_0 = arith.constant 0 : i32
    %c0_i32_1 = arith.constant 0 : i32
    return %c0_i32, %c0_i32_0 : i32, i32
  }
  func.func @transform_10(%arg0: i32) -> (i32, i32) {
    %c0_i32 = arith.constant 0 : i32
    %c0_i32_0 = arith.constant 0 : i32
    %c0_i32_1 = arith.constant 0 : i32
    return %c0_i32, %c0_i32_0 : i32, i32
  }
  func.func @transform_11(%arg0: i32) -> (i32, i32) {
    %c0_i32 = arith.constant 0 : i32
    %c0_i32_0 = arith.constant 0 : i32
    %c0_i32_1 = arith.constant 0 : i32
    return %c0_i32, %c0_i32_0 : i32, i32
  }
  func.func @transform_12(%arg0: i32) -> (i32, i32) {
    %c0_i32 = arith.constant 0 : i32
    %c0_i32_0 = arith.constant 0 : i32
    %c0_i32_1 = arith.constant 0 : i32
    return %c0_i32, %c0_i32_0 : i32, i32
  }
  func.func @transform_13(%arg0: i32) -> (i32, i32) {
    %c0_i32 = arith.constant 0 : i32
    %c0_i32_0 = arith.constant 0 : i32
    %c0_i32_1 = arith.constant 0 : i32
    return %c0_i32, %c0_i32_0 : i32, i32
  }
  func.func @transform_14(%arg0: i32) -> (i32, i32) {
    %c0_i32 = arith.constant 0 : i32
    %c0_i32_0 = arith.constant 0 : i32
    %c0_i32_1 = arith.constant 0 : i32
    return %c0_i32, %c0_i32_0 : i32, i32
  }
  func.func @transform_15(%arg0: i32) -> (i32, i32) {
    %c0_i32 = arith.constant 0 : i32
    %c0_i32_0 = arith.constant 0 : i32
    return %arg0, %c0_i32 : i32, i32
  }
  func.func @transform_16(%arg0: i32) -> (i32, i32) {
    %c0_i32 = arith.constant 0 : i32
    %c0_i32_0 = arith.constant 0 : i32
    return %arg0, %c0_i32 : i32, i32
  }
  func.func @transform_17(%arg0: i32) -> (i32, i32) {
    %c0_i32 = arith.constant 0 : i32
    %c0_i32_0 = arith.constant 0 : i32
    return %arg0, %c0_i32 : i32, i32
  }
}

</mosaic_0001>

<llo_original>
// kernel: tpu_custom_call.1
$region0: #{tpu_custom_call.1}
  #allocation0 [shape = 'u32[]', space=smem, size = 0x4, offset = 0x4, fixed_abs, tag = 'smem constant byte address 0x4 - core index']
  #allocation1 [shape = 'u32[144,128]{1,0:T(1,128)}', space=vmem, size = 0x12000, scoped, tag = 'internal scratch']
  %s0 = inlined_call_operand.vmem [shape: f32[8,784], index: 0, kind: input, shape index: {}]
  %s1 = inlined_call_operand.vmem [shape: f32[8,10], index: 1, kind: input, shape index: {}]
  %s2 = inlined_call_operand.vmem [shape: f32[8,8], index: 2, kind: input, shape index: {}]
  %s3 = inlined_call_operand.vmem [shape: bf16[784,400], index: 3, kind: input, shape index: {}]
  %s4 = inlined_call_operand.vmem [shape: f32[1,400], index: 4, kind: input, shape index: {}]
  %s5 = inlined_call_operand.vmem [shape: bf16[400,16], index: 5, kind: input, shape index: {}]
  %s6 = inlined_call_operand.vmem [shape: f32[1,16], index: 6, kind: input, shape index: {}]
  %s7 = inlined_call_operand.vmem [shape: bf16[10,200], index: 7, kind: input, shape index: {}]
  %s8 = inlined_call_operand.vmem [shape: f32[1,200], index: 8, kind: input, shape index: {}]
  %s9 = inlined_call_operand.vmem [shape: bf16[200,16], index: 9, kind: input, shape index: {}]
  %s10 = inlined_call_operand.vmem [shape: f32[1,16], index: 10, kind: input, shape index: {}]
  %s11 = inlined_call_operand.vmem [shape: bf16[8,400], index: 11, kind: input, shape index: {}]
  %s12 = inlined_call_operand.vmem [shape: f32[1,400], index: 12, kind: input, shape index: {}]
  %s13 = inlined_call_operand.vmem [shape: bf16[400,784], index: 13, kind: input, shape index: {}]
  %s14 = inlined_call_operand.vmem [shape: f32[1,784], index: 14, kind: input, shape index: {}]
  %s15 = inlined_call_operand.hbm [shape: f32[8,784], index: 15, kind: output, shape index: {0}]
  %s16 = inlined_call_operand.hbm [shape: f32[8,16], index: 16, kind: output, shape index: {1}]
  %s17 = inlined_call_operand.hbm [shape: f32[8,16], index: 17, kind: output, shape index: {2}]
  %18 = xla_tuple %s15, %s16, %s17
  %s19 = sld [smem:[#allocation0]]
  $region86: #{tpu_custom_call.1} parent=0
    _
  %s21 = ssub.s32 1, %s19
  %s22 = scalar_select 0, %s21, %s19
  $region1: #{tpu_custom_call.1} parent=0
    #allocation2 [shape = 'u8[28672]{0}', space=vmem, size = 0x7000, scoped, tag = 'output window, operand 0, single buffered']
    #allocation3 [shape = 's32[1]{0}', space=sflag, size = 0x4, scoped, tag = 'scoped memory for tpu_custom_call.1']
    #allocation4 [shape = 'u8[4096]{0}', space=vmem, size = 0x1000, scoped, tag = 'output window, operand 1, single buffered']
    #allocation5 [shape = 's32[1]{0}', space=sflag, size = 0x4, scoped, tag = 'scoped memory for tpu_custom_call.1']
    #allocation6 [shape = 'u8[4096]{0}', space=vmem, size = 0x1000, scoped, tag = 'output window, operand 2, single buffered']
    %23 = vsyncpa [#allocation3], 0
    %24 = vsyncpa [#allocation5], 0
    // Predicated region
    $region2: #{tpu_custom_call.1} parent=1 // pred_check
      _
    $region3: #{tpu_custom_call.1} parent=1 // pred_check_branch
      %26 = sbr.rel (0) target = $region5
    $region4: #{tpu_custom_call.1} parent=1 // pred_region
      _
    $region5: #{tpu_custom_call.1} parent=1 // pred_fallthru
      _
    // Predicated region
    $region6: #{tpu_custom_call.1} parent=1 // pred_check
      _
    $region7: #{tpu_custom_call.1} parent=1 // pred_check_branch
      %28 = sbr.rel (0) target = $region9
    $region8: #{tpu_custom_call.1} parent=1 // pred_region
      _
    $region9: #{tpu_custom_call.1} parent=1 // pred_fallthru
      _
    // Predicated region
    $region10: #{tpu_custom_call.1} parent=1 // pred_check
      _
    $region11: #{tpu_custom_call.1} parent=1 // pred_check_branch
      %30 = sbr.rel (0) target = $region13
    $region12: #{tpu_custom_call.1} parent=1 // pred_region
      _
    $region13: #{tpu_custom_call.1} parent=1 // pred_fallthru
      _
    // Predicated region
    $region14: #{tpu_custom_call.1} parent=1 // pred_check
      _
    $region15: #{tpu_custom_call.1} parent=1 // pred_check_branch
      %32 = sbr.rel (0) target = $region17
    $region16: #{tpu_custom_call.1} parent=1 // pred_region
      _
    $region17: #{tpu_custom_call.1} parent=1 // pred_fallthru
      _
    // Predicated region
    $region18: #{tpu_custom_call.1} parent=1 // pred_check
      _
    $region19: #{tpu_custom_call.1} parent=1 // pred_check_branch
      %34 = sbr.rel (0) target = $region21
    $region20: #{tpu_custom_call.1} parent=1 // pred_region
      _
    $region21: #{tpu_custom_call.1} parent=1 // pred_fallthru
      _
    // Predicated region
    $region22: #{tpu_custom_call.1} parent=1 // pred_check
      _
    $region23: #{tpu_custom_call.1} parent=1 // pred_check_branch
      %36 = sbr.rel (0) target = $region25
    $region24: #{tpu_custom_call.1} parent=1 // pred_region
      _
    $region25: #{tpu_custom_call.1} parent=1 // pred_fallthru
      _
    // Predicated region
    $region26: #{tpu_custom_call.1} parent=1 // pred_check
      _
    $region27: #{tpu_custom_call.1} parent=1 // pred_check_branch
      %38 = sbr.rel (0) target = $region29
    $region28: #{tpu_custom_call.1} parent=1 // pred_region
      _
    $region29: #{tpu_custom_call.1} parent=1 // pred_fallthru
      _
    // Predicated region
    $region30: #{tpu_custom_call.1} parent=1 // pred_check
      _
    $region31: #{tpu_custom_call.1} parent=1 // pred_check_branch
      %40 = sbr.rel (0) target = $region33
    $region32: #{tpu_custom_call.1} parent=1 // pred_region
      _
    $region33: #{tpu_custom_call.1} parent=1 // pred_fallthru
      _
    // Predicated region
    $region34: #{tpu_custom_call.1} parent=1 // pred_check
      _
    $region35: #{tpu_custom_call.1} parent=1 // pred_check_branch
      %42 = sbr.rel (0) target = $region37
    $region36: #{tpu_custom_call.1} parent=1 // pred_region
      _
    $region37: #{tpu_custom_call.1} parent=1 // pred_fallthru
      _
    // Predicated region
    $region38: #{tpu_custom_call.1} parent=1 // pred_check
      _
    $region39: #{tpu_custom_call.1} parent=1 // pred_check_branch
      %44 = sbr.rel (0) target = $region41
    $region40: #{tpu_custom_call.1} parent=1 // pred_region
      _
    $region41: #{tpu_custom_call.1} parent=1 // pred_fallthru
      _
    // Predicated region
    $region42: #{tpu_custom_call.1} parent=1 // pred_check
      _
    $region43: #{tpu_custom_call.1} parent=1 // pred_check_branch
      %46 = sbr.rel (0) target = $region45
    $region44: #{tpu_custom_call.1} parent=1 // pred_region
      _
    $region45: #{tpu_custom_call.1} parent=1 // pred_fallthru
      _
    // Predicated region
    $region46: #{tpu_custom_call.1} parent=1 // pred_check
      _
    $region47: #{tpu_custom_call.1} parent=1 // pred_check_branch
      %48 = sbr.rel (0) target = $region49
    $region48: #{tpu_custom_call.1} parent=1 // pred_region
      _
    $region49: #{tpu_custom_call.1} parent=1 // pred_fallthru
      _
    // Predicated region
    $region50: #{tpu_custom_call.1} parent=1 // pred_check
      _
    $region51: #{tpu_custom_call.1} parent=1 // pred_check_branch
      %50 = sbr.rel (0) target = $region53
    $region52: #{tpu_custom_call.1} parent=1 // pred_region
      _
    $region53: #{tpu_custom_call.1} parent=1 // pred_fallthru
      _
    // Predicated region
    $region54: #{tpu_custom_call.1} parent=1 // pred_check
      _
    $region55: #{tpu_custom_call.1} parent=1 // pred_check_branch
      %52 = sbr.rel (0) target = $region57
    $region56: #{tpu_custom_call.1} parent=1 // pred_region
      _
    $region57: #{tpu_custom_call.1} parent=1 // pred_fallthru
      _
    // Predicated region
    $region58: #{tpu_custom_call.1} parent=1 // pred_check
      _
    $region59: #{tpu_custom_call.1} parent=1 // pred_check_branch
      %54 = sbr.rel (0) target = $region61
    $region60: #{tpu_custom_call.1} parent=1 // pred_region
      _
    $region61: #{tpu_custom_call.1} parent=1 // pred_fallthru
      _
    %v56 = vld [vmem:[%s0] sm:$0xff]
    %v57 = vld [vmem:[%s0 + $0x8] sm:$0xff]
    %v58 = vld [vmem:[%s0 + $0x10] sm:$0xff]
    %v59 = vld [vmem:[%s0 + $0x18] sm:$0xff]
    %v60 = vld [vmem:[%s0 + $0x20] sm:$0xff]
    %v61 = vld [vmem:[%s0 + $0x28] sm:$0xff]
    %v62 = vld [vmem:[%s0 + $0x30] sm:$0xff]
    %v63 = vpack.c.bf16 %v56, %v56
    %v64 = vpack.c.bf16 %v57, %v57
    %v65 = vpack.c.bf16 %v58, %v58
    %v66 = vpack.c.bf16 %v59, %v59
    %v67 = vpack.c.bf16 %v60, %v60
    %v68 = vpack.c.bf16 %v61, %v61
    %v69 = vpack.c.bf16 %v62, %v62
    %v70 = vld [vmem:[%s3] sm:$0xff]
    %v71 = vld [vmem:[%s3 + $0x8] sm:$0xff]
    %v72 = vld [vmem:[%s3 + $0x10] sm:$0xff]
    %v73 = vld [vmem:[%s3 + $0x18] sm:$0xff]
    %v74 = vld [vmem:[%s3 + $0x20] sm:$0xff]
    %v75 = vld [vmem:[%s3 + $0x28] sm:$0xff]
    %v76 = vld [vmem:[%s3 + $0x30] sm:$0xff]
    %v77 = vld [vmem:[%s3 + $0x38] sm:$0xff]
    %v78 = vld [vmem:[%s3 + $0x40] sm:$0xff]
    %v79 = vld [vmem:[%s3 + $0x48] sm:$0xff]
    %v80 = vld [vmem:[%s3 + $0x50] sm:$0xff]
    %v81 = vld [vmem:[%s3 + $0x58] sm:$0xff]
    %v82 = vld [vmem:[%s3 + $0x60] sm:$0xff]
    %v83 = vld [vmem:[%s3 + $0x68] sm:$0xff]
    %v84 = vld [vmem:[%s3 + $0x70] sm:$0xff]
    %v85 = vld [vmem:[%s3 + $0x78] sm:$0xff]
    %v86 = vld [vmem:[%s3 + $0x80] sm:$0xff]
    %v87 = vld [vmem:[%s3 + $0x88] sm:$0xff]
    %v88 = vld [vmem:[%s3 + $0x90] sm:$0xff]
    %v89 = vld [vmem:[%s3 + $0x98] sm:$0xff]
    %v90 = vld [vmem:[%s3 + $0xa0] sm:$0xff]
    %v91 = vld [vmem:[%s3 + $0xa8] sm:$0xff]
    %v92 = vld [vmem:[%s3 + $0xb0] sm:$0xff]
    %v93 = vld [vmem:[%s3 + $0xb8] sm:$0xff]
    %v94 = vld [vmem:[%s3 + $0xc0] sm:$0xff]
    %v95 = vld [vmem:[%s3 + $0xc8] sm:$0xff]
    %v96 = vld [vmem:[%s3 + $0xd0] sm:$0xff]
    %v97 = vld [vmem:[%s3 + $0xd8] sm:$0xff]
    %v98 = vld [vmem:[%s3 + $0xe0] sm:$0xff]
    %v99 = vld [vmem:[%s3 + $0xe8] sm:$0xff]
    %v100 = vld [vmem:[%s3 + $0xf0] sm:$0xff]
    %v101 = vld [vmem:[%s3 + $0xf8] sm:$0xff]
    %v102 = vld [vmem:[%s3 + $0x100] sm:$0xff]
    %v103 = vld [vmem:[%s3 + $0x108] sm:$0xff]
    %v104 = vld [vmem:[%s3 + $0x110] sm:$0xff]
    %v105 = vld [vmem:[%s3 + $0x118] sm:$0xff]
    %v106 = vld [vmem:[%s3 + $0x120] sm:$0xff]
    %v107 = vld [vmem:[%s3 + $0x128] sm:$0xff]
    %v108 = vld [vmem:[%s3 + $0x130] sm:$0xff]
    %v109 = vld [vmem:[%s3 + $0x138] sm:$0xff]
    %v110 = vld [vmem:[%s3 + $0x140] sm:$0xff]
    %v111 = vld [vmem:[%s3 + $0x148] sm:$0xff]
    %v112 = vld [vmem:[%s3 + $0x150] sm:$0xff]
    %v113 = vld [vmem:[%s3 + $0x158] sm:$0xff]
    %v114 = vld [vmem:[%s3 + $0x160] sm:$0xff]
    %v115 = vld [vmem:[%s3 + $0x168] sm:$0xff]
    %v116 = vld [vmem:[%s3 + $0x170] sm:$0xff]
    %v117 = vld [vmem:[%s3 + $0x178] sm:$0xff]
    %v118 = vld [vmem:[%s3 + $0x180] sm:$0xff]
    %v119 = vld [vmem:[%s3 + $0x188] sm:$0xff]
    %v120 = vld [vmem:[%s3 + $0x190] sm:$0xff]
    %v121 = vld [vmem:[%s3 + $0x198] sm:$0xff]
    %v122 = vld [vmem:[%s3 + $0x1a0] sm:$0xff]
    %v123 = vld [vmem:[%s3 + $0x1a8] sm:$0xff]
    %v124 = vld [vmem:[%s3 + $0x1b0] sm:$0xff]
    %v125 = vld [vmem:[%s3 + $0x1b8] sm:$0xff]
    %v126 = vld [vmem:[%s3 + $0x1c0] sm:$0xff]
    %v127 = vld [vmem:[%s3 + $0x1c8] sm:$0xff]
    %v128 = vld [vmem:[%s3 + $0x1d0] sm:$0xff]
    %v129 = vld [vmem:[%s3 + $0x1d8] sm:$0xff]
    %v130 = vld [vmem:[%s3 + $0x1e0] sm:$0xff]
    %v131 = vld [vmem:[%s3 + $0x1e8] sm:$0xff]
    %v132 = vld [vmem:[%s3 + $0x1f0] sm:$0xff]
    %v133 = vld [vmem:[%s3 + $0x1f8] sm:$0xff]
    %v134 = vld [vmem:[%s3 + $0x200] sm:$0xff]
    %v135 = vld [vmem:[%s3 + $0x208] sm:$0xff]
    %v136 = vld [vmem:[%s3 + $0x210] sm:$0xff]
    %v137 = vld [vmem:[%s3 + $0x218] sm:$0xff]
    %v138 = vld [vmem:[%s3 + $0x220] sm:$0xff]
    %v139 = vld [vmem:[%s3 + $0x228] sm:$0xff]
    %v140 = vld [vmem:[%s3 + $0x230] sm:$0xff]
    %v141 = vld [vmem:[%s3 + $0x238] sm:$0xff]
    %v142 = vld [vmem:[%s3 + $0x240] sm:$0xff]
    %v143 = vld [vmem:[%s3 + $0x248] sm:$0xff]
    %v144 = vld [vmem:[%s3 + $0x250] sm:$0xff]
    %v145 = vld [vmem:[%s3 + $0x258] sm:$0xff]
    %v146 = vld [vmem:[%s3 + $0x260] sm:$0xff]
    %v147 = vld [vmem:[%s3 + $0x268] sm:$0xff]
    %v148 = vld [vmem:[%s3 + $0x270] sm:$0xff]
    %v149 = vld [vmem:[%s3 + $0x278] sm:$0xff]
    %v150 = vld [vmem:[%s3 + $0x280] sm:$0xff]
    %v151 = vld [vmem:[%s3 + $0x288] sm:$0xff]
    %v152 = vld [vmem:[%s3 + $0x290] sm:$0xff]
    %v153 = vld [vmem:[%s3 + $0x298] sm:$0xff]
    %v154 = vld [vmem:[%s3 + $0x2a0] sm:$0xff]
    %v155 = vld [vmem:[%s3 + $0x2a8] sm:$0xff]
    %v156 = vld [vmem:[%s3 + $0x2b0] sm:$0xff]
    %v157 = vld [vmem:[%s3 + $0x2b8] sm:$0xff]
    %v158 = vld [vmem:[%s3 + $0x2c0] sm:$0xff]
    %v159 = vld [vmem:[%s3 + $0x2c8] sm:$0xff]
    %v160 = vld [vmem:[%s3 + $0x2d0] sm:$0xff]
    %v161 = vld [vmem:[%s3 + $0x2d8] sm:$0xff]
    %v162 = vld [vmem:[%s3 + $0x2e0] sm:$0xff]
    %v163 = vld [vmem:[%s3 + $0x2e8] sm:$0xff]
    %v164 = vld [vmem:[%s3 + $0x2f0] sm:$0xff]
    %v165 = vld [vmem:[%s3 + $0x2f8] sm:$0xff]
    %v166 = vld [vmem:[%s3 + $0x300] sm:$0xff]
    %v167 = vld [vmem:[%s3 + $0x308] sm:$0xff]
    %v168 = vld [vmem:[%s3 + $0x310] sm:$0xff]
    %v169 = vld [vmem:[%s3 + $0x318] sm:$0xff]
    %v170 = vld [vmem:[%s3 + $0x320] sm:$0xff]
    %v171 = vld [vmem:[%s3 + $0x328] sm:$0xff]
    %v172 = vld [vmem:[%s3 + $0x330] sm:$0xff]
    %v173 = vld [vmem:[%s3 + $0x338] sm:$0xff]
    %v174 = vld [vmem:[%s3 + $0x340] sm:$0xff]
    %v175 = vld [vmem:[%s3 + $0x348] sm:$0xff]
    %v176 = vld [vmem:[%s3 + $0x350] sm:$0xff]
    %v177 = vld [vmem:[%s3 + $0x358] sm:$0xff]
    %v178 = vld [vmem:[%s3 + $0x360] sm:$0xff]
    %v179 = vld [vmem:[%s3 + $0x368] sm:$0xff]
    %v180 = vld [vmem:[%s3 + $0x370] sm:$0xff]
    %v181 = vld [vmem:[%s3 + $0x378] sm:$0xff]
    %v182 = vld [vmem:[%s3 + $0x380] sm:$0xff]
    %v183 = vld [vmem:[%s3 + $0x388] sm:$0xff]
    %v184 = vld [vmem:[%s3 + $0x390] sm:$0xff]
    %v185 = vld [vmem:[%s3 + $0x398] sm:$0xff]
    %v186 = vld [vmem:[%s3 + $0x3a0] sm:$0xff]
    %v187 = vld [vmem:[%s3 + $0x3a8] sm:$0xff]
    %v188 = vld [vmem:[%s3 + $0x3b0] sm:$0xff]
    %v189 = vld [vmem:[%s3 + $0x3b8] sm:$0xff]
    %v190 = vld [vmem:[%s3 + $0x3c0] sm:$0xff]
    %v191 = vld [vmem:[%s3 + $0x3c8] sm:$0xff]
    %v192 = vld [vmem:[%s3 + $0x3d0] sm:$0xff]
    %v193 = vld [vmem:[%s3 + $0x3d8] sm:$0xff]
    %v194 = vld [vmem:[%s3 + $0x3e0] sm:$0xff]
    %v195 = vld [vmem:[%s3 + $0x3e8] sm:$0xff]
    %v196 = vld [vmem:[%s3 + $0x3f0] sm:$0xff]
    %v197 = vld [vmem:[%s3 + $0x3f8] sm:$0xff]
    %v198 = vld [vmem:[%s3 + $0x400] sm:$0xff]
    %v199 = vld [vmem:[%s3 + $0x408] sm:$0xff]
    %v200 = vld [vmem:[%s3 + $0x410] sm:$0xff]
    %v201 = vld [vmem:[%s3 + $0x418] sm:$0xff]
    %v202 = vld [vmem:[%s3 + $0x420] sm:$0xff]
    %v203 = vld [vmem:[%s3 + $0x428] sm:$0xff]
    %v204 = vld [vmem:[%s3 + $0x430] sm:$0xff]
    %v205 = vld [vmem:[%s3 + $0x438] sm:$0xff]
    %v206 = vld [vmem:[%s3 + $0x440] sm:$0xff]
    %v207 = vld [vmem:[%s3 + $0x448] sm:$0xff]
    %v208 = vld [vmem:[%s3 + $0x450] sm:$0xff]
    %v209 = vld [vmem:[%s3 + $0x458] sm:$0xff]
    %v210 = vld [vmem:[%s3 + $0x460] sm:$0xff]
    %v211 = vld [vmem:[%s3 + $0x468] sm:$0xff]
    %v212 = vld [vmem:[%s3 + $0x470] sm:$0xff]
    %v213 = vld [vmem:[%s3 + $0x478] sm:$0xff]
    %v214 = vld [vmem:[%s3 + $0x480] sm:$0xff]
    %v215 = vld [vmem:[%s3 + $0x488] sm:$0xff]
    %v216 = vld [vmem:[%s3 + $0x490] sm:$0xff]
    %v217 = vld [vmem:[%s3 + $0x498] sm:$0xff]
    %v218 = vld [vmem:[%s3 + $0x4a0] sm:$0xff]
    %v219 = vld [vmem:[%s3 + $0x4a8] sm:$0xff]
    %v220 = vld [vmem:[%s3 + $0x4b0] sm:$0xff]
    %v221 = vld [vmem:[%s3 + $0x4b8] sm:$0xff]
    %v222 = vld [vmem:[%s3 + $0x4c0] sm:$0xff]
    %v223 = vld [vmem:[%s3 + $0x4c8] sm:$0xff]
    %v224 = vld [vmem:[%s3 + $0x4d0] sm:$0xff]
    %v225 = vld [vmem:[%s3 + $0x4d8] sm:$0xff]
    %v226 = vld [vmem:[%s3 + $0x4e0] sm:$0xff]
    %v227 = vld [vmem:[%s3 + $0x4e8] sm:$0xff]
    %v228 = vld [vmem:[%s3 + $0x4f0] sm:$0xff]
    %v229 = vld [vmem:[%s3 + $0x4f8] sm:$0xff]
    %v230 = vld [vmem:[%s3 + $0x500] sm:$0xff]
    %v231 = vld [vmem:[%s3 + $0x508] sm:$0xff]
    %v232 = vld [vmem:[%s3 + $0x510] sm:$0xff]
    %v233 = vld [vmem:[%s3 + $0x518] sm:$0xff]
    %v234 = vld [vmem:[%s3 + $0x520] sm:$0xff]
    %v235 = vld [vmem:[%s3 + $0x528] sm:$0xff]
    %v236 = vld [vmem:[%s3 + $0x530] sm:$0xff]
    %v237 = vld [vmem:[%s3 + $0x538] sm:$0xff]
    %v238 = vld [vmem:[%s3 + $0x540] sm:$0xff]
    %v239 = vld [vmem:[%s3 + $0x548] sm:$0xff]
    %v240 = vld [vmem:[%s3 + $0x550] sm:$0xff]
    %v241 = vld [vmem:[%s3 + $0x558] sm:$0xff]
    %v242 = vld [vmem:[%s3 + $0x560] sm:$0xff]
    %v243 = vld [vmem:[%s3 + $0x568] sm:$0xff]
    %v244 = vld [vmem:[%s3 + $0x570] sm:$0xff]
    %v245 = vld [vmem:[%s3 + $0x578] sm:$0xff]
    %v246 = vld [vmem:[%s3 + $0x580] sm:$0xff]
    %v247 = vld [vmem:[%s3 + $0x588] sm:$0xff]
    %v248 = vld [vmem:[%s3 + $0x590] sm:$0xff]
    %v249 = vld [vmem:[%s3 + $0x598] sm:$0xff]
    %v250 = vld [vmem:[%s3 + $0x5a0] sm:$0xff]
    %v251 = vld [vmem:[%s3 + $0x5a8] sm:$0xff]
    %v252 = vld [vmem:[%s3 + $0x5b0] sm:$0xff]
    %v253 = vld [vmem:[%s3 + $0x5b8] sm:$0xff]
    %v254 = vld [vmem:[%s3 + $0x5c0] sm:$0xff]
    %v255 = vld [vmem:[%s3 + $0x5c8] sm:$0xff]
    %v256 = vld [vmem:[%s3 + $0x5d0] sm:$0xff]
    %v257 = vld [vmem:[%s3 + $0x5d8] sm:$0xff]
    %v258 = vld [vmem:[%s3 + $0x5e0] sm:$0xff]
    %v259 = vld [vmem:[%s3 + $0x5e8] sm:$0xff]
    %v260 = vld [vmem:[%s3 + $0x5f0] sm:$0xff]
    %v261 = vld [vmem:[%s3 + $0x5f8] sm:$0xff]
    %v262 = vld [vmem:[%s3 + $0x600] sm:$0xff]
    %v263 = vld [vmem:[%s3 + $0x608] sm:$0xff]
    %v264 = vld [vmem:[%s3 + $0x610] sm:$0xff]
    %v265 = vld [vmem:[%s3 + $0x618] sm:$0xff]
    %v266 = vld [vmem:[%s4] sm:$0xf]
    %v268 = vlaneseq
    %v269 = vshrl.u32 %v268, 7
    %v270 = vsub.s32 0, %v269
    %v271 = vrot.slane %v266, %v270
    %v272 = vlaneseq
    %v273 = vshrl.u32 %v272, 7
    %v274 = vsub.s32 1, %v273
    %v275 = vrot.slane %v266, %v274
    %v276 = vlaneseq
    %v277 = vshrl.u32 %v276, 7
    %v278 = vsub.s32 2, %v277
    %v279 = vrot.slane %v266, %v278
    %v280 = vlaneseq
    %v281 = vshrl.u32 %v280, 7
    %v282 = vsub.s32 3, %v281
    %v283 = vrot.slane %v266, %v282
    %v484 = vunpack.c.l.b16 %v70
    %v485 = vunpack.c.h.b16 %v70
    %v486 = vunpack.c.l.b16 %v71
    %v487 = vunpack.c.h.b16 %v71
    %v488 = vunpack.c.l.b16 %v72
    %v489 = vunpack.c.h.b16 %v72
    %v490 = vunpack.c.l.b16 %v73
    %v491 = vunpack.c.h.b16 %v73
    %v492 = vunpack.c.l.b16 %v74
    %v493 = vunpack.c.h.b16 %v74
    %v494 = vunpack.c.l.b16 %v75
    %v495 = vunpack.c.h.b16 %v75
    %v496 = vunpack.c.l.b16 %v76
    %v497 = vunpack.c.h.b16 %v76
    %v498 = vunpack.c.l.b16 %v77
    %v499 = vunpack.c.h.b16 %v77
    %v500 = vunpack.c.l.b16 %v78
    %v501 = vunpack.c.h.b16 %v78
    %v502 = vunpack.c.l.b16 %v79
    %v503 = vunpack.c.h.b16 %v79
    %v504 = vunpack.c.l.b16 %v80
    %v505 = vunpack.c.h.b16 %v80
    %v506 = vunpack.c.l.b16 %v81
    %v507 = vunpack.c.h.b16 %v81
    %v508 = vunpack.c.l.b16 %v82
    %v509 = vunpack.c.h.b16 %v82
    %v510 = vunpack.c.l.b16 %v83
    %v511 = vunpack.c.h.b16 %v83
    %v512 = vunpack.c.l.b16 %v84
    %v513 = vunpack.c.h.b16 %v84
    %v514 = vunpack.c.l.b16 %v85
    %v515 = vunpack.c.h.b16 %v85
    %v516 = vunpack.c.l.b16 %v86
    %v517 = vunpack.c.h.b16 %v86
    %v518 = vunpack.c.l.b16 %v87
    %v519 = vunpack.c.h.b16 %v87
    %v520 = vunpack.c.l.b16 %v88
    %v521 = vunpack.c.h.b16 %v88
    %v522 = vunpack.c.l.b16 %v89
    %v523 = vunpack.c.h.b16 %v89
    %v524 = vunpack.c.l.b16 %v90
    %v525 = vunpack.c.h.b16 %v90
    %v526 = vunpack.c.l.b16 %v91
    %v527 = vunpack.c.h.b16 %v91
    %v528 = vunpack.c.l.b16 %v92
    %v529 = vunpack.c.h.b16 %v92
    %v530 = vunpack.c.l.b16 %v93
    %v531 = vunpack.c.h.b16 %v93
    %v532 = vunpack.c.l.b16 %v94
    %v533 = vunpack.c.h.b16 %v94
    %v534 = vunpack.c.l.b16 %v95
    %v535 = vunpack.c.h.b16 %v95
    %v536 = vunpack.c.l.b16 %v96
    %v537 = vunpack.c.h.b16 %v96
    %v538 = vunpack.c.l.b16 %v97
    %v539 = vunpack.c.h.b16 %v97
    %v540 = vunpack.c.l.b16 %v98
    %v541 = vunpack.c.h.b16 %v98
    %v542 = vunpack.c.l.b16 %v99
    %v543 = vunpack.c.h.b16 %v99
    %v544 = vunpack.c.l.b16 %v100
    %v545 = vunpack.c.h.b16 %v100
    %v546 = vunpack.c.l.b16 %v101
    %v547 = vunpack.c.h.b16 %v101
    %v548 = vunpack.c.l.b16 %v102
    %v549 = vunpack.c.h.b16 %v102
    %v550 = vunpack.c.l.b16 %v103
    %v551 = vunpack.c.h.b16 %v103
    %v552 = vunpack.c.l.b16 %v104
    %v553 = vunpack.c.h.b16 %v104
    %v554 = vunpack.c.l.b16 %v105
    %v555 = vunpack.c.h.b16 %v105
    %v556 = vunpack.c.l.b16 %v106
    %v557 = vunpack.c.h.b16 %v106
    %v558 = vunpack.c.l.b16 %v107
    %v559 = vunpack.c.h.b16 %v107
    %v560 = vunpack.c.l.b16 %v108
    %v561 = vunpack.c.h.b16 %v108
    %v562 = vunpack.c.l.b16 %v109
    %v563 = vunpack.c.h.b16 %v109
    %v564 = vunpack.c.l.b16 %v110
    %v565 = vunpack.c.h.b16 %v110
    %v566 = vunpack.c.l.b16 %v111
    %v567 = vunpack.c.h.b16 %v111
    %v568 = vunpack.c.l.b16 %v112
    %v569 = vunpack.c.h.b16 %v112
    %v570 = vunpack.c.l.b16 %v113
    %v571 = vunpack.c.h.b16 %v113
    %v572 = vunpack.c.l.b16 %v114
    %v573 = vunpack.c.h.b16 %v114
    %v574 = vunpack.c.l.b16 %v115
    %v575 = vunpack.c.h.b16 %v115
    %v576 = vunpack.c.l.b16 %v116
    %v577 = vunpack.c.h.b16 %v116
    %v578 = vunpack.c.l.b16 %v117
    %v579 = vunpack.c.h.b16 %v117
    %v580 = vunpack.c.l.b16 %v118
    %v581 = vunpack.c.h.b16 %v118
    %v582 = vunpack.c.l.b16 %v119
    %v583 = vunpack.c.h.b16 %v119
    %v584 = vunpack.c.l.b16 %v120
    %v585 = vunpack.c.h.b16 %v120
    %v586 = vunpack.c.l.b16 %v121
    %v587 = vunpack.c.h.b16 %v121
    %v588 = vunpack.c.l.b16 %v122
    %v589 = vunpack.c.h.b16 %v122
    %v590 = vunpack.c.l.b16 %v123
    %v591 = vunpack.c.h.b16 %v123
    %v592 = vunpack.c.l.b16 %v124
    %v593 = vunpack.c.h.b16 %v124
    %v594 = vunpack.c.l.b16 %v125
    %v595 = vunpack.c.h.b16 %v125
    %v596 = vunpack.c.l.b16 %v126
    %v597 = vunpack.c.h.b16 %v126
    %v598 = vunpack.c.l.b16 %v127
    %v599 = vunpack.c.h.b16 %v127
    %v600 = vunpack.c.l.b16 %v128
    %v601 = vunpack.c.h.b16 %v128
    %v602 = vunpack.c.l.b16 %v129
    %v603 = vunpack.c.h.b16 %v129
    %v604 = vunpack.c.l.b16 %v130
    %v605 = vunpack.c.h.b16 %v130
    %v606 = vunpack.c.l.b16 %v131
    %v607 = vunpack.c.h.b16 %v131
    %v608 = vunpack.c.l.b16 %v132
    %v609 = vunpack.c.h.b16 %v132
    %v610 = vunpack.c.l.b16 %v133
    %v611 = vunpack.c.h.b16 %v133
    %v612 = vunpack.c.l.b16 %v134
    %v613 = vunpack.c.h.b16 %v134
    %v614 = vunpack.c.l.b16 %v135
    %v615 = vunpack.c.h.b16 %v135
    %v616 = vunpack.c.l.b16 %v136
    %v617 = vunpack.c.h.b16 %v136
    %v618 = vunpack.c.l.b16 %v137
    %v619 = vunpack.c.h.b16 %v137
    %v620 = vunpack.c.l.b16 %v138
    %v621 = vunpack.c.h.b16 %v138
    %v622 = vunpack.c.l.b16 %v139
    %v623 = vunpack.c.h.b16 %v139
    %v624 = vunpack.c.l.b16 %v140
    %v625 = vunpack.c.h.b16 %v140
    %v626 = vunpack.c.l.b16 %v141
    %v627 = vunpack.c.h.b16 %v141
    %v628 = vunpack.c.l.b16 %v142
    %v629 = vunpack.c.h.b16 %v142
    %v630 = vunpack.c.l.b16 %v143
    %v631 = vunpack.c.h.b16 %v143
    %v632 = vunpack.c.l.b16 %v144
    %v633 = vunpack.c.h.b16 %v144
    %v634 = vunpack.c.l.b16 %v145
    %v635 = vunpack.c.h.b16 %v145
    %v636 = vunpack.c.l.b16 %v146
    %v637 = vunpack.c.h.b16 %v146
    %v638 = vunpack.c.l.b16 %v147
    %v639 = vunpack.c.h.b16 %v147
    %v640 = vunpack.c.l.b16 %v148
    %v641 = vunpack.c.h.b16 %v148
    %v642 = vunpack.c.l.b16 %v149
    %v643 = vunpack.c.h.b16 %v149
    %v644 = vunpack.c.l.b16 %v150
    %v645 = vunpack.c.h.b16 %v150
    %v646 = vunpack.c.l.b16 %v151
    %v647 = vunpack.c.h.b16 %v151
    %v648 = vunpack.c.l.b16 %v152
    %v649 = vunpack.c.h.b16 %v152
    %v650 = vunpack.c.l.b16 %v153
    %v651 = vunpack.c.h.b16 %v153
    %v652 = vunpack.c.l.b16 %v154
    %v653 = vunpack.c.h.b16 %v154
    %v654 = vunpack.c.l.b16 %v155
    %v655 = vunpack.c.h.b16 %v155
    %v656 = vunpack.c.l.b16 %v156
    %v657 = vunpack.c.h.b16 %v156
    %v658 = vunpack.c.l.b16 %v157
    %v659 = vunpack.c.h.b16 %v157
    %v660 = vunpack.c.l.b16 %v158
    %v661 = vunpack.c.h.b16 %v158
    %v662 = vunpack.c.l.b16 %v159
    %v663 = vunpack.c.h.b16 %v159
    %v664 = vunpack.c.l.b16 %v160
    %v665 = vunpack.c.h.b16 %v160
    %v666 = vunpack.c.l.b16 %v161
    %v667 = vunpack.c.h.b16 %v161
    %v668 = vunpack.c.l.b16 %v162
    %v669 = vunpack.c.h.b16 %v162
    %v670 = vunpack.c.l.b16 %v163
    %v671 = vunpack.c.h.b16 %v163
    %v672 = vunpack.c.l.b16 %v164
    %v673 = vunpack.c.h.b16 %v164
    %v674 = vunpack.c.l.b16 %v165
    %v675 = vunpack.c.h.b16 %v165
    %v676 = vunpack.c.l.b16 %v166
    %v677 = vunpack.c.h.b16 %v166
    %v678 = vunpack.c.l.b16 %v167
    %v679 = vunpack.c.h.b16 %v167
    %v680 = vunpack.c.l.b16 %v168
    %v681 = vunpack.c.h.b16 %v168
    %v682 = vunpack.c.l.b16 %v169
    %v683 = vunpack.c.h.b16 %v169
    %v684 = vunpack.c.l.b16 %v170
    %v685 = vunpack.c.h.b16 %v170
    %v686 = vunpack.c.l.b16 %v171
    %v687 = vunpack.c.h.b16 %v171
    %v688 = vunpack.c.l.b16 %v172
    %v689 = vunpack.c.h.b16 %v172
    %v690 = vunpack.c.l.b16 %v173
    %v691 = vunpack.c.h.b16 %v173
    %v692 = vunpack.c.l.b16 %v174
    %v693 = vunpack.c.h.b16 %v174
    %v694 = vunpack.c.l.b16 %v175
    %v695 = vunpack.c.h.b16 %v175
    %v696 = vunpack.c.l.b16 %v176
    %v697 = vunpack.c.h.b16 %v176
    %v698 = vunpack.c.l.b16 %v177
    %v699 = vunpack.c.h.b16 %v177
    %v700 = vunpack.c.l.b16 %v178
    %v701 = vunpack.c.h.b16 %v178
    %v702 = vunpack.c.l.b16 %v179
    %v703 = vunpack.c.h.b16 %v179
    %v704 = vunpack.c.l.b16 %v180
    %v705 = vunpack.c.h.b16 %v180
    %v706 = vunpack.c.l.b16 %v181
    %v707 = vunpack.c.h.b16 %v181
    %v708 = vunpack.c.l.b16 %v182
    %v709 = vunpack.c.h.b16 %v182
    %v710 = vunpack.c.l.b16 %v183
    %v711 = vunpack.c.h.b16 %v183
    %v712 = vunpack.c.l.b16 %v184
    %v713 = vunpack.c.h.b16 %v184
    %v714 = vunpack.c.l.b16 %v185
    %v715 = vunpack.c.h.b16 %v185
    %v716 = vunpack.c.l.b16 %v186
    %v717 = vunpack.c.h.b16 %v186
    %v718 = vunpack.c.l.b16 %v187
    %v719 = vunpack.c.h.b16 %v187
    %v720 = vunpack.c.l.b16 %v188
    %v721 = vunpack.c.h.b16 %v188
    %v722 = vunpack.c.l.b16 %v189
    %v723 = vunpack.c.h.b16 %v189
    %v724 = vunpack.c.l.b16 %v190
    %v725 = vunpack.c.h.b16 %v190
    %v726 = vunpack.c.l.b16 %v191
    %v727 = vunpack.c.h.b16 %v191
    %v728 = vunpack.c.l.b16 %v192
    %v729 = vunpack.c.h.b16 %v192
    %v730 = vunpack.c.l.b16 %v193
    %v731 = vunpack.c.h.b16 %v193
    %v732 = vunpack.c.l.b16 %v194
    %v733 = vunpack.c.h.b16 %v194
    %v734 = vunpack.c.l.b16 %v195
    %v735 = vunpack.c.h.b16 %v195
    %v736 = vunpack.c.l.b16 %v196
    %v737 = vunpack.c.h.b16 %v196
    %v738 = vunpack.c.l.b16 %v197
    %v739 = vunpack.c.h.b16 %v197
    %v740 = vunpack.c.l.b16 %v198
    %v741 = vunpack.c.h.b16 %v198
    %v742 = vunpack.c.l.b16 %v199
    %v743 = vunpack.c.h.b16 %v199
    %v744 = vunpack.c.l.b16 %v200
    %v745 = vunpack.c.h.b16 %v200
    %v746 = vunpack.c.l.b16 %v201
    %v747 = vunpack.c.h.b16 %v201
    %v748 = vunpack.c.l.b16 %v202
    %v749 = vunpack.c.h.b16 %v202
    %v750 = vunpack.c.l.b16 %v203
    %v751 = vunpack.c.h.b16 %v203
    %v752 = vunpack.c.l.b16 %v204
    %v753 = vunpack.c.h.b16 %v204
    %v754 = vunpack.c.l.b16 %v205
    %v755 = vunpack.c.h.b16 %v205
    %v756 = vunpack.c.l.b16 %v206
    %v757 = vunpack.c.h.b16 %v206
    %v758 = vunpack.c.l.b16 %v207
    %v759 = vunpack.c.h.b16 %v207
    %v760 = vunpack.c.l.b16 %v208
    %v761 = vunpack.c.h.b16 %v208
    %v762 = vunpack.c.l.b16 %v209
    %v763 = vunpack.c.h.b16 %v209
    %v764 = vunpack.c.l.b16 %v210
    %v765 = vunpack.c.h.b16 %v210
    %v766 = vunpack.c.l.b16 %v211
    %v767 = vunpack.c.h.b16 %v211
    %v768 = vunpack.c.l.b16 %v212
    %v769 = vunpack.c.h.b16 %v212
    %v770 = vunpack.c.l.b16 %v213
    %v771 = vunpack.c.h.b16 %v213
    %v772 = vunpack.c.l.b16 %v214
    %v773 = vunpack.c.h.b16 %v214
    %v774 = vunpack.c.l.b16 %v215
    %v775 = vunpack.c.h.b16 %v215
    %v776 = vunpack.c.l.b16 %v216
    %v777 = vunpack.c.h.b16 %v216
    %v778 = vunpack.c.l.b16 %v217
    %v779 = vunpack.c.h.b16 %v217
    %v780 = vunpack.c.l.b16 %v218
    %v781 = vunpack.c.h.b16 %v218
    %v782 = vunpack.c.l.b16 %v219
    %v783 = vunpack.c.h.b16 %v219
    %v784 = vunpack.c.l.b16 %v220
    %v785 = vunpack.c.h.b16 %v220
    %v786 = vunpack.c.l.b16 %v221
    %v787 = vunpack.c.h.b16 %v221
    %v788 = vunpack.c.l.b16 %v222
    %v789 = vunpack.c.h.b16 %v222
    %v790 = vunpack.c.l.b16 %v223
    %v791 = vunpack.c.h.b16 %v223
    %v792 = vunpack.c.l.b16 %v224
    %v793 = vunpack.c.h.b16 %v224
    %v794 = vunpack.c.l.b16 %v225
    %v795 = vunpack.c.h.b16 %v225
    %v796 = vunpack.c.l.b16 %v226
    %v797 = vunpack.c.h.b16 %v226
    %v798 = vunpack.c.l.b16 %v227
    %v799 = vunpack.c.h.b16 %v227
    %v800 = vunpack.c.l.b16 %v228
    %v801 = vunpack.c.h.b16 %v228
    %v802 = vunpack.c.l.b16 %v229
    %v803 = vunpack.c.h.b16 %v229
    %v804 = vunpack.c.l.b16 %v230
    %v805 = vunpack.c.h.b16 %v230
    %v806 = vunpack.c.l.b16 %v231
    %v807 = vunpack.c.h.b16 %v231
    %v808 = vunpack.c.l.b16 %v232
    %v809 = vunpack.c.h.b16 %v232
    %v810 = vunpack.c.l.b16 %v233
    %v811 = vunpack.c.h.b16 %v233
    %v812 = vunpack.c.l.b16 %v234
    %v813 = vunpack.c.h.b16 %v234
    %v814 = vunpack.c.l.b16 %v235
    %v815 = vunpack.c.h.b16 %v235
    %v816 = vunpack.c.l.b16 %v236
    %v817 = vunpack.c.h.b16 %v236
    %v818 = vunpack.c.l.b16 %v237
    %v819 = vunpack.c.h.b16 %v237
    %v820 = vunpack.c.l.b16 %v238
    %v821 = vunpack.c.h.b16 %v238
    %v822 = vunpack.c.l.b16 %v239
    %v823 = vunpack.c.h.b16 %v239
    %v824 = vunpack.c.l.b16 %v240
    %v825 = vunpack.c.h.b16 %v240
    %v826 = vunpack.c.l.b16 %v241
    %v827 = vunpack.c.h.b16 %v241
    %v828 = vunpack.c.l.b16 %v242
    %v829 = vunpack.c.h.b16 %v242
    %v830 = vunpack.c.l.b16 %v243
    %v831 = vunpack.c.h.b16 %v243
    %v832 = vunpack.c.l.b16 %v244
    %v833 = vunpack.c.h.b16 %v244
    %v834 = vunpack.c.l.b16 %v245
    %v835 = vunpack.c.h.b16 %v245
    %v836 = vunpack.c.l.b16 %v246
    %v837 = vunpack.c.h.b16 %v246
    %v838 = vunpack.c.l.b16 %v247
    %v839 = vunpack.c.h.b16 %v247
    %v840 = vunpack.c.l.b16 %v248
    %v841 = vunpack.c.h.b16 %v248
    %v842 = vunpack.c.l.b16 %v249
    %v843 = vunpack.c.h.b16 %v249
    %v844 = vunpack.c.l.b16 %v250
    %v845 = vunpack.c.h.b16 %v250
    %v846 = vunpack.c.l.b16 %v251
    %v847 = vunpack.c.h.b16 %v251
    %v848 = vunpack.c.l.b16 %v252
    %v849 = vunpack.c.h.b16 %v252
    %v850 = vunpack.c.l.b16 %v253
    %v851 = vunpack.c.h.b16 %v253
    %v852 = vunpack.c.l.b16 %v254
    %v853 = vunpack.c.h.b16 %v254
    %v854 = vunpack.c.l.b16 %v255
    %v855 = vunpack.c.h.b16 %v255
    %v856 = vunpack.c.l.b16 %v256
    %v857 = vunpack.c.h.b16 %v256
    %v858 = vunpack.c.l.b16 %v257
    %v859 = vunpack.c.h.b16 %v257
    %v860 = vunpack.c.l.b16 %v258
    %v861 = vunpack.c.h.b16 %v258
    %v862 = vunpack.c.l.b16 %v259
    %v863 = vunpack.c.h.b16 %v259
    %v864 = vunpack.c.l.b16 %v260
    %v865 = vunpack.c.h.b16 %v260
    %v866 = vunpack.c.l.b16 %v261
    %v867 = vunpack.c.h.b16 %v261
    %v868 = vunpack.c.l.b16 %v262
    %v869 = vunpack.c.h.b16 %v262
    %v870 = vunpack.c.l.b16 %v263
    %v871 = vunpack.c.h.b16 %v263
    %v872 = vunpack.c.l.b16 %v264
    %v873 = vunpack.c.h.b16 %v264
    %v874 = vunpack.c.l.b16 %v265
    %v875 = vunpack.c.h.b16 %v265
    %v876 = vpack.c.b16 %v488, %v484
    %v877 = vpack.c.b16 %v489, %v485
    %v878 = vpack.c.b16 %v490, %v486
    %v879 = vpack.c.b16 %v491, %v487
    %v880 = vpack.c.b16 %v496, %v492
    %v881 = vpack.c.b16 %v497, %v493
    %v882 = vpack.c.b16 %v498, %v494
    %v883 = vpack.c.b16 %v499, %v495
    %v884 = vpack.c.b16 %v504, %v500
    %v885 = vpack.c.b16 %v505, %v501
    %v886 = vpack.c.b16 %v506, %v502
    %v887 = vpack.c.b16 %v507, %v503
    %v888 = vpack.c.b16 %v512, %v508
    %v889 = vpack.c.b16 %v513, %v509
    %v890 = vpack.c.b16 %v514, %v510
    %v891 = vpack.c.b16 %v515, %v511
    %v892 = vpack.c.b16 %v520, %v516
    %v893 = vpack.c.b16 %v521, %v517
    %v894 = vpack.c.b16 %v522, %v518
    %v895 = vpack.c.b16 %v523, %v519
    %v896 = vpack.c.b16 %v528, %v524
    %v897 = vpack.c.b16 %v529, %v525
    %v898 = vpack.c.b16 %v530, %v526
    %v899 = vpack.c.b16 %v531, %v527
    %v900 = vpack.c.b16 %v536, %v532
    %v901 = vpack.c.b16 %v537, %v533
    %v902 = vpack.c.b16 %v538, %v534
    %v903 = vpack.c.b16 %v539, %v535
    %v904 = vpack.c.b16 %v544, %v540
    %v905 = vpack.c.b16 %v545, %v541
    %v906 = vpack.c.b16 %v546, %v542
    %v907 = vpack.c.b16 %v547, %v543
    %v908 = vpack.c.b16 %v552, %v548
    %v909 = vpack.c.b16 %v553, %v549
    %v910 = vpack.c.b16 %v554, %v550
    %v911 = vpack.c.b16 %v555, %v551
    %v912 = vpack.c.b16 %v560, %v556
    %v913 = vpack.c.b16 %v561, %v557
    %v914 = vpack.c.b16 %v562, %v558
    %v915 = vpack.c.b16 %v563, %v559
    %v916 = vpack.c.b16 %v568, %v564
    %v917 = vpack.c.b16 %v569, %v565
    %v918 = vpack.c.b16 %v570, %v566
    %v919 = vpack.c.b16 %v571, %v567
    %v920 = vpack.c.b16 %v576, %v572
    %v921 = vpack.c.b16 %v577, %v573
    %v922 = vpack.c.b16 %v578, %v574
    %v923 = vpack.c.b16 %v579, %v575
    %v924 = vpack.c.b16 %v584, %v580
    %v925 = vpack.c.b16 %v585, %v581
    %v926 = vpack.c.b16 %v586, %v582
    %v927 = vpack.c.b16 %v587, %v583
    %v928 = vpack.c.b16 %v592, %v588
    %v929 = vpack.c.b16 %v593, %v589
    %v930 = vpack.c.b16 %v594, %v590
    %v931 = vpack.c.b16 %v595, %v591
    %v932 = vpack.c.b16 %v600, %v596
    %v933 = vpack.c.b16 %v601, %v597
    %v934 = vpack.c.b16 %v602, %v598
    %v935 = vpack.c.b16 %v603, %v599
    %v936 = vpack.c.b16 %v608, %v604
    %v937 = vpack.c.b16 %v609, %v605
    %v938 = vpack.c.b16 %v610, %v606
    %v939 = vpack.c.b16 %v611, %v607
    %v940 = vpack.c.b16 %v616, %v612
    %v941 = vpack.c.b16 %v617, %v613
    %v942 = vpack.c.b16 %v618, %v614
    %v943 = vpack.c.b16 %v619, %v615
    %v944 = vpack.c.b16 %v624, %v620
    %v945 = vpack.c.b16 %v625, %v621
    %v946 = vpack.c.b16 %v626, %v622
    %v947 = vpack.c.b16 %v627, %v623
    %v948 = vpack.c.b16 %v632, %v628
    %v949 = vpack.c.b16 %v633, %v629
    %v950 = vpack.c.b16 %v634, %v630
    %v951 = vpack.c.b16 %v635, %v631
    %v952 = vpack.c.b16 %v640, %v636
    %v953 = vpack.c.b16 %v641, %v637
    %v954 = vpack.c.b16 %v642, %v638
    %v955 = vpack.c.b16 %v643, %v639
    %v956 = vpack.c.b16 %v648, %v644
    %v957 = vpack.c.b16 %v649, %v645
    %v958 = vpack.c.b16 %v650, %v646
    %v959 = vpack.c.b16 %v651, %v647
    %v960 = vpack.c.b16 %v656, %v652
    %v961 = vpack.c.b16 %v657, %v653
    %v962 = vpack.c.b16 %v658, %v654
    %v963 = vpack.c.b16 %v659, %v655
    %v964 = vpack.c.b16 %v664, %v660
    %v965 = vpack.c.b16 %v665, %v661
    %v966 = vpack.c.b16 %v666, %v662
    %v967 = vpack.c.b16 %v667, %v663
    %v968 = vpack.c.b16 %v672, %v668
    %v969 = vpack.c.b16 %v673, %v669
    %v970 = vpack.c.b16 %v674, %v670
    %v971 = vpack.c.b16 %v675, %v671
    %v972 = vpack.c.b16 %v680, %v676
    %v973 = vpack.c.b16 %v681, %v677
    %v974 = vpack.c.b16 %v682, %v678
    %v975 = vpack.c.b16 %v683, %v679
    %v976 = vpack.c.b16 %v688, %v684
    %v977 = vpack.c.b16 %v689, %v685
    %v978 = vpack.c.b16 %v690, %v686
    %v979 = vpack.c.b16 %v691, %v687
    %v980 = vpack.c.b16 %v696, %v692
    %v981 = vpack.c.b16 %v697, %v693
    %v982 = vpack.c.b16 %v698, %v694
    %v983 = vpack.c.b16 %v699, %v695
    %v984 = vpack.c.b16 %v704, %v700
    %v985 = vpack.c.b16 %v705, %v701
    %v986 = vpack.c.b16 %v706, %v702
    %v987 = vpack.c.b16 %v707, %v703
    %v988 = vpack.c.b16 %v712, %v708
    %v989 = vpack.c.b16 %v713, %v709
    %v990 = vpack.c.b16 %v714, %v710
    %v991 = vpack.c.b16 %v715, %v711
    %v992 = vpack.c.b16 %v720, %v716
    %v993 = vpack.c.b16 %v721, %v717
    %v994 = vpack.c.b16 %v722, %v718
    %v995 = vpack.c.b16 %v723, %v719
    %v996 = vpack.c.b16 %v728, %v724
    %v997 = vpack.c.b16 %v729, %v725
    %v998 = vpack.c.b16 %v730, %v726
    %v999 = vpack.c.b16 %v731, %v727
    %v1000 = vpack.c.b16 %v736, %v732
    %v1001 = vpack.c.b16 %v737, %v733
    %v1002 = vpack.c.b16 %v738, %v734
    %v1003 = vpack.c.b16 %v739, %v735
    %v1004 = vpack.c.b16 %v744, %v740
    %v1005 = vpack.c.b16 %v745, %v741
    %v1006 = vpack.c.b16 %v746, %v742
    %v1007 = vpack.c.b16 %v747, %v743
    %v1008 = vpack.c.b16 %v752, %v748
    %v1009 = vpack.c.b16 %v753, %v749
    %v1010 = vpack.c.b16 %v754, %v750
    %v1011 = vpack.c.b16 %v755, %v751
    %v1012 = vpack.c.b16 %v760, %v756
    %v1013 = vpack.c.b16 %v761, %v757
    %v1014 = vpack.c.b16 %v762, %v758
    %v1015 = vpack.c.b16 %v763, %v759
    %v1016 = vpack.c.b16 %v768, %v764
    %v1017 = vpack.c.b16 %v769, %v765
    %v1018 = vpack.c.b16 %v770, %v766
    %v1019 = vpack.c.b16 %v771, %v767
    %v1020 = vpack.c.b16 %v776, %v772
    %v1021 = vpack.c.b16 %v777, %v773
    %v1022 = vpack.c.b16 %v778, %v774
    %v1023 = vpack.c.b16 %v779, %v775
    %v1024 = vpack.c.b16 %v784, %v780
    %v1025 = vpack.c.b16 %v785, %v781
    %v1026 = vpack.c.b16 %v786, %v782
    %v1027 = vpack.c.b16 %v787, %v783
    %v1028 = vpack.c.b16 %v792, %v788
    %v1029 = vpack.c.b16 %v793, %v789
    %v1030 = vpack.c.b16 %v794, %v790
    %v1031 = vpack.c.b16 %v795, %v791
    %v1032 = vpack.c.b16 %v800, %v796
    %v1033 = vpack.c.b16 %v801, %v797
    %v1034 = vpack.c.b16 %v802, %v798
    %v1035 = vpack.c.b16 %v803, %v799
    %v1036 = vpack.c.b16 %v808, %v804
    %v1037 = vpack.c.b16 %v809, %v805
    %v1038 = vpack.c.b16 %v810, %v806
    %v1039 = vpack.c.b16 %v811, %v807
    %v1040 = vpack.c.b16 %v816, %v812
    %v1041 = vpack.c.b16 %v817, %v813
    %v1042 = vpack.c.b16 %v818, %v814
    %v1043 = vpack.c.b16 %v819, %v815
    %v1044 = vpack.c.b16 %v824, %v820
    %v1045 = vpack.c.b16 %v825, %v821
    %v1046 = vpack.c.b16 %v826, %v822
    %v1047 = vpack.c.b16 %v827, %v823
    %v1048 = vpack.c.b16 %v832, %v828
    %v1049 = vpack.c.b16 %v833, %v829
    %v1050 = vpack.c.b16 %v834, %v830
    %v1051 = vpack.c.b16 %v835, %v831
    %v1052 = vpack.c.b16 %v840, %v836
    %v1053 = vpack.c.b16 %v841, %v837
    %v1054 = vpack.c.b16 %v842, %v838
    %v1055 = vpack.c.b16 %v843, %v839
    %v1056 = vpack.c.b16 %v848, %v844
    %v1057 = vpack.c.b16 %v849, %v845
    %v1058 = vpack.c.b16 %v850, %v846
    %v1059 = vpack.c.b16 %v851, %v847
    %v1060 = vpack.c.b16 %v856, %v852
    %v1061 = vpack.c.b16 %v857, %v853
    %v1062 = vpack.c.b16 %v858, %v854
    %v1063 = vpack.c.b16 %v859, %v855
    %v1064 = vpack.c.b16 %v864, %v860
    %v1065 = vpack.c.b16 %v865, %v861
    %v1066 = vpack.c.b16 %v866, %v862
    %v1067 = vpack.c.b16 %v867, %v863
    %v1068 = vpack.c.b16 %v872, %v868
    %v1069 = vpack.c.b16 %v873, %v869
    %v1070 = vpack.c.b16 %v874, %v870
    %v1071 = vpack.c.b16 %v875, %v871
    %vm1268 = vcmask 130048
    %v1270 = vsel %vm1268, %v69, 0
    %1272 = vmatprep.subr.bf16.mxu0 %v905
    %1273 = vmatpush1.bf16.msra.mxu0 %v904
    %1274 = vmatprep.subr.bf16.mxu0 %v901
    %1275 = vmatpush1.bf16.msra.mxu0 %v900
    %1276 = vmatprep.subr.bf16.mxu0 %v897
    %1277 = vmatpush1.bf16.msra.mxu0 %v896
    %1278 = vmatprep.subr.bf16.mxu0 %v893
    %1279 = vmatpush1.bf16.msra.mxu0 %v892
    %1280 = vmatprep.subr.bf16.mxu0 %v889
    %1281 = vmatpush1.bf16.msra.mxu0 %v888
    %1282 = vmatprep.subr.bf16.mxu0 %v885
    %1283 = vmatpush1.bf16.msra.mxu0 %v884
    %1284 = vmatprep.subr.bf16.mxu0 %v881
    %1285 = vmatpush1.bf16.msra.mxu0 %v880
    %1286 = vmatprep.subr.bf16.mxu0 %v877
    %1287 = vmatpush1.bf16.msra.mxu0 %v876
    %1288 = vmatprep.subr.bf16.mxu0 %v937
    %1289 = vmatpush2.bf16.msra.mxu0 %v936
    %1290 = vmatprep.subr.bf16.mxu0 %v933
    %1291 = vmatpush2.bf16.msra.mxu0 %v932
    %1292 = vmatprep.subr.bf16.mxu0 %v929
    %1293 = vmatpush2.bf16.msra.mxu0 %v928
    %1294 = vmatprep.subr.bf16.mxu0 %v925
    %1295 = vmatpush2.bf16.msra.mxu0 %v924
    %1296 = vmatprep.subr.bf16.mxu0 %v921
    %1297 = vmatpush2.bf16.msra.mxu0 %v920
    %1298 = vmatprep.subr.bf16.mxu0 %v917
    %1299 = vmatpush2.bf16.msra.mxu0 %v916
    %1300 = vmatprep.subr.bf16.mxu0 %v913
    %1301 = vmatpush2.bf16.msra.mxu0 %v912
    %1302 = vmatprep.subr.bf16.mxu0 %v909
    %1303 = vmatpush2.bf16.msra.mxu0 %v908
    %1304 = vmatprep.mubr.bf16.mxu0 %v64
    %1305 = vmatmul.mubr.bf16.gmra.mxu0 %v63
    %v1306 = vpop.f32.mrf.mxu0
    %v1307 = vadd.f32 %v271, %v1306
    %v1308 = vpop.f32.mrf.mxu0
    %v1309 = vadd.f32 %v275, %v1308
    %v1310 = vpop.f32.mrf.mxu0
    %v1311 = vpop.f32.mrf.mxu0
    %1312 = vdwg.mxu0
    %1313 = vmatprep.subr.bf16.mxu0 %v969
    %1314 = vmatpush1.bf16.msra.mxu0 %v968
    %1315 = vmatprep.subr.bf16.mxu0 %v965
    %1316 = vmatpush1.bf16.msra.mxu0 %v964
    %1317 = vmatprep.subr.bf16.mxu0 %v961
    %1318 = vmatpush1.bf16.msra.mxu0 %v960
    %1319 = vmatprep.subr.bf16.mxu0 %v957
    %1320 = vmatpush1.bf16.msra.mxu0 %v956
    %1321 = vmatprep.subr.bf16.mxu0 %v953
    %1322 = vmatpush1.bf16.msra.mxu0 %v952
    %1323 = vmatprep.subr.bf16.mxu0 %v949
    %1324 = vmatpush1.bf16.msra.mxu0 %v948
    %1325 = vmatprep.subr.bf16.mxu0 %v945
    %1326 = vmatpush1.bf16.msra.mxu0 %v944
    %1327 = vmatprep.subr.bf16.mxu0 %v941
    %1328 = vmatpush1.bf16.msra.mxu0 %v940
    %1329 = vmatprep.subr.bf16.mxu0 %v1001
    %1330 = vmatpush2.bf16.msra.mxu0 %v1000
    %1331 = vmatprep.subr.bf16.mxu0 %v997
    %1332 = vmatpush2.bf16.msra.mxu0 %v996
    %1333 = vmatprep.subr.bf16.mxu0 %v993
    %1334 = vmatpush2.bf16.msra.mxu0 %v992
    %1335 = vmatprep.subr.bf16.mxu0 %v989
    %1336 = vmatpush2.bf16.msra.mxu0 %v988
    %1337 = vmatprep.subr.bf16.mxu0 %v985
    %1338 = vmatpush2.bf16.msra.mxu0 %v984
    %1339 = vmatprep.subr.bf16.mxu0 %v981
    %1340 = vmatpush2.bf16.msra.mxu0 %v980
    %1341 = vmatprep.subr.bf16.mxu0 %v977
    %1342 = vmatpush2.bf16.msra.mxu0 %v976
    %1343 = vmatprep.subr.bf16.mxu0 %v973
    %1344 = vmatpush2.bf16.msra.mxu0 %v972
    %1345 = vmatprep.mubr.bf16.mxu0 %v66
    %1346 = vmatmul.mubr.bf16.gmra.mxu0 %v65
    %v1347 = vpop.f32.mrf.mxu0
    %v1348 = vadd.f32 %v1307, %v1347
    %v1349 = vpop.f32.mrf.mxu0
    %v1350 = vadd.f32 %v1309, %v1349
    %v1351 = vpop.f32.mrf.mxu0
    %v1352 = vpop.f32.mrf.mxu0
    %1353 = vdwg.mxu0
    %1354 = vmatprep.subr.bf16.mxu0 %v1033
    %1355 = vmatpush1.bf16.msra.mxu0 %v1032
    %1356 = vmatprep.subr.bf16.mxu0 %v1029
    %1357 = vmatpush1.bf16.msra.mxu0 %v1028
    %1358 = vmatprep.subr.bf16.mxu0 %v1025
    %1359 = vmatpush1.bf16.msra.mxu0 %v1024
    %1360 = vmatprep.subr.bf16.mxu0 %v1021
    %1361 = vmatpush1.bf16.msra.mxu0 %v1020
    %1362 = vmatprep.subr.bf16.mxu0 %v1017
    %1363 = vmatpush1.bf16.msra.mxu0 %v1016
    %1364 = vmatprep.subr.bf16.mxu0 %v1013
    %1365 = vmatpush1.bf16.msra.mxu0 %v1012
    %1366 = vmatprep.subr.bf16.mxu0 %v1009
    %1367 = vmatpush1.bf16.msra.mxu0 %v1008
    %1368 = vmatprep.subr.bf16.mxu0 %v1005
    %1369 = vmatpush1.bf16.msra.mxu0 %v1004
    %1370 = vmatprep.subr.bf16.mxu0 %v1065
    %1371 = vmatpush2.bf16.msra.mxu0 %v1064
    %1372 = vmatprep.subr.bf16.mxu0 %v1061
    %1373 = vmatpush2.bf16.msra.mxu0 %v1060
    %1374 = vmatprep.subr.bf16.mxu0 %v1057
    %1375 = vmatpush2.bf16.msra.mxu0 %v1056
    %1376 = vmatprep.subr.bf16.mxu0 %v1053
    %1377 = vmatpush2.bf16.msra.mxu0 %v1052
    %1378 = vmatprep.subr.bf16.mxu0 %v1049
    %1379 = vmatpush2.bf16.msra.mxu0 %v1048
    %1380 = vmatprep.subr.bf16.mxu0 %v1045
    %1381 = vmatpush2.bf16.msra.mxu0 %v1044
    %1382 = vmatprep.subr.bf16.mxu0 %v1041
    %1383 = vmatpush2.bf16.msra.mxu0 %v1040
    %1384 = vmatprep.subr.bf16.mxu0 %v1037
    %1385 = vmatpush2.bf16.msra.mxu0 %v1036
    %1386 = vmatprep.mubr.bf16.mxu0 %v68
    %1387 = vmatmul.mubr.bf16.gmra.mxu0 %v67
    %v1388 = vpop.f32.mrf.mxu0
    %v1389 = vadd.f32 %v1348, %v1388
    %v1390 = vpop.f32.mrf.mxu0
    %v1391 = vadd.f32 %v1350, %v1390
    %v1392 = vpop.f32.mrf.mxu0
    %v1393 = vpop.f32.mrf.mxu0
    %1394 = vdwg.mxu0
    %1395 = vmatprep.subr.bf16.mxu0 0
    %1396 = vmatpush1.bf16.msra.mxu0 0
    %1397 = vmatprep.subr.bf16.mxu0 0
    %1398 = vmatpush1.bf16.msra.mxu0 0
    %1399 = vmatprep.subr.bf16.mxu0 0
    %1400 = vmatpush1.bf16.msra.mxu0 0
    %1401 = vmatprep.subr.bf16.mxu0 0
    %1402 = vmatpush1.bf16.msra.mxu0 0
    %1403 = vmatprep.subr.bf16.mxu0 0
    %1404 = vmatpush1.bf16.msra.mxu0 0
    %1405 = vmatprep.subr.bf16.mxu0 0
    %1406 = vmatpush1.bf16.msra.mxu0 0
    %1407 = vmatprep.subr.bf16.mxu0 0
    %1408 = vmatpush1.bf16.msra.mxu0 0
    %1409 = vmatprep.subr.bf16.mxu0 %v1069
    %1410 = vmatpush1.bf16.msra.mxu0 %v1068
    %1411 = vmatprep.subr.bf16.mxu0 0
    %1412 = vmatpush2.bf16.msra.mxu0 0
    %1413 = vmatprep.subr.bf16.mxu0 0
    %1414 = vmatpush2.bf16.msra.mxu0 0
    %1415 = vmatprep.subr.bf16.mxu0 0
    %1416 = vmatpush2.bf16.msra.mxu0 0
    %1417 = vmatprep.subr.bf16.mxu0 0
    %1418 = vmatpush2.bf16.msra.mxu0 0
    %1419 = vmatprep.subr.bf16.mxu0 0
    %1420 = vmatpush2.bf16.msra.mxu0 0
    %1421 = vmatprep.subr.bf16.mxu0 0
    %1422 = vmatpush2.bf16.msra.mxu0 0
    %1423 = vmatprep.subr.bf16.mxu0 0
    %1424 = vmatpush2.bf16.msra.mxu0 0
    %1425 = vmatprep.subr.bf16.mxu0 0
    %1426 = vmatpush2.bf16.msra.mxu0 0
    %1427 = vmatprep.mubr.bf16.mxu0 0
    %1428 = vmatmul.mubr.bf16.gmra.mxu0 %v1270
    %v1429 = vpop.f32.mrf.mxu0
    %v1430 = vadd.f32 %v1389, %v1429
    %v1431 = vpop.f32.mrf.mxu0
    %v1432 = vadd.f32 %v1391, %v1431
    %v1433 = vpop.f32.mrf.mxu0
    %v1434 = vpop.f32.mrf.mxu0
    %1435 = vdwg.mxu0
    %1436 = vmatprep.subr.bf16.mxu0 %v907
    %1437 = vmatpush1.bf16.msra.mxu0 %v906
    %1438 = vmatprep.subr.bf16.mxu0 %v903
    %1439 = vmatpush1.bf16.msra.mxu0 %v902
    %1440 = vmatprep.subr.bf16.mxu0 %v899
    %1441 = vmatpush1.bf16.msra.mxu0 %v898
    %1442 = vmatprep.subr.bf16.mxu0 %v895
    %1443 = vmatpush1.bf16.msra.mxu0 %v894
    %1444 = vmatprep.subr.bf16.mxu0 %v891
    %1445 = vmatpush1.bf16.msra.mxu0 %v890
    %1446 = vmatprep.subr.bf16.mxu0 %v887
    %1447 = vmatpush1.bf16.msra.mxu0 %v886
    %1448 = vmatprep.subr.bf16.mxu0 %v883
    %1449 = vmatpush1.bf16.msra.mxu0 %v882
    %1450 = vmatprep.subr.bf16.mxu0 %v879
    %1451 = vmatpush1.bf16.msra.mxu0 %v878
    %1452 = vmatprep.subr.bf16.mxu0 %v939
    %1453 = vmatpush2.bf16.msra.mxu0 %v938
    %1454 = vmatprep.subr.bf16.mxu0 %v935
    %1455 = vmatpush2.bf16.msra.mxu0 %v934
    %1456 = vmatprep.subr.bf16.mxu0 %v931
    %1457 = vmatpush2.bf16.msra.mxu0 %v930
    %1458 = vmatprep.subr.bf16.mxu0 %v927
    %1459 = vmatpush2.bf16.msra.mxu0 %v926
    %1460 = vmatprep.subr.bf16.mxu0 %v923
    %1461 = vmatpush2.bf16.msra.mxu0 %v922
    %1462 = vmatprep.subr.bf16.mxu0 %v919
    %1463 = vmatpush2.bf16.msra.mxu0 %v918
    %1464 = vmatprep.subr.bf16.mxu0 %v915
    %1465 = vmatpush2.bf16.msra.mxu0 %v914
    %1466 = vmatprep.subr.bf16.mxu0 %v911
    %1467 = vmatpush2.bf16.msra.mxu0 %v910
    %1468 = vmatprep.mubr.bf16.mxu0 %v64
    %1469 = vmatmul.mubr.bf16.gmra.mxu0 %v63
    %v1470 = vpop.f32.mrf.mxu0
    %v1471 = vadd.f32 %v279, %v1470
    %v1472 = vpop.f32.mrf.mxu0
    %v1473 = vadd.f32 %v283, %v1472
    %v1474 = vpop.f32.mrf.mxu0
    %v1475 = vpop.f32.mrf.mxu0
    %1476 = vdwg.mxu0
    %1477 = vmatprep.subr.bf16.mxu0 %v971
    %1478 = vmatpush1.bf16.msra.mxu0 %v970
    %1479 = vmatprep.subr.bf16.mxu0 %v967
    %1480 = vmatpush1.bf16.msra.mxu0 %v966
    %1481 = vmatprep.subr.bf16.mxu0 %v963
    %1482 = vmatpush1.bf16.msra.mxu0 %v962
    %1483 = vmatprep.subr.bf16.mxu0 %v959
    %1484 = vmatpush1.bf16.msra.mxu0 %v958
    %1485 = vmatprep.subr.bf16.mxu0 %v955
    %1486 = vmatpush1.bf16.msra.mxu0 %v954
    %1487 = vmatprep.subr.bf16.mxu0 %v951
    %1488 = vmatpush1.bf16.msra.mxu0 %v950
    %1489 = vmatprep.subr.bf16.mxu0 %v947
    %1490 = vmatpush1.bf16.msra.mxu0 %v946
    %1491 = vmatprep.subr.bf16.mxu0 %v943
    %1492 = vmatpush1.bf16.msra.mxu0 %v942
    %1493 = vmatprep.subr.bf16.mxu0 %v1003
    %1494 = vmatpush2.bf16.msra.mxu0 %v1002
    %1495 = vmatprep.subr.bf16.mxu0 %v999
    %1496 = vmatpush2.bf16.msra.mxu0 %v998
    %1497 = vmatprep.subr.bf16.mxu0 %v995
    %1498 = vmatpush2.bf16.msra.mxu0 %v994
    %1499 = vmatprep.subr.bf16.mxu0 %v991
    %1500 = vmatpush2.bf16.msra.mxu0 %v990
    %1501 = vmatprep.subr.bf16.mxu0 %v987
    %1502 = vmatpush2.bf16.msra.mxu0 %v986
    %1503 = vmatprep.subr.bf16.mxu0 %v983
    %1504 = vmatpush2.bf16.msra.mxu0 %v982
    %1505 = vmatprep.subr.bf16.mxu0 %v979
    %1506 = vmatpush2.bf16.msra.mxu0 %v978
    %1507 = vmatprep.subr.bf16.mxu0 %v975
    %1508 = vmatpush2.bf16.msra.mxu0 %v974
    %1509 = vmatprep.mubr.bf16.mxu0 %v66
    %1510 = vmatmul.mubr.bf16.gmra.mxu0 %v65
    %v1511 = vpop.f32.mrf.mxu0
    %v1512 = vadd.f32 %v1471, %v1511
    %v1513 = vpop.f32.mrf.mxu0
    %v1514 = vadd.f32 %v1473, %v1513
    %v1515 = vpop.f32.mrf.mxu0
    %v1516 = vpop.f32.mrf.mxu0
    %1517 = vdwg.mxu0
    %1518 = vmatprep.subr.bf16.mxu0 %v1035
    %1519 = vmatpush1.bf16.msra.mxu0 %v1034
    %1520 = vmatprep.subr.bf16.mxu0 %v1031
    %1521 = vmatpush1.bf16.msra.mxu0 %v1030
    %1522 = vmatprep.subr.bf16.mxu0 %v1027
    %1523 = vmatpush1.bf16.msra.mxu0 %v1026
    %1524 = vmatprep.subr.bf16.mxu0 %v1023
    %1525 = vmatpush1.bf16.msra.mxu0 %v1022
    %1526 = vmatprep.subr.bf16.mxu0 %v1019
    %1527 = vmatpush1.bf16.msra.mxu0 %v1018
    %1528 = vmatprep.subr.bf16.mxu0 %v1015
    %1529 = vmatpush1.bf16.msra.mxu0 %v1014
    %1530 = vmatprep.subr.bf16.mxu0 %v1011
    %1531 = vmatpush1.bf16.msra.mxu0 %v1010
    %1532 = vmatprep.subr.bf16.mxu0 %v1007
    %1533 = vmatpush1.bf16.msra.mxu0 %v1006
    %1534 = vmatprep.subr.bf16.mxu0 %v1067
    %1535 = vmatpush2.bf16.msra.mxu0 %v1066
    %1536 = vmatprep.subr.bf16.mxu0 %v1063
    %1537 = vmatpush2.bf16.msra.mxu0 %v1062
    %1538 = vmatprep.subr.bf16.mxu0 %v1059
    %1539 = vmatpush2.bf16.msra.mxu0 %v1058
    %1540 = vmatprep.subr.bf16.mxu0 %v1055
    %1541 = vmatpush2.bf16.msra.mxu0 %v1054
    %1542 = vmatprep.subr.bf16.mxu0 %v1051
    %1543 = vmatpush2.bf16.msra.mxu0 %v1050
    %1544 = vmatprep.subr.bf16.mxu0 %v1047
    %1545 = vmatpush2.bf16.msra.mxu0 %v1046
    %1546 = vmatprep.subr.bf16.mxu0 %v1043
    %1547 = vmatpush2.bf16.msra.mxu0 %v1042
    %1548 = vmatprep.subr.bf16.mxu0 %v1039
    %1549 = vmatpush2.bf16.msra.mxu0 %v1038
    %1550 = vmatprep.mubr.bf16.mxu0 %v68
    %1551 = vmatmul.mubr.bf16.gmra.mxu0 %v67
    %v1552 = vpop.f32.mrf.mxu0
    %v1553 = vadd.f32 %v1512, %v1552
    %v1554 = vpop.f32.mrf.mxu0
    %v1555 = vadd.f32 %v1514, %v1554
    %v1556 = vpop.f32.mrf.mxu0
    %v1557 = vpop.f32.mrf.mxu0
    %1558 = vdwg.mxu0
    %1559 = vmatprep.subr.bf16.mxu0 0
    %1560 = vmatpush1.bf16.msra.mxu0 0
    %1561 = vmatprep.subr.bf16.mxu0 0
    %1562 = vmatpush1.bf16.msra.mxu0 0
    %1563 = vmatprep.subr.bf16.mxu0 0
    %1564 = vmatpush1.bf16.msra.mxu0 0
    %1565 = vmatprep.subr.bf16.mxu0 0
    %1566 = vmatpush1.bf16.msra.mxu0 0
    %1567 = vmatprep.subr.bf16.mxu0 0
    %1568 = vmatpush1.bf16.msra.mxu0 0
    %1569 = vmatprep.subr.bf16.mxu0 0
    %1570 = vmatpush1.bf16.msra.mxu0 0
    %1571 = vmatprep.subr.bf16.mxu0 0
    %1572 = vmatpush1.bf16.msra.mxu0 0
    %1573 = vmatprep.subr.bf16.mxu0 %v1071
    %1574 = vmatpush1.bf16.msra.mxu0 %v1070
    %1575 = vmatprep.subr.bf16.mxu0 0
    %1576 = vmatpush2.bf16.msra.mxu0 0
    %1577 = vmatprep.subr.bf16.mxu0 0
    %1578 = vmatpush2.bf16.msra.mxu0 0
    %1579 = vmatprep.subr.bf16.mxu0 0
    %1580 = vmatpush2.bf16.msra.mxu0 0
    %1581 = vmatprep.subr.bf16.mxu0 0
    %1582 = vmatpush2.bf16.msra.mxu0 0
    %1583 = vmatprep.subr.bf16.mxu0 0
    %1584 = vmatpush2.bf16.msra.mxu0 0
    %1585 = vmatprep.subr.bf16.mxu0 0
    %1586 = vmatpush2.bf16.msra.mxu0 0
    %1587 = vmatprep.subr.bf16.mxu0 0
    %1588 = vmatpush2.bf16.msra.mxu0 0
    %1589 = vmatprep.subr.bf16.mxu0 0
    %1590 = vmatpush2.bf16.msra.mxu0 0
    %1591 = vmatprep.mubr.bf16.mxu0 0
    %1592 = vmatmul.mubr.bf16.gmra.mxu0 %v1270
    %v1593 = vpop.f32.mrf.mxu0
    %v1594 = vadd.f32 %v1553, %v1593
    %v1595 = vpop.f32.mrf.mxu0
    %v1596 = vadd.f32 %v1555, %v1595
    %v1597 = vpop.f32.mrf.mxu0
    %v1598 = vpop.f32.mrf.mxu0
    %1599 = vdwg.mxu0
    %v1600 = vmul.f32 %v1430, 0.01
    %v1601 = vmul.f32 %v1432, 0.01
    %v1602 = vmul.f32 %v1594, 0.01
    %v1603 = vmul.f32 %v1596, 0.01
    %v1604 = vmax.f32 %v1430, %v1600
    %v1605 = vmax.f32 %v1432, %v1601
    %v1606 = vmax.f32 %v1594, %v1602
    %v1607 = vmax.f32 %v1596, %v1603
    %v1608 = vpack.c.bf16 %v1604, %v1604
    %v1609 = vpack.c.bf16 %v1605, %v1605
    %v1610 = vpack.c.bf16 %v1606, %v1606
    %v1611 = vpack.c.bf16 %v1607, %v1607
    %v1612 = vld [vmem:[%s5] sm:$0xf]
    %v1613 = vld [vmem:[%s5 + $0x4] sm:$0xf]
    %v1614 = vld [vmem:[%s5 + $0x8] sm:$0xf]
    %v1615 = vld [vmem:[%s5 + $0xc] sm:$0xf]
    %v1616 = vld [vmem:[%s5 + $0x10] sm:$0xf]
    %v1617 = vld [vmem:[%s5 + $0x14] sm:$0xf]
    %v1618 = vld [vmem:[%s5 + $0x18] sm:$0xf]
    %v1619 = vld [vmem:[%s5 + $0x1c] sm:$0xf]
    %v1620 = vld [vmem:[%s5 + $0x20] sm:$0xf]
    %v1621 = vld [vmem:[%s5 + $0x24] sm:$0xf]
    %v1622 = vld [vmem:[%s5 + $0x28] sm:$0xf]
    %v1623 = vld [vmem:[%s5 + $0x2c] sm:$0xf]
    %v1624 = vld [vmem:[%s5 + $0x30] sm:$0xf]
    %v1625 = vld [vmem:[%s5 + $0x34] sm:$0xf]
    %v1626 = vld [vmem:[%s5 + $0x38] sm:$0xf]
    %v1627 = vld [vmem:[%s5 + $0x3c] sm:$0xf]
    %v1628 = vld [vmem:[%s5 + $0x40] sm:$0xf]
    %v1629 = vld [vmem:[%s5 + $0x44] sm:$0xf]
    %v1630 = vld [vmem:[%s5 + $0x48] sm:$0xf]
    %v1631 = vld [vmem:[%s5 + $0x4c] sm:$0xf]
    %v1632 = vld [vmem:[%s5 + $0x50] sm:$0xf]
    %v1633 = vld [vmem:[%s5 + $0x54] sm:$0xf]
    %v1634 = vld [vmem:[%s5 + $0x58] sm:$0xf]
    %v1635 = vld [vmem:[%s5 + $0x5c] sm:$0xf]
    %v1636 = vld [vmem:[%s5 + $0x60] sm:$0xf]
    %v1637 = vld [vmem:[%s5 + $0x64] sm:$0xf]
    %v1638 = vld [vmem:[%s5 + $0x68] sm:$0xf]
    %v1639 = vld [vmem:[%s5 + $0x6c] sm:$0xf]
    %v1640 = vld [vmem:[%s5 + $0x70] sm:$0xf]
    %v1641 = vld [vmem:[%s5 + $0x74] sm:$0xf]
    %v1642 = vld [vmem:[%s5 + $0x78] sm:$0xf]
    %v1643 = vld [vmem:[%s5 + $0x7c] sm:$0xf]
    %v1644 = vld [vmem:[%s5 + $0x80] sm:$0xf]
    %v1645 = vld [vmem:[%s5 + $0x84] sm:$0xf]
    %v1646 = vld [vmem:[%s5 + $0x88] sm:$0xf]
    %v1647 = vld [vmem:[%s5 + $0x8c] sm:$0xf]
    %v1648 = vld [vmem:[%s5 + $0x90] sm:$0xf]
    %v1649 = vld [vmem:[%s5 + $0x94] sm:$0xf]
    %v1650 = vld [vmem:[%s5 + $0x98] sm:$0xf]
    %v1651 = vld [vmem:[%s5 + $0x9c] sm:$0xf]
    %v1652 = vld [vmem:[%s5 + $0xa0] sm:$0xf]
    %v1653 = vld [vmem:[%s5 + $0xa4] sm:$0xf]
    %v1654 = vld [vmem:[%s5 + $0xa8] sm:$0xf]
    %v1655 = vld [vmem:[%s5 + $0xac] sm:$0xf]
    %v1656 = vld [vmem:[%s5 + $0xb0] sm:$0xf]
    %v1657 = vld [vmem:[%s5 + $0xb4] sm:$0xf]
    %v1658 = vld [vmem:[%s5 + $0xb8] sm:$0xf]
    %v1659 = vld [vmem:[%s5 + $0xbc] sm:$0xf]
    %v1660 = vld [vmem:[%s5 + $0xc0] sm:$0xf]
    %v1661 = vld [vmem:[%s5 + $0xc4] sm:$0xf]
    %v1662 = vld [vmem:[%s6] sm:$0x1]
    %v1664 = vlaneseq
    %v1665 = vshrl.u32 %v1664, 7
    %v1666 = vsub.s32 0, %v1665
    %v1667 = vrot.slane %v1662, %v1666
    %v1719 = vunpack.c.l.b16 %v1612
    %v1720 = vunpack.c.l.b16 %v1613
    %v1721 = vunpack.c.l.b16 %v1614
    %v1722 = vunpack.c.l.b16 %v1615
    %v1723 = vunpack.c.l.b16 %v1616
    %v1724 = vunpack.c.l.b16 %v1617
    %v1725 = vunpack.c.l.b16 %v1618
    %v1726 = vunpack.c.l.b16 %v1619
    %v1727 = vunpack.c.l.b16 %v1620
    %v1728 = vunpack.c.l.b16 %v1621
    %v1729 = vunpack.c.l.b16 %v1622
    %v1730 = vunpack.c.l.b16 %v1623
    %v1731 = vunpack.c.l.b16 %v1624
    %v1732 = vunpack.c.l.b16 %v1625
    %v1733 = vunpack.c.l.b16 %v1626
    %v1734 = vunpack.c.l.b16 %v1627
    %v1735 = vunpack.c.l.b16 %v1628
    %v1736 = vunpack.c.l.b16 %v1629
    %v1737 = vunpack.c.l.b16 %v1630
    %v1738 = vunpack.c.l.b16 %v1631
    %v1739 = vunpack.c.l.b16 %v1632
    %v1740 = vunpack.c.l.b16 %v1633
    %v1741 = vunpack.c.l.b16 %v1634
    %v1742 = vunpack.c.l.b16 %v1635
    %v1743 = vunpack.c.l.b16 %v1636
    %v1744 = vunpack.c.l.b16 %v1637
    %v1745 = vunpack.c.l.b16 %v1638
    %v1746 = vunpack.c.l.b16 %v1639
    %v1747 = vunpack.c.l.b16 %v1640
    %v1748 = vunpack.c.l.b16 %v1641
    %v1749 = vunpack.c.l.b16 %v1642
    %v1750 = vunpack.c.l.b16 %v1643
    %v1751 = vunpack.c.l.b16 %v1644
    %v1752 = vunpack.c.l.b16 %v1645
    %v1753 = vunpack.c.l.b16 %v1646
    %v1754 = vunpack.c.l.b16 %v1647
    %v1755 = vunpack.c.l.b16 %v1648
    %v1756 = vunpack.c.l.b16 %v1649
    %v1757 = vunpack.c.l.b16 %v1650
    %v1758 = vunpack.c.l.b16 %v1651
    %v1759 = vunpack.c.l.b16 %v1652
    %v1760 = vunpack.c.l.b16 %v1653
    %v1761 = vunpack.c.l.b16 %v1654
    %v1762 = vunpack.c.l.b16 %v1655
    %v1763 = vunpack.c.l.b16 %v1656
    %v1764 = vunpack.c.l.b16 %v1657
    %v1765 = vunpack.c.l.b16 %v1658
    %v1766 = vunpack.c.l.b16 %v1659
    %v1767 = vunpack.c.l.b16 %v1660
    %v1768 = vunpack.c.l.b16 %v1661
    %v1769 = vpack.c.b16 %v1720, %v1719
    %v1770 = vpack.c.b16 %v1722, %v1721
    %v1771 = vpack.c.b16 %v1724, %v1723
    %v1772 = vpack.c.b16 %v1726, %v1725
    %v1773 = vpack.c.b16 %v1728, %v1727
    %v1774 = vpack.c.b16 %v1730, %v1729
    %v1775 = vpack.c.b16 %v1732, %v1731
    %v1776 = vpack.c.b16 %v1734, %v1733
    %v1777 = vpack.c.b16 %v1736, %v1735
    %v1778 = vpack.c.b16 %v1738, %v1737
    %v1779 = vpack.c.b16 %v1740, %v1739
    %v1780 = vpack.c.b16 %v1742, %v1741
    %v1781 = vpack.c.b16 %v1744, %v1743
    %v1782 = vpack.c.b16 %v1746, %v1745
    %v1783 = vpack.c.b16 %v1748, %v1747
    %v1784 = vpack.c.b16 %v1750, %v1749
    %v1785 = vpack.c.b16 %v1752, %v1751
    %v1786 = vpack.c.b16 %v1754, %v1753
    %v1787 = vpack.c.b16 %v1756, %v1755
    %v1788 = vpack.c.b16 %v1758, %v1757
    %v1789 = vpack.c.b16 %v1760, %v1759
    %v1790 = vpack.c.b16 %v1762, %v1761
    %v1791 = vpack.c.b16 %v1764, %v1763
    %v1792 = vpack.c.b16 %v1766, %v1765
    %v1793 = vpack.c.b16 %v1768, %v1767
    %v1820 = vsel %vm1268, %v1611, 0
    %1822 = vmatprep.subr.bf16.mxu0 0
    %1823 = vmatpush1.bf16.msra.mxu0 %v1776
    %1824 = vmatprep.subr.bf16.mxu0 0
    %1825 = vmatpush1.bf16.msra.mxu0 %v1775
    %1826 = vmatprep.subr.bf16.mxu0 0
    %1827 = vmatpush1.bf16.msra.mxu0 %v1774
    %1828 = vmatprep.subr.bf16.mxu0 0
    %1829 = vmatpush1.bf16.msra.mxu0 %v1773
    %1830 = vmatprep.subr.bf16.mxu0 0
    %1831 = vmatpush1.bf16.msra.mxu0 %v1772
    %1832 = vmatprep.subr.bf16.mxu0 0
    %1833 = vmatpush1.bf16.msra.mxu0 %v1771
    %1834 = vmatprep.subr.bf16.mxu0 0
    %1835 = vmatpush1.bf16.msra.mxu0 %v1770
    %1836 = vmatprep.subr.bf16.mxu0 0
    %1837 = vmatpush1.bf16.msra.mxu0 %v1769
    %1838 = vmatprep.subr.bf16.mxu0 0
    %1839 = vmatpush2.bf16.msra.mxu0 %v1784
    %1840 = vmatprep.subr.bf16.mxu0 0
    %1841 = vmatpush2.bf16.msra.mxu0 %v1783
    %1842 = vmatprep.subr.bf16.mxu0 0
    %1843 = vmatpush2.bf16.msra.mxu0 %v1782
    %1844 = vmatprep.subr.bf16.mxu0 0
    %1845 = vmatpush2.bf16.msra.mxu0 %v1781
    %1846 = vmatprep.subr.bf16.mxu0 0
    %1847 = vmatpush2.bf16.msra.mxu0 %v1780
    %1848 = vmatprep.subr.bf16.mxu0 0
    %1849 = vmatpush2.bf16.msra.mxu0 %v1779
    %1850 = vmatprep.subr.bf16.mxu0 0
    %1851 = vmatpush2.bf16.msra.mxu0 %v1778
    %1852 = vmatprep.subr.bf16.mxu0 0
    %1853 = vmatpush2.bf16.msra.mxu0 %v1777
    %1854 = vmatprep.mubr.bf16.mxu0 %v1609
    %1855 = vmatmul.mubr.bf16.gmra.mxu0 %v1608
    %v1856 = vpop.f32.mrf.mxu0
    %v1857 = vadd.f32 %v1667, %v1856
    %v1858 = vpop.f32.mrf.mxu0
    %v1859 = vpop.f32.mrf.mxu0
    %v1860 = vpop.f32.mrf.mxu0
    %1861 = vdwg.mxu0
    %1862 = vmatprep.subr.bf16.mxu0 0
    %1863 = vmatpush1.bf16.msra.mxu0 %v1792
    %1864 = vmatprep.subr.bf16.mxu0 0
    %1865 = vmatpush1.bf16.msra.mxu0 %v1791
    %1866 = vmatprep.subr.bf16.mxu0 0
    %1867 = vmatpush1.bf16.msra.mxu0 %v1790
    %1868 = vmatprep.subr.bf16.mxu0 0
    %1869 = vmatpush1.bf16.msra.mxu0 %v1789
    %1870 = vmatprep.subr.bf16.mxu0 0
    %1871 = vmatpush1.bf16.msra.mxu0 %v1788
    %1872 = vmatprep.subr.bf16.mxu0 0
    %1873 = vmatpush1.bf16.msra.mxu0 %v1787
    %1874 = vmatprep.subr.bf16.mxu0 0
    %1875 = vmatpush1.bf16.msra.mxu0 %v1786
    %1876 = vmatprep.subr.bf16.mxu0 0
    %1877 = vmatpush1.bf16.msra.mxu0 %v1785
    %1878 = vmatprep.subr.bf16.mxu0 0
    %1879 = vmatpush2.bf16.msra.mxu0 0
    %1880 = vmatprep.subr.bf16.mxu0 0
    %1881 = vmatpush2.bf16.msra.mxu0 0
    %1882 = vmatprep.subr.bf16.mxu0 0
    %1883 = vmatpush2.bf16.msra.mxu0 0
    %1884 = vmatprep.subr.bf16.mxu0 0
    %1885 = vmatpush2.bf16.msra.mxu0 0
    %1886 = vmatprep.subr.bf16.mxu0 0
    %1887 = vmatpush2.bf16.msra.mxu0 0
    %1888 = vmatprep.subr.bf16.mxu0 0
    %1889 = vmatpush2.bf16.msra.mxu0 0
    %1890 = vmatprep.subr.bf16.mxu0 0
    %1891 = vmatpush2.bf16.msra.mxu0 0
    %1892 = vmatprep.subr.bf16.mxu0 0
    %1893 = vmatpush2.bf16.msra.mxu0 %v1793
    %1894 = vmatprep.mubr.bf16.mxu0 %v1820
    %1895 = vmatmul.mubr.bf16.gmra.mxu0 %v1610
    %v1896 = vpop.f32.mrf.mxu0
    %v1897 = vadd.f32 %v1857, %v1896
    %v1898 = vpop.f32.mrf.mxu0
    %v1899 = vpop.f32.mrf.mxu0
    %v1900 = vpop.f32.mrf.mxu0
    %1901 = vdwg.mxu0
    %1902 = vst.msk [vmem:[#allocation4] sm:$0xff] %vm1268, %v1897
    %v1903 = vld [vmem:[%s1] sm:$0xff]
    %v1904 = vpack.c.bf16 %v1903, %v1903
    %v1905 = vld [vmem:[%s7] sm:$0xff]
    %v1906 = vld [vmem:[%s7 + $0x8] sm:$0x11]
    %v1907 = vld [vmem:[%s8] sm:$0x3]
    %v1909 = vlaneseq
    %v1910 = vshrl.u32 %v1909, 7
    %v1911 = vsub.s32 0, %v1910
    %v1912 = vrot.slane %v1907, %v1911
    %v1913 = vlaneseq
    %v1914 = vshrl.u32 %v1913, 7
    %v1915 = vsub.s32 1, %v1914
    %v1916 = vrot.slane %v1907, %v1915
    %v1921 = vunpack.c.l.b16 %v1905
    %v1922 = vunpack.c.h.b16 %v1905
    %v1923 = vunpack.c.l.b16 %v1906
    %v1924 = vunpack.c.h.b16 %v1906
    %v1925 = vpack.c.b16 %v1923, %v1921
    %v1926 = vpack.c.b16 %v1924, %v1922
    %vm1927 = vcmask 80896
    %v1929 = vsel %vm1927, %v1904, 0
    %vm1931 = vcmask 1044480
    %v1933 = vsel %vm1931, %v1925, 0
    %v1936 = vsel %vm1931, %v1926, 0
    %1938 = vmatprep.subr.bf16.mxu0 0
    %1939 = vmatpush1.bf16.msra.mxu0 0
    %1940 = vmatprep.subr.bf16.mxu0 0
    %1941 = vmatpush1.bf16.msra.mxu0 0
    %1942 = vmatprep.subr.bf16.mxu0 0
    %1943 = vmatpush1.bf16.msra.mxu0 0
    %1944 = vmatprep.subr.bf16.mxu0 0
    %1945 = vmatpush1.bf16.msra.mxu0 0
    %1946 = vmatprep.subr.bf16.mxu0 0
    %1947 = vmatpush1.bf16.msra.mxu0 0
    %1948 = vmatprep.subr.bf16.mxu0 0
    %1949 = vmatpush1.bf16.msra.mxu0 0
    %1950 = vmatprep.subr.bf16.mxu0 0
    %1951 = vmatpush1.bf16.msra.mxu0 0
    %1952 = vmatprep.subr.bf16.mxu0 %v1936
    %1953 = vmatpush1.bf16.msra.mxu0 %v1933
    %1954 = vmatprep.subr.bf16.mxu0 0
    %1955 = vmatpush2.bf16.msra.mxu0 0
    %1956 = vmatprep.subr.bf16.mxu0 0
    %1957 = vmatpush2.bf16.msra.mxu0 0
    %1958 = vmatprep.subr.bf16.mxu0 0
    %1959 = vmatpush2.bf16.msra.mxu0 0
    %1960 = vmatprep.subr.bf16.mxu0 0
    %1961 = vmatpush2.bf16.msra.mxu0 0
    %1962 = vmatprep.subr.bf16.mxu0 0
    %1963 = vmatpush2.bf16.msra.mxu0 0
    %1964 = vmatprep.subr.bf16.mxu0 0
    %1965 = vmatpush2.bf16.msra.mxu0 0
    %1966 = vmatprep.subr.bf16.mxu0 0
    %1967 = vmatpush2.bf16.msra.mxu0 0
    %1968 = vmatprep.subr.bf16.mxu0 0
    %1969 = vmatpush2.bf16.msra.mxu0 0
    %1970 = vmatprep.mubr.bf16.mxu0 0
    %1971 = vmatmul.mubr.bf16.gmra.mxu0 %v1929
    %v1972 = vpop.f32.mrf.mxu0
    %v1973 = vadd.f32 %v1912, %v1972
    %v1974 = vpop.f32.mrf.mxu0
    %v1975 = vadd.f32 %v1916, %v1974
    %v1976 = vpop.f32.mrf.mxu0
    %v1977 = vpop.f32.mrf.mxu0
    %1978 = vdwg.mxu0
    %v1979 = vmax.f32 %v1973, 0.0
    %v1980 = vmax.f32 %v1975, 0.0
    %v1981 = vpack.c.bf16 %v1979, %v1979
    %v1982 = vpack.c.bf16 %v1980, %v1980
    %v1983 = vld [vmem:[%s9] sm:$0xf]
    %v1984 = vld [vmem:[%s9 + $0x4] sm:$0xf]
    %v1985 = vld [vmem:[%s9 + $0x8] sm:$0xf]
    %v1986 = vld [vmem:[%s9 + $0xc] sm:$0xf]
    %v1987 = vld [vmem:[%s9 + $0x10] sm:$0xf]
    %v1988 = vld [vmem:[%s9 + $0x14] sm:$0xf]
    %v1989 = vld [vmem:[%s9 + $0x18] sm:$0xf]
    %v1990 = vld [vmem:[%s9 + $0x1c] sm:$0xf]
    %v1991 = vld [vmem:[%s9 + $0x20] sm:$0xf]
    %v1992 = vld [vmem:[%s9 + $0x24] sm:$0xf]
    %v1993 = vld [vmem:[%s9 + $0x28] sm:$0xf]
    %v1994 = vld [vmem:[%s9 + $0x2c] sm:$0xf]
    %v1995 = vld [vmem:[%s9 + $0x30] sm:$0xf]
    %v1996 = vld [vmem:[%s9 + $0x34] sm:$0xf]
    %v1997 = vld [vmem:[%s9 + $0x38] sm:$0xf]
    %v1998 = vld [vmem:[%s9 + $0x3c] sm:$0xf]
    %v1999 = vld [vmem:[%s9 + $0x40] sm:$0xf]
    %v2000 = vld [vmem:[%s9 + $0x44] sm:$0xf]
    %v2001 = vld [vmem:[%s9 + $0x48] sm:$0xf]
    %v2002 = vld [vmem:[%s9 + $0x4c] sm:$0xf]
    %v2003 = vld [vmem:[%s9 + $0x50] sm:$0xf]
    %v2004 = vld [vmem:[%s9 + $0x54] sm:$0xf]
    %v2005 = vld [vmem:[%s9 + $0x58] sm:$0xf]
    %v2006 = vld [vmem:[%s9 + $0x5c] sm:$0xf]
    %v2007 = vld [vmem:[%s9 + $0x60] sm:$0xf]
    %v2008 = vld [vmem:[%s10] sm:$0x1]
    %v2010 = vlaneseq
    %v2011 = vshrl.u32 %v2010, 7
    %v2012 = vsub.s32 0, %v2011
    %v2013 = vrot.slane %v2008, %v2012
    %v2040 = vunpack.c.l.b16 %v1983
    %v2041 = vunpack.c.l.b16 %v1984
    %v2042 = vunpack.c.l.b16 %v1985
    %v2043 = vunpack.c.l.b16 %v1986
    %v2044 = vunpack.c.l.b16 %v1987
    %v2045 = vunpack.c.l.b16 %v1988
    %v2046 = vunpack.c.l.b16 %v1989
    %v2047 = vunpack.c.l.b16 %v1990
    %v2048 = vunpack.c.l.b16 %v1991
    %v2049 = vunpack.c.l.b16 %v1992
    %v2050 = vunpack.c.l.b16 %v1993
    %v2051 = vunpack.c.l.b16 %v1994
    %v2052 = vunpack.c.l.b16 %v1995
    %v2053 = vunpack.c.l.b16 %v1996
    %v2054 = vunpack.c.l.b16 %v1997
    %v2055 = vunpack.c.l.b16 %v1998
    %v2056 = vunpack.c.l.b16 %v1999
    %v2057 = vunpack.c.l.b16 %v2000
    %v2058 = vunpack.c.l.b16 %v2001
    %v2059 = vunpack.c.l.b16 %v2002
    %v2060 = vunpack.c.l.b16 %v2003
    %v2061 = vunpack.c.l.b16 %v2004
    %v2062 = vunpack.c.l.b16 %v2005
    %v2063 = vunpack.c.l.b16 %v2006
    %v2064 = vunpack.c.l.b16 %v2007
    %v2065 = vpack.c.b16 %v2041, %v2040
    %v2066 = vpack.c.b16 %v2043, %v2042
    %v2067 = vpack.c.b16 %v2045, %v2044
    %v2068 = vpack.c.b16 %v2047, %v2046
    %v2069 = vpack.c.b16 %v2049, %v2048
    %v2070 = vpack.c.b16 %v2051, %v2050
    %v2071 = vpack.c.b16 %v2053, %v2052
    %v2072 = vpack.c.b16 %v2055, %v2054
    %v2073 = vpack.c.b16 %v2057, %v2056
    %v2074 = vpack.c.b16 %v2059, %v2058
    %v2075 = vpack.c.b16 %v2061, %v2060
    %v2076 = vpack.c.b16 %v2063, %v2062
    %v2077 = vpack.c.b16 %v2064, %v2064
    %vm2090 = vcmask 588800
    %v2092 = vsel %vm2090, %v1982, 0
    %vm2094 = vcmask 1043456
    %v2096 = vsel %vm2094, %v2077, 0
    %2098 = vmatprep.subr.bf16.mxu0 0
    %2099 = vmatpush1.bf16.msra.mxu0 %v2072
    %2100 = vmatprep.subr.bf16.mxu0 0
    %2101 = vmatpush1.bf16.msra.mxu0 %v2071
    %2102 = vmatprep.subr.bf16.mxu0 0
    %2103 = vmatpush1.bf16.msra.mxu0 %v2070
    %2104 = vmatprep.subr.bf16.mxu0 0
    %2105 = vmatpush1.bf16.msra.mxu0 %v2069
    %2106 = vmatprep.subr.bf16.mxu0 0
    %2107 = vmatpush1.bf16.msra.mxu0 %v2068
    %2108 = vmatprep.subr.bf16.mxu0 0
    %2109 = vmatpush1.bf16.msra.mxu0 %v2067
    %2110 = vmatprep.subr.bf16.mxu0 0
    %2111 = vmatpush1.bf16.msra.mxu0 %v2066
    %2112 = vmatprep.subr.bf16.mxu0 0
    %2113 = vmatpush1.bf16.msra.mxu0 %v2065
    %2114 = vmatprep.subr.bf16.mxu0 0
    %2115 = vmatpush2.bf16.msra.mxu0 0
    %2116 = vmatprep.subr.bf16.mxu0 0
    %2117 = vmatpush2.bf16.msra.mxu0 0
    %2118 = vmatprep.subr.bf16.mxu0 0
    %2119 = vmatpush2.bf16.msra.mxu0 0
    %2120 = vmatprep.subr.bf16.mxu0 0
    %2121 = vmatpush2.bf16.msra.mxu0 %v2096
    %2122 = vmatprep.subr.bf16.mxu0 0
    %2123 = vmatpush2.bf16.msra.mxu0 %v2076
    %2124 = vmatprep.subr.bf16.mxu0 0
    %2125 = vmatpush2.bf16.msra.mxu0 %v2075
    %2126 = vmatprep.subr.bf16.mxu0 0
    %2127 = vmatpush2.bf16.msra.mxu0 %v2074
    %2128 = vmatprep.subr.bf16.mxu0 0
    %2129 = vmatpush2.bf16.msra.mxu0 %v2073
    %2130 = vmatprep.mubr.bf16.mxu0 %v2092
    %2131 = vmatmul.mubr.bf16.gmra.mxu0 %v1981
    %v2132 = vpop.f32.mrf.mxu0
    %v2133 = vadd.f32 %v2013, %v2132
    %v2134 = vpop.f32.mrf.mxu0
    %v2135 = vpop.f32.mrf.mxu0
    %v2136 = vpop.f32.mrf.mxu0
    %2137 = vdwg.mxu0
    %2138 = vst.msk [vmem:[#allocation6] sm:$0xff] %vm1268, %v2133
    %v2139 = vld [vmem:[%s2] sm:$0xff]
    %v2140 = vmul.f32 %v1897, 0.5
    %v2141 = vmul.f32 %v2140, 1.442695
    %v2142 = vpow.pop %v2141
    %2144 = vrot.lane.b32.xlu0 %v2142, 120
    %v2145 = vpop.permute.xlu0 %2144
    %v2147 = vmul.f32 %v2139, %v2145
    %v2148 = vadd.f32 %v1897, %v2147
    %v2149 = vpack.c.bf16 %v2148, %v2148
    %v2150 = vld [vmem:[%s11] sm:$0xff]
    %v2151 = vld [vmem:[%s11 + $0x8] sm:$0xff]
    %v2152 = vld [vmem:[%s12] sm:$0xf]
    %v2154 = vlaneseq
    %v2155 = vshrl.u32 %v2154, 7
    %v2156 = vsub.s32 0, %v2155
    %v2157 = vrot.slane %v2152, %v2156
    %v2158 = vlaneseq
    %v2159 = vshrl.u32 %v2158, 7
    %v2160 = vsub.s32 1, %v2159
    %v2161 = vrot.slane %v2152, %v2160
    %v2162 = vlaneseq
    %v2163 = vshrl.u32 %v2162, 7
    %v2164 = vsub.s32 2, %v2163
    %v2165 = vrot.slane %v2152, %v2164
    %v2166 = vlaneseq
    %v2167 = vshrl.u32 %v2166, 7
    %v2168 = vsub.s32 3, %v2167
    %v2169 = vrot.slane %v2152, %v2168
    %v2176 = vunpack.c.l.b16 %v2150
    %v2177 = vunpack.c.h.b16 %v2150
    %v2178 = vunpack.c.l.b16 %v2151
    %v2179 = vunpack.c.h.b16 %v2151
    %v2180 = vpack.c.b16 %v2176, %v2176
    %v2181 = vpack.c.b16 %v2177, %v2177
    %v2182 = vpack.c.b16 %v2178, %v2178
    %v2183 = vpack.c.b16 %v2179, %v2179
    %vm2184 = vcmask 64512
    %v2186 = vsel %vm2184, %v2149, 0
    %v2189 = vsel %vm2094, %v2180, 0
    %v2192 = vsel %vm2094, %v2181, 0
    %v2195 = vsel %vm2094, %v2182, 0
    %v2198 = vsel %vm2094, %v2183, 0
    %2200 = vmatprep.subr.bf16.mxu0 0
    %2201 = vmatpush1.bf16.msra.mxu0 0
    %2202 = vmatprep.subr.bf16.mxu0 0
    %2203 = vmatpush1.bf16.msra.mxu0 0
    %2204 = vmatprep.subr.bf16.mxu0 0
    %2205 = vmatpush1.bf16.msra.mxu0 0
    %2206 = vmatprep.subr.bf16.mxu0 0
    %2207 = vmatpush1.bf16.msra.mxu0 0
    %2208 = vmatprep.subr.bf16.mxu0 0
    %2209 = vmatpush1.bf16.msra.mxu0 0
    %2210 = vmatprep.subr.bf16.mxu0 0
    %2211 = vmatpush1.bf16.msra.mxu0 0
    %2212 = vmatprep.subr.bf16.mxu0 0
    %2213 = vmatpush1.bf16.msra.mxu0 0
    %2214 = vmatprep.subr.bf16.mxu0 %v2192
    %2215 = vmatpush1.bf16.msra.mxu0 %v2189
    %2216 = vmatprep.subr.bf16.mxu0 0
    %2217 = vmatpush2.bf16.msra.mxu0 0
    %2218 = vmatprep.subr.bf16.mxu0 0
    %2219 = vmatpush2.bf16.msra.mxu0 0
    %2220 = vmatprep.subr.bf16.mxu0 0
    %2221 = vmatpush2.bf16.msra.mxu0 0
    %2222 = vmatprep.subr.bf16.mxu0 0
    %2223 = vmatpush2.bf16.msra.mxu0 0
    %2224 = vmatprep.subr.bf16.mxu0 0
    %2225 = vmatpush2.bf16.msra.mxu0 0
    %2226 = vmatprep.subr.bf16.mxu0 0
    %2227 = vmatpush2.bf16.msra.mxu0 0
    %2228 = vmatprep.subr.bf16.mxu0 0
    %2229 = vmatpush2.bf16.msra.mxu0 0
    %2230 = vmatprep.subr.bf16.mxu0 0
    %2231 = vmatpush2.bf16.msra.mxu0 0
    %2232 = vmatprep.mubr.bf16.mxu0 0
    %2233 = vmatmul.mubr.bf16.gmra.mxu0 %v2186
    %v2234 = vpop.f32.mrf.mxu0
    %v2235 = vadd.f32 %v2157, %v2234
    %v2236 = vpop.f32.mrf.mxu0
    %v2237 = vadd.f32 %v2161, %v2236
    %v2238 = vpop.f32.mrf.mxu0
    %v2239 = vpop.f32.mrf.mxu0
    %2240 = vdwg.mxu0
    %2241 = vmatprep.subr.bf16.mxu0 0
    %2242 = vmatpush1.bf16.msra.mxu0 0
    %2243 = vmatprep.subr.bf16.mxu0 0
    %2244 = vmatpush1.bf16.msra.mxu0 0
    %2245 = vmatprep.subr.bf16.mxu0 0
    %2246 = vmatpush1.bf16.msra.mxu0 0
    %2247 = vmatprep.subr.bf16.mxu0 0
    %2248 = vmatpush1.bf16.msra.mxu0 0
    %2249 = vmatprep.subr.bf16.mxu0 0
    %2250 = vmatpush1.bf16.msra.mxu0 0
    %2251 = vmatprep.subr.bf16.mxu0 0
    %2252 = vmatpush1.bf16.msra.mxu0 0
    %2253 = vmatprep.subr.bf16.mxu0 0
    %2254 = vmatpush1.bf16.msra.mxu0 0
    %2255 = vmatprep.subr.bf16.mxu0 %v2198
    %2256 = vmatpush1.bf16.msra.mxu0 %v2195
    %2257 = vmatprep.subr.bf16.mxu0 0
    %2258 = vmatpush2.bf16.msra.mxu0 0
    %2259 = vmatprep.subr.bf16.mxu0 0
    %2260 = vmatpush2.bf16.msra.mxu0 0
    %2261 = vmatprep.subr.bf16.mxu0 0
    %2262 = vmatpush2.bf16.msra.mxu0 0
    %2263 = vmatprep.subr.bf16.mxu0 0
    %2264 = vmatpush2.bf16.msra.mxu0 0
    %2265 = vmatprep.subr.bf16.mxu0 0
    %2266 = vmatpush2.bf16.msra.mxu0 0
    %2267 = vmatprep.subr.bf16.mxu0 0
    %2268 = vmatpush2.bf16.msra.mxu0 0
    %2269 = vmatprep.subr.bf16.mxu0 0
    %2270 = vmatpush2.bf16.msra.mxu0 0
    %2271 = vmatprep.subr.bf16.mxu0 0
    %2272 = vmatpush2.bf16.msra.mxu0 0
    %2273 = vmatprep.mubr.bf16.mxu0 0
    %2274 = vmatmul.mubr.bf16.gmra.mxu0 %v2186
    %v2275 = vpop.f32.mrf.mxu0
    %v2276 = vadd.f32 %v2165, %v2275
    %v2277 = vpop.f32.mrf.mxu0
    %v2278 = vadd.f32 %v2169, %v2277
    %v2279 = vpop.f32.mrf.mxu0
    %v2280 = vpop.f32.mrf.mxu0
    %2281 = vdwg.mxu0
    %v2282 = vmul.f32 %v2235, 0.01
    %v2283 = vmul.f32 %v2237, 0.01
    %v2284 = vmul.f32 %v2276, 0.01
    %v2285 = vmul.f32 %v2278, 0.01
    %v2286 = vmax.f32 %v2235, %v2282
    %v2287 = vmax.f32 %v2237, %v2283
    %v2288 = vmax.f32 %v2276, %v2284
    %v2289 = vmax.f32 %v2278, %v2285
    %v2290 = vpack.c.bf16 %v2286, %v2286
    %v2291 = vpack.c.bf16 %v2287, %v2287
    %v2292 = vpack.c.bf16 %v2288, %v2288
    %v2293 = vpack.c.bf16 %v2289, %v2289
    %v2294 = vld [vmem:[%s13] sm:$0xff]
    %v2295 = vld [vmem:[%s13 + $0x8] sm:$0xff]
    %v2296 = vld [vmem:[%s13 + $0x10] sm:$0xff]
    %v2297 = vld [vmem:[%s13 + $0x18] sm:$0xf]
    %v2298 = vld [vmem:[%s13 + $0x1c] sm:$0xff]
    %v2299 = vld [vmem:[%s13 + $0x24] sm:$0xff]
    %v2300 = vld [vmem:[%s13 + $0x2c] sm:$0xff]
    %v2301 = vld [vmem:[%s13 + $0x34] sm:$0xf]
    %v2302 = vld [vmem:[%s13 + $0x38] sm:$0xff]
    %v2303 = vld [vmem:[%s13 + $0x40] sm:$0xff]
    %v2304 = vld [vmem:[%s13 + $0x48] sm:$0xff]
    %v2305 = vld [vmem:[%s13 + $0x50] sm:$0xf]
    %v2306 = vld [vmem:[%s13 + $0x54] sm:$0xff]
    %v2307 = vld [vmem:[%s13 + $0x5c] sm:$0xff]
    %v2308 = vld [vmem:[%s13 + $0x64] sm:$0xff]
    %v2309 = vld [vmem:[%s13 + $0x6c] sm:$0xf]
    %v2310 = vld [vmem:[%s13 + $0x70] sm:$0xff]
    %v2311 = vld [vmem:[%s13 + $0x78] sm:$0xff]
    %v2312 = vld [vmem:[%s13 + $0x80] sm:$0xff]
    %v2313 = vld [vmem:[%s13 + $0x88] sm:$0xf]
    %v2314 = vld [vmem:[%s13 + $0x8c] sm:$0xff]
    %v2315 = vld [vmem:[%s13 + $0x94] sm:$0xff]
    %v2316 = vld [vmem:[%s13 + $0x9c] sm:$0xff]
    %v2317 = vld [vmem:[%s13 + $0xa4] sm:$0xf]
    %v2318 = vld [vmem:[%s13 + $0xa8] sm:$0xff]
    %v2319 = vld [vmem:[%s13 + $0xb0] sm:$0xff]
    %v2320 = vld [vmem:[%s13 + $0xb8] sm:$0xff]
    %v2321 = vld [vmem:[%s13 + $0xc0] sm:$0xf]
    %v2322 = vld [vmem:[%s13 + $0xc4] sm:$0xff]
    %v2323 = vld [vmem:[%s13 + $0xcc] sm:$0xff]
    %v2324 = vld [vmem:[%s13 + $0xd4] sm:$0xff]
    %v2325 = vld [vmem:[%s13 + $0xdc] sm:$0xf]
    %v2326 = vld [vmem:[%s13 + $0xe0] sm:$0xff]
    %v2327 = vld [vmem:[%s13 + $0xe8] sm:$0xff]
    %v2328 = vld [vmem:[%s13 + $0xf0] sm:$0xff]
    %v2329 = vld [vmem:[%s13 + $0xf8] sm:$0xf]
    %v2330 = vld [vmem:[%s13 + $0xfc] sm:$0xff]
    %v2331 = vld [vmem:[%s13 + $0x104] sm:$0xff]
    %v2332 = vld [vmem:[%s13 + $0x10c] sm:$0xff]
    %v2333 = vld [vmem:[%s13 + $0x114] sm:$0xf]
    %v2334 = vld [vmem:[%s13 + $0x118] sm:$0xff]
    %v2335 = vld [vmem:[%s13 + $0x120] sm:$0xff]
    %v2336 = vld [vmem:[%s13 + $0x128] sm:$0xff]
    %v2337 = vld [vmem:[%s13 + $0x130] sm:$0xf]
    %v2338 = vld [vmem:[%s13 + $0x134] sm:$0xff]
    %v2339 = vld [vmem:[%s13 + $0x13c] sm:$0xff]
    %v2340 = vld [vmem:[%s13 + $0x144] sm:$0xff]
    %v2341 = vld [vmem:[%s13 + $0x14c] sm:$0xf]
    %v2342 = vld [vmem:[%s13 + $0x150] sm:$0xff]
    %v2343 = vld [vmem:[%s13 + $0x158] sm:$0xff]
    %v2344 = vld [vmem:[%s13 + $0x160] sm:$0xff]
    %v2345 = vld [vmem:[%s13 + $0x168] sm:$0xf]
    %v2346 = vld [vmem:[%s13 + $0x16c] sm:$0xff]
    %v2347 = vld [vmem:[%s13 + $0x174] sm:$0xff]
    %v2348 = vld [vmem:[%s13 + $0x17c] sm:$0xff]
    %v2349 = vld [vmem:[%s13 + $0x184] sm:$0xf]
    %v2350 = vld [vmem:[%s13 + $0x188] sm:$0xff]
    %v2351 = vld [vmem:[%s13 + $0x190] sm:$0xff]
    %v2352 = vld [vmem:[%s13 + $0x198] sm:$0xff]
    %v2353 = vld [vmem:[%s13 + $0x1a0] sm:$0xf]
    %v2354 = vld [vmem:[%s13 + $0x1a4] sm:$0xff]
    %v2355 = vld [vmem:[%s13 + $0x1ac] sm:$0xff]
    %v2356 = vld [vmem:[%s13 + $0x1b4] sm:$0xff]
    %v2357 = vld [vmem:[%s13 + $0x1bc] sm:$0xf]
    %v2358 = vld [vmem:[%s13 + $0x1c0] sm:$0xff]
    %v2359 = vld [vmem:[%s13 + $0x1c8] sm:$0xff]
    %v2360 = vld [vmem:[%s13 + $0x1d0] sm:$0xff]
    %v2361 = vld [vmem:[%s13 + $0x1d8] sm:$0xf]
    %v2362 = vld [vmem:[%s13 + $0x1dc] sm:$0xff]
    %v2363 = vld [vmem:[%s13 + $0x1e4] sm:$0xff]
    %v2364 = vld [vmem:[%s13 + $0x1ec] sm:$0xff]
    %v2365 = vld [vmem:[%s13 + $0x1f4] sm:$0xf]
    %v2366 = vld [vmem:[%s13 + $0x1f8] sm:$0xff]
    %v2367 = vld [vmem:[%s13 + $0x200] sm:$0xff]
    %v2368 = vld [vmem:[%s13 + $0x208] sm:$0xff]
    %v2369 = vld [vmem:[%s13 + $0x210] sm:$0xf]
    %v2370 = vld [vmem:[%s13 + $0x214] sm:$0xff]
    %v2371 = vld [vmem:[%s13 + $0x21c] sm:$0xff]
    %v2372 = vld [vmem:[%s13 + $0x224] sm:$0xff]
    %v2373 = vld [vmem:[%s13 + $0x22c] sm:$0xf]
    %v2374 = vld [vmem:[%s13 + $0x230] sm:$0xff]
    %v2375 = vld [vmem:[%s13 + $0x238] sm:$0xff]
    %v2376 = vld [vmem:[%s13 + $0x240] sm:$0xff]
    %v2377 = vld [vmem:[%s13 + $0x248] sm:$0xf]
    %v2378 = vld [vmem:[%s13 + $0x24c] sm:$0xff]
    %v2379 = vld [vmem:[%s13 + $0x254] sm:$0xff]
    %v2380 = vld [vmem:[%s13 + $0x25c] sm:$0xff]
    %v2381 = vld [vmem:[%s13 + $0x264] sm:$0xf]
    %v2382 = vld [vmem:[%s13 + $0x268] sm:$0xff]
    %v2383 = vld [vmem:[%s13 + $0x270] sm:$0xff]
    %v2384 = vld [vmem:[%s13 + $0x278] sm:$0xff]
    %v2385 = vld [vmem:[%s13 + $0x280] sm:$0xf]
    %v2386 = vld [vmem:[%s13 + $0x284] sm:$0xff]
    %v2387 = vld [vmem:[%s13 + $0x28c] sm:$0xff]
    %v2388 = vld [vmem:[%s13 + $0x294] sm:$0xff]
    %v2389 = vld [vmem:[%s13 + $0x29c] sm:$0xf]
    %v2390 = vld [vmem:[%s13 + $0x2a0] sm:$0xff]
    %v2391 = vld [vmem:[%s13 + $0x2a8] sm:$0xff]
    %v2392 = vld [vmem:[%s13 + $0x2b0] sm:$0xff]
    %v2393 = vld [vmem:[%s13 + $0x2b8] sm:$0xf]
    %v2394 = vld [vmem:[%s13 + $0x2bc] sm:$0xff]
    %v2395 = vld [vmem:[%s13 + $0x2c4] sm:$0xff]
    %v2396 = vld [vmem:[%s13 + $0x2cc] sm:$0xff]
    %v2397 = vld [vmem:[%s13 + $0x2d4] sm:$0xf]
    %v2398 = vld [vmem:[%s13 + $0x2d8] sm:$0xff]
    %v2399 = vld [vmem:[%s13 + $0x2e0] sm:$0xff]
    %v2400 = vld [vmem:[%s13 + $0x2e8] sm:$0xff]
    %v2401 = vld [vmem:[%s13 + $0x2f0] sm:$0xf]
    %v2402 = vld [vmem:[%s13 + $0x2f4] sm:$0xff]
    %v2403 = vld [vmem:[%s13 + $0x2fc] sm:$0xff]
    %v2404 = vld [vmem:[%s13 + $0x304] sm:$0xff]
    %v2405 = vld [vmem:[%s13 + $0x30c] sm:$0xf]
    %v2406 = vld [vmem:[%s13 + $0x310] sm:$0xff]
    %v2407 = vld [vmem:[%s13 + $0x318] sm:$0xff]
    %v2408 = vld [vmem:[%s13 + $0x320] sm:$0xff]
    %v2409 = vld [vmem:[%s13 + $0x328] sm:$0xf]
    %v2410 = vld [vmem:[%s13 + $0x32c] sm:$0xff]
    %v2411 = vld [vmem:[%s13 + $0x334] sm:$0xff]
    %v2412 = vld [vmem:[%s13 + $0x33c] sm:$0xff]
    %v2413 = vld [vmem:[%s13 + $0x344] sm:$0xf]
    %v2414 = vld [vmem:[%s13 + $0x348] sm:$0xff]
    %v2415 = vld [vmem:[%s13 + $0x350] sm:$0xff]
    %v2416 = vld [vmem:[%s13 + $0x358] sm:$0xff]
    %v2417 = vld [vmem:[%s13 + $0x360] sm:$0xf]
    %v2418 = vld [vmem:[%s13 + $0x364] sm:$0xff]
    %v2419 = vld [vmem:[%s13 + $0x36c] sm:$0xff]
    %v2420 = vld [vmem:[%s13 + $0x374] sm:$0xff]
    %v2421 = vld [vmem:[%s13 + $0x37c] sm:$0xf]
    %v2422 = vld [vmem:[%s13 + $0x380] sm:$0xff]
    %v2423 = vld [vmem:[%s13 + $0x388] sm:$0xff]
    %v2424 = vld [vmem:[%s13 + $0x390] sm:$0xff]
    %v2425 = vld [vmem:[%s13 + $0x398] sm:$0xf]
    %v2426 = vld [vmem:[%s13 + $0x39c] sm:$0xff]
    %v2427 = vld [vmem:[%s13 + $0x3a4] sm:$0xff]
    %v2428 = vld [vmem:[%s13 + $0x3ac] sm:$0xff]
    %v2429 = vld [vmem:[%s13 + $0x3b4] sm:$0xf]
    %v2430 = vld [vmem:[%s13 + $0x3b8] sm:$0xff]
    %v2431 = vld [vmem:[%s13 + $0x3c0] sm:$0xff]
    %v2432 = vld [vmem:[%s13 + $0x3c8] sm:$0xff]
    %v2433 = vld [vmem:[%s13 + $0x3d0] sm:$0xf]
    %v2434 = vld [vmem:[%s13 + $0x3d4] sm:$0xff]
    %v2435 = vld [vmem:[%s13 + $0x3dc] sm:$0xff]
    %v2436 = vld [vmem:[%s13 + $0x3e4] sm:$0xff]
    %v2437 = vld [vmem:[%s13 + $0x3ec] sm:$0xf]
    %v2438 = vld [vmem:[%s13 + $0x3f0] sm:$0xff]
    %v2439 = vld [vmem:[%s13 + $0x3f8] sm:$0xff]
    %v2440 = vld [vmem:[%s13 + $0x400] sm:$0xff]
    %v2441 = vld [vmem:[%s13 + $0x408] sm:$0xf]
    %v2442 = vld [vmem:[%s13 + $0x40c] sm:$0xff]
    %v2443 = vld [vmem:[%s13 + $0x414] sm:$0xff]
    %v2444 = vld [vmem:[%s13 + $0x41c] sm:$0xff]
    %v2445 = vld [vmem:[%s13 + $0x424] sm:$0xf]
    %v2446 = vld [vmem:[%s13 + $0x428] sm:$0xff]
    %v2447 = vld [vmem:[%s13 + $0x430] sm:$0xff]
    %v2448 = vld [vmem:[%s13 + $0x438] sm:$0xff]
    %v2449 = vld [vmem:[%s13 + $0x440] sm:$0xf]
    %v2450 = vld [vmem:[%s13 + $0x444] sm:$0xff]
    %v2451 = vld [vmem:[%s13 + $0x44c] sm:$0xff]
    %v2452 = vld [vmem:[%s13 + $0x454] sm:$0xff]
    %v2453 = vld [vmem:[%s13 + $0x45c] sm:$0xf]
    %v2454 = vld [vmem:[%s13 + $0x460] sm:$0xff]
    %v2455 = vld [vmem:[%s13 + $0x468] sm:$0xff]
    %v2456 = vld [vmem:[%s13 + $0x470] sm:$0xff]
    %v2457 = vld [vmem:[%s13 + $0x478] sm:$0xf]
    %v2458 = vld [vmem:[%s13 + $0x47c] sm:$0xff]
    %v2459 = vld [vmem:[%s13 + $0x484] sm:$0xff]
    %v2460 = vld [vmem:[%s13 + $0x48c] sm:$0xff]
    %v2461 = vld [vmem:[%s13 + $0x494] sm:$0xf]
    %v2462 = vld [vmem:[%s13 + $0x498] sm:$0xff]
    %v2463 = vld [vmem:[%s13 + $0x4a0] sm:$0xff]
    %v2464 = vld [vmem:[%s13 + $0x4a8] sm:$0xff]
    %v2465 = vld [vmem:[%s13 + $0x4b0] sm:$0xf]
    %v2466 = vld [vmem:[%s13 + $0x4b4] sm:$0xff]
    %v2467 = vld [vmem:[%s13 + $0x4bc] sm:$0xff]
    %v2468 = vld [vmem:[%s13 + $0x4c4] sm:$0xff]
    %v2469 = vld [vmem:[%s13 + $0x4cc] sm:$0xf]
    %v2470 = vld [vmem:[%s13 + $0x4d0] sm:$0xff]
    %v2471 = vld [vmem:[%s13 + $0x4d8] sm:$0xff]
    %v2472 = vld [vmem:[%s13 + $0x4e0] sm:$0xff]
    %v2473 = vld [vmem:[%s13 + $0x4e8] sm:$0xf]
    %v2474 = vld [vmem:[%s13 + $0x4ec] sm:$0xff]
    %v2475 = vld [vmem:[%s13 + $0x4f4] sm:$0xff]
    %v2476 = vld [vmem:[%s13 + $0x4fc] sm:$0xff]
    %v2477 = vld [vmem:[%s13 + $0x504] sm:$0xf]
    %v2478 = vld [vmem:[%s13 + $0x508] sm:$0xff]
    %v2479 = vld [vmem:[%s13 + $0x510] sm:$0xff]
    %v2480 = vld [vmem:[%s13 + $0x518] sm:$0xff]
    %v2481 = vld [vmem:[%s13 + $0x520] sm:$0xf]
    %v2482 = vld [vmem:[%s13 + $0x524] sm:$0xff]
    %v2483 = vld [vmem:[%s13 + $0x52c] sm:$0xff]
    %v2484 = vld [vmem:[%s13 + $0x534] sm:$0xff]
    %v2485 = vld [vmem:[%s13 + $0x53c] sm:$0xf]
    %v2486 = vld [vmem:[%s13 + $0x540] sm:$0xff]
    %v2487 = vld [vmem:[%s13 + $0x548] sm:$0xff]
    %v2488 = vld [vmem:[%s13 + $0x550] sm:$0xff]
    %v2489 = vld [vmem:[%s13 + $0x558] sm:$0xf]
    %v2490 = vld [vmem:[%s13 + $0x55c] sm:$0xff]
    %v2491 = vld [vmem:[%s13 + $0x564] sm:$0xff]
    %v2492 = vld [vmem:[%s13 + $0x56c] sm:$0xff]
    %v2493 = vld [vmem:[%s13 + $0x574] sm:$0xf]
    %v2494 = vld [vmem:[%s14] sm:$0x7f]
    %v2496 = vlaneseq
    %v2497 = vshrl.u32 %v2496, 7
    %v2498 = vsub.s32 0, %v2497
    %v2499 = vrot.slane %v2494, %v2498
    %v2500 = vlaneseq
    %v2501 = vshrl.u32 %v2500, 7
    %v2502 = vsub.s32 1, %v2501
    %v2503 = vrot.slane %v2494, %v2502
    %v2504 = vlaneseq
    %v2505 = vshrl.u32 %v2504, 7
    %v2506 = vsub.s32 2, %v2505
    %v2507 = vrot.slane %v2494, %v2506
    %v2508 = vlaneseq
    %v2509 = vshrl.u32 %v2508, 7
    %v2510 = vsub.s32 3, %v2509
    %v2511 = vrot.slane %v2494, %v2510
    %v2512 = vlaneseq
    %v2513 = vshrl.u32 %v2512, 7
    %v2514 = vsub.s32 4, %v2513
    %v2515 = vrot.slane %v2494, %v2514
    %v2516 = vlaneseq
    %v2517 = vshrl.u32 %v2516, 7
    %v2518 = vsub.s32 5, %v2517
    %v2519 = vrot.slane %v2494, %v2518
    %v2520 = vlaneseq
    %v2521 = vshrl.u32 %v2520, 7
    %v2522 = vsub.s32 6, %v2521
    %v2523 = vrot.slane %v2494, %v2522
    %v2731 = vunpack.c.l.b16 %v2294
    %v2732 = vunpack.c.h.b16 %v2294
    %v2733 = vunpack.c.l.b16 %v2295
    %v2734 = vunpack.c.h.b16 %v2295
    %v2735 = vunpack.c.l.b16 %v2296
    %v2736 = vunpack.c.h.b16 %v2296
    %v2737 = vunpack.c.l.b16 %v2297
    %v2738 = vunpack.c.l.b16 %v2298
    %v2739 = vunpack.c.h.b16 %v2298
    %v2740 = vunpack.c.l.b16 %v2299
    %v2741 = vunpack.c.h.b16 %v2299
    %v2742 = vunpack.c.l.b16 %v2300
    %v2743 = vunpack.c.h.b16 %v2300
    %v2744 = vunpack.c.l.b16 %v2301
    %v2745 = vunpack.c.l.b16 %v2302
    %v2746 = vunpack.c.h.b16 %v2302
    %v2747 = vunpack.c.l.b16 %v2303
    %v2748 = vunpack.c.h.b16 %v2303
    %v2749 = vunpack.c.l.b16 %v2304
    %v2750 = vunpack.c.h.b16 %v2304
    %v2751 = vunpack.c.l.b16 %v2305
    %v2752 = vunpack.c.l.b16 %v2306
    %v2753 = vunpack.c.h.b16 %v2306
    %v2754 = vunpack.c.l.b16 %v2307
    %v2755 = vunpack.c.h.b16 %v2307
    %v2756 = vunpack.c.l.b16 %v2308
    %v2757 = vunpack.c.h.b16 %v2308
    %v2758 = vunpack.c.l.b16 %v2309
    %v2759 = vunpack.c.l.b16 %v2310
    %v2760 = vunpack.c.h.b16 %v2310
    %v2761 = vunpack.c.l.b16 %v2311
    %v2762 = vunpack.c.h.b16 %v2311
    %v2763 = vunpack.c.l.b16 %v2312
    %v2764 = vunpack.c.h.b16 %v2312
    %v2765 = vunpack.c.l.b16 %v2313
    %v2766 = vunpack.c.l.b16 %v2314
    %v2767 = vunpack.c.h.b16 %v2314
    %v2768 = vunpack.c.l.b16 %v2315
    %v2769 = vunpack.c.h.b16 %v2315
    %v2770 = vunpack.c.l.b16 %v2316
    %v2771 = vunpack.c.h.b16 %v2316
    %v2772 = vunpack.c.l.b16 %v2317
    %v2773 = vunpack.c.l.b16 %v2318
    %v2774 = vunpack.c.h.b16 %v2318
    %v2775 = vunpack.c.l.b16 %v2319
    %v2776 = vunpack.c.h.b16 %v2319
    %v2777 = vunpack.c.l.b16 %v2320
    %v2778 = vunpack.c.h.b16 %v2320
    %v2779 = vunpack.c.l.b16 %v2321
    %v2780 = vunpack.c.l.b16 %v2322
    %v2781 = vunpack.c.h.b16 %v2322
    %v2782 = vunpack.c.l.b16 %v2323
    %v2783 = vunpack.c.h.b16 %v2323
    %v2784 = vunpack.c.l.b16 %v2324
    %v2785 = vunpack.c.h.b16 %v2324
    %v2786 = vunpack.c.l.b16 %v2325
    %v2787 = vunpack.c.l.b16 %v2326
    %v2788 = vunpack.c.h.b16 %v2326
    %v2789 = vunpack.c.l.b16 %v2327
    %v2790 = vunpack.c.h.b16 %v2327
    %v2791 = vunpack.c.l.b16 %v2328
    %v2792 = vunpack.c.h.b16 %v2328
    %v2793 = vunpack.c.l.b16 %v2329
    %v2794 = vunpack.c.l.b16 %v2330
    %v2795 = vunpack.c.h.b16 %v2330
    %v2796 = vunpack.c.l.b16 %v2331
    %v2797 = vunpack.c.h.b16 %v2331
    %v2798 = vunpack.c.l.b16 %v2332
    %v2799 = vunpack.c.h.b16 %v2332
    %v2800 = vunpack.c.l.b16 %v2333
    %v2801 = vunpack.c.l.b16 %v2334
    %v2802 = vunpack.c.h.b16 %v2334
    %v2803 = vunpack.c.l.b16 %v2335
    %v2804 = vunpack.c.h.b16 %v2335
    %v2805 = vunpack.c.l.b16 %v2336
    %v2806 = vunpack.c.h.b16 %v2336
    %v2807 = vunpack.c.l.b16 %v2337
    %v2808 = vunpack.c.l.b16 %v2338
    %v2809 = vunpack.c.h.b16 %v2338
    %v2810 = vunpack.c.l.b16 %v2339
    %v2811 = vunpack.c.h.b16 %v2339
    %v2812 = vunpack.c.l.b16 %v2340
    %v2813 = vunpack.c.h.b16 %v2340
    %v2814 = vunpack.c.l.b16 %v2341
    %v2815 = vunpack.c.l.b16 %v2342
    %v2816 = vunpack.c.h.b16 %v2342
    %v2817 = vunpack.c.l.b16 %v2343
    %v2818 = vunpack.c.h.b16 %v2343
    %v2819 = vunpack.c.l.b16 %v2344
    %v2820 = vunpack.c.h.b16 %v2344
    %v2821 = vunpack.c.l.b16 %v2345
    %v2822 = vunpack.c.l.b16 %v2346
    %v2823 = vunpack.c.h.b16 %v2346
    %v2824 = vunpack.c.l.b16 %v2347
    %v2825 = vunpack.c.h.b16 %v2347
    %v2826 = vunpack.c.l.b16 %v2348
    %v2827 = vunpack.c.h.b16 %v2348
    %v2828 = vunpack.c.l.b16 %v2349
    %v2829 = vunpack.c.l.b16 %v2350
    %v2830 = vunpack.c.h.b16 %v2350
    %v2831 = vunpack.c.l.b16 %v2351
    %v2832 = vunpack.c.h.b16 %v2351
    %v2833 = vunpack.c.l.b16 %v2352
    %v2834 = vunpack.c.h.b16 %v2352
    %v2835 = vunpack.c.l.b16 %v2353
    %v2836 = vunpack.c.l.b16 %v2354
    %v2837 = vunpack.c.h.b16 %v2354
    %v2838 = vunpack.c.l.b16 %v2355
    %v2839 = vunpack.c.h.b16 %v2355
    %v2840 = vunpack.c.l.b16 %v2356
    %v2841 = vunpack.c.h.b16 %v2356
    %v2842 = vunpack.c.l.b16 %v2357
    %v2843 = vunpack.c.l.b16 %v2358
    %v2844 = vunpack.c.h.b16 %v2358
    %v2845 = vunpack.c.l.b16 %v2359
    %v2846 = vunpack.c.h.b16 %v2359
    %v2847 = vunpack.c.l.b16 %v2360
    %v2848 = vunpack.c.h.b16 %v2360
    %v2849 = vunpack.c.l.b16 %v2361
    %v2850 = vunpack.c.l.b16 %v2362
    %v2851 = vunpack.c.h.b16 %v2362
    %v2852 = vunpack.c.l.b16 %v2363
    %v2853 = vunpack.c.h.b16 %v2363
    %v2854 = vunpack.c.l.b16 %v2364
    %v2855 = vunpack.c.h.b16 %v2364
    %v2856 = vunpack.c.l.b16 %v2365
    %v2857 = vunpack.c.l.b16 %v2366
    %v2858 = vunpack.c.h.b16 %v2366
    %v2859 = vunpack.c.l.b16 %v2367
    %v2860 = vunpack.c.h.b16 %v2367
    %v2861 = vunpack.c.l.b16 %v2368
    %v2862 = vunpack.c.h.b16 %v2368
    %v2863 = vunpack.c.l.b16 %v2369
    %v2864 = vunpack.c.l.b16 %v2370
    %v2865 = vunpack.c.h.b16 %v2370
    %v2866 = vunpack.c.l.b16 %v2371
    %v2867 = vunpack.c.h.b16 %v2371
    %v2868 = vunpack.c.l.b16 %v2372
    %v2869 = vunpack.c.h.b16 %v2372
    %v2870 = vunpack.c.l.b16 %v2373
    %v2871 = vunpack.c.l.b16 %v2374
    %v2872 = vunpack.c.h.b16 %v2374
    %v2873 = vunpack.c.l.b16 %v2375
    %v2874 = vunpack.c.h.b16 %v2375
    %v2875 = vunpack.c.l.b16 %v2376
    %v2876 = vunpack.c.h.b16 %v2376
    %v2877 = vunpack.c.l.b16 %v2377
    %v2878 = vunpack.c.l.b16 %v2378
    %v2879 = vunpack.c.h.b16 %v2378
    %v2880 = vunpack.c.l.b16 %v2379
    %v2881 = vunpack.c.h.b16 %v2379
    %v2882 = vunpack.c.l.b16 %v2380
    %v2883 = vunpack.c.h.b16 %v2380
    %v2884 = vunpack.c.l.b16 %v2381
    %v2885 = vunpack.c.l.b16 %v2382
    %v2886 = vunpack.c.h.b16 %v2382
    %v2887 = vunpack.c.l.b16 %v2383
    %v2888 = vunpack.c.h.b16 %v2383
    %v2889 = vunpack.c.l.b16 %v2384
    %v2890 = vunpack.c.h.b16 %v2384
    %v2891 = vunpack.c.l.b16 %v2385
    %v2892 = vunpack.c.l.b16 %v2386
    %v2893 = vunpack.c.h.b16 %v2386
    %v2894 = vunpack.c.l.b16 %v2387
    %v2895 = vunpack.c.h.b16 %v2387
    %v2896 = vunpack.c.l.b16 %v2388
    %v2897 = vunpack.c.h.b16 %v2388
    %v2898 = vunpack.c.l.b16 %v2389
    %v2899 = vunpack.c.l.b16 %v2390
    %v2900 = vunpack.c.h.b16 %v2390
    %v2901 = vunpack.c.l.b16 %v2391
    %v2902 = vunpack.c.h.b16 %v2391
    %v2903 = vunpack.c.l.b16 %v2392
    %v2904 = vunpack.c.h.b16 %v2392
    %v2905 = vunpack.c.l.b16 %v2393
    %v2906 = vunpack.c.l.b16 %v2394
    %v2907 = vunpack.c.h.b16 %v2394
    %v2908 = vunpack.c.l.b16 %v2395
    %v2909 = vunpack.c.h.b16 %v2395
    %v2910 = vunpack.c.l.b16 %v2396
    %v2911 = vunpack.c.h.b16 %v2396
    %v2912 = vunpack.c.l.b16 %v2397
    %v2913 = vunpack.c.l.b16 %v2398
    %v2914 = vunpack.c.h.b16 %v2398
    %v2915 = vunpack.c.l.b16 %v2399
    %v2916 = vunpack.c.h.b16 %v2399
    %v2917 = vunpack.c.l.b16 %v2400
    %v2918 = vunpack.c.h.b16 %v2400
    %v2919 = vunpack.c.l.b16 %v2401
    %v2920 = vunpack.c.l.b16 %v2402
    %v2921 = vunpack.c.h.b16 %v2402
    %v2922 = vunpack.c.l.b16 %v2403
    %v2923 = vunpack.c.h.b16 %v2403
    %v2924 = vunpack.c.l.b16 %v2404
    %v2925 = vunpack.c.h.b16 %v2404
    %v2926 = vunpack.c.l.b16 %v2405
    %v2927 = vunpack.c.l.b16 %v2406
    %v2928 = vunpack.c.h.b16 %v2406
    %v2929 = vunpack.c.l.b16 %v2407
    %v2930 = vunpack.c.h.b16 %v2407
    %v2931 = vunpack.c.l.b16 %v2408
    %v2932 = vunpack.c.h.b16 %v2408
    %v2933 = vunpack.c.l.b16 %v2409
    %v2934 = vunpack.c.l.b16 %v2410
    %v2935 = vunpack.c.h.b16 %v2410
    %v2936 = vunpack.c.l.b16 %v2411
    %v2937 = vunpack.c.h.b16 %v2411
    %v2938 = vunpack.c.l.b16 %v2412
    %v2939 = vunpack.c.h.b16 %v2412
    %v2940 = vunpack.c.l.b16 %v2413
    %v2941 = vunpack.c.l.b16 %v2414
    %v2942 = vunpack.c.h.b16 %v2414
    %v2943 = vunpack.c.l.b16 %v2415
    %v2944 = vunpack.c.h.b16 %v2415
    %v2945 = vunpack.c.l.b16 %v2416
    %v2946 = vunpack.c.h.b16 %v2416
    %v2947 = vunpack.c.l.b16 %v2417
    %v2948 = vunpack.c.l.b16 %v2418
    %v2949 = vunpack.c.h.b16 %v2418
    %v2950 = vunpack.c.l.b16 %v2419
    %v2951 = vunpack.c.h.b16 %v2419
    %v2952 = vunpack.c.l.b16 %v2420
    %v2953 = vunpack.c.h.b16 %v2420
    %v2954 = vunpack.c.l.b16 %v2421
    %v2955 = vunpack.c.l.b16 %v2422
    %v2956 = vunpack.c.h.b16 %v2422
    %v2957 = vunpack.c.l.b16 %v2423
    %v2958 = vunpack.c.h.b16 %v2423
    %v2959 = vunpack.c.l.b16 %v2424
    %v2960 = vunpack.c.h.b16 %v2424
    %v2961 = vunpack.c.l.b16 %v2425
    %v2962 = vunpack.c.l.b16 %v2426
    %v2963 = vunpack.c.h.b16 %v2426
    %v2964 = vunpack.c.l.b16 %v2427
    %v2965 = vunpack.c.h.b16 %v2427
    %v2966 = vunpack.c.l.b16 %v2428
    %v2967 = vunpack.c.h.b16 %v2428
    %v2968 = vunpack.c.l.b16 %v2429
    %v2969 = vunpack.c.l.b16 %v2430
    %v2970 = vunpack.c.h.b16 %v2430
    %v2971 = vunpack.c.l.b16 %v2431
    %v2972 = vunpack.c.h.b16 %v2431
    %v2973 = vunpack.c.l.b16 %v2432
    %v2974 = vunpack.c.h.b16 %v2432
    %v2975 = vunpack.c.l.b16 %v2433
    %v2976 = vunpack.c.l.b16 %v2434
    %v2977 = vunpack.c.h.b16 %v2434
    %v2978 = vunpack.c.l.b16 %v2435
    %v2979 = vunpack.c.h.b16 %v2435
    %v2980 = vunpack.c.l.b16 %v2436
    %v2981 = vunpack.c.h.b16 %v2436
    %v2982 = vunpack.c.l.b16 %v2437
    %v2983 = vunpack.c.l.b16 %v2438
    %v2984 = vunpack.c.h.b16 %v2438
    %v2985 = vunpack.c.l.b16 %v2439
    %v2986 = vunpack.c.h.b16 %v2439
    %v2987 = vunpack.c.l.b16 %v2440
    %v2988 = vunpack.c.h.b16 %v2440
    %v2989 = vunpack.c.l.b16 %v2441
    %v2990 = vunpack.c.l.b16 %v2442
    %v2991 = vunpack.c.h.b16 %v2442
    %v2992 = vunpack.c.l.b16 %v2443
    %v2993 = vunpack.c.h.b16 %v2443
    %v2994 = vunpack.c.l.b16 %v2444
    %v2995 = vunpack.c.h.b16 %v2444
    %v2996 = vunpack.c.l.b16 %v2445
    %v2997 = vunpack.c.l.b16 %v2446
    %v2998 = vunpack.c.h.b16 %v2446
    %v2999 = vunpack.c.l.b16 %v2447
    %v3000 = vunpack.c.h.b16 %v2447
    %v3001 = vunpack.c.l.b16 %v2448
    %v3002 = vunpack.c.h.b16 %v2448
    %v3003 = vunpack.c.l.b16 %v2449
    %v3004 = vunpack.c.l.b16 %v2450
    %v3005 = vunpack.c.h.b16 %v2450
    %v3006 = vunpack.c.l.b16 %v2451
    %v3007 = vunpack.c.h.b16 %v2451
    %v3008 = vunpack.c.l.b16 %v2452
    %v3009 = vunpack.c.h.b16 %v2452
    %v3010 = vunpack.c.l.b16 %v2453
    %v3011 = vunpack.c.l.b16 %v2454
    %v3012 = vunpack.c.h.b16 %v2454
    %v3013 = vunpack.c.l.b16 %v2455
    %v3014 = vunpack.c.h.b16 %v2455
    %v3015 = vunpack.c.l.b16 %v2456
    %v3016 = vunpack.c.h.b16 %v2456
    %v3017 = vunpack.c.l.b16 %v2457
    %v3018 = vunpack.c.l.b16 %v2458
    %v3019 = vunpack.c.h.b16 %v2458
    %v3020 = vunpack.c.l.b16 %v2459
    %v3021 = vunpack.c.h.b16 %v2459
    %v3022 = vunpack.c.l.b16 %v2460
    %v3023 = vunpack.c.h.b16 %v2460
    %v3024 = vunpack.c.l.b16 %v2461
    %v3025 = vunpack.c.l.b16 %v2462
    %v3026 = vunpack.c.h.b16 %v2462
    %v3027 = vunpack.c.l.b16 %v2463
    %v3028 = vunpack.c.h.b16 %v2463
    %v3029 = vunpack.c.l.b16 %v2464
    %v3030 = vunpack.c.h.b16 %v2464
    %v3031 = vunpack.c.l.b16 %v2465
    %v3032 = vunpack.c.l.b16 %v2466
    %v3033 = vunpack.c.h.b16 %v2466
    %v3034 = vunpack.c.l.b16 %v2467
    %v3035 = vunpack.c.h.b16 %v2467
    %v3036 = vunpack.c.l.b16 %v2468
    %v3037 = vunpack.c.h.b16 %v2468
    %v3038 = vunpack.c.l.b16 %v2469
    %v3039 = vunpack.c.l.b16 %v2470
    %v3040 = vunpack.c.h.b16 %v2470
    %v3041 = vunpack.c.l.b16 %v2471
    %v3042 = vunpack.c.h.b16 %v2471
    %v3043 = vunpack.c.l.b16 %v2472
    %v3044 = vunpack.c.h.b16 %v2472
    %v3045 = vunpack.c.l.b16 %v2473
    %v3046 = vunpack.c.l.b16 %v2474
    %v3047 = vunpack.c.h.b16 %v2474
    %v3048 = vunpack.c.l.b16 %v2475
    %v3049 = vunpack.c.h.b16 %v2475
    %v3050 = vunpack.c.l.b16 %v2476
    %v3051 = vunpack.c.h.b16 %v2476
    %v3052 = vunpack.c.l.b16 %v2477
    %v3053 = vunpack.c.l.b16 %v2478
    %v3054 = vunpack.c.h.b16 %v2478
    %v3055 = vunpack.c.l.b16 %v2479
    %v3056 = vunpack.c.h.b16 %v2479
    %v3057 = vunpack.c.l.b16 %v2480
    %v3058 = vunpack.c.h.b16 %v2480
    %v3059 = vunpack.c.l.b16 %v2481
    %v3060 = vunpack.c.l.b16 %v2482
    %v3061 = vunpack.c.h.b16 %v2482
    %v3062 = vunpack.c.l.b16 %v2483
    %v3063 = vunpack.c.h.b16 %v2483
    %v3064 = vunpack.c.l.b16 %v2484
    %v3065 = vunpack.c.h.b16 %v2484
    %v3066 = vunpack.c.l.b16 %v2485
    %v3067 = vunpack.c.l.b16 %v2486
    %v3068 = vunpack.c.h.b16 %v2486
    %v3069 = vunpack.c.l.b16 %v2487
    %v3070 = vunpack.c.h.b16 %v2487
    %v3071 = vunpack.c.l.b16 %v2488
    %v3072 = vunpack.c.h.b16 %v2488
    %v3073 = vunpack.c.l.b16 %v2489
    %v3074 = vunpack.c.l.b16 %v2490
    %v3075 = vunpack.c.h.b16 %v2490
    %v3076 = vunpack.c.l.b16 %v2491
    %v3077 = vunpack.c.h.b16 %v2491
    %v3078 = vunpack.c.l.b16 %v2492
    %v3079 = vunpack.c.h.b16 %v2492
    %v3080 = vunpack.c.l.b16 %v2493
    %v3081 = vpack.c.b16 %v2738, %v2731
    %v3082 = vpack.c.b16 %v2739, %v2732
    %v3083 = vpack.c.b16 %v2740, %v2733
    %v3084 = vpack.c.b16 %v2741, %v2734
    %v3085 = vpack.c.b16 %v2742, %v2735
    %v3086 = vpack.c.b16 %v2743, %v2736
    %v3087 = vpack.c.b16 %v2744, %v2737
    %v3088 = vpack.c.b16 %v2752, %v2745
    %v3089 = vpack.c.b16 %v2753, %v2746
    %v3090 = vpack.c.b16 %v2754, %v2747
    %v3091 = vpack.c.b16 %v2755, %v2748
    %v3092 = vpack.c.b16 %v2756, %v2749
    %v3093 = vpack.c.b16 %v2757, %v2750
    %v3094 = vpack.c.b16 %v2758, %v2751
    %v3095 = vpack.c.b16 %v2766, %v2759
    %v3096 = vpack.c.b16 %v2767, %v2760
    %v3097 = vpack.c.b16 %v2768, %v2761
    %v3098 = vpack.c.b16 %v2769, %v2762
    %v3099 = vpack.c.b16 %v2770, %v2763
    %v3100 = vpack.c.b16 %v2771, %v2764
    %v3101 = vpack.c.b16 %v2772, %v2765
    %v3102 = vpack.c.b16 %v2780, %v2773
    %v3103 = vpack.c.b16 %v2781, %v2774
    %v3104 = vpack.c.b16 %v2782, %v2775
    %v3105 = vpack.c.b16 %v2783, %v2776
    %v3106 = vpack.c.b16 %v2784, %v2777
    %v3107 = vpack.c.b16 %v2785, %v2778
    %v3108 = vpack.c.b16 %v2786, %v2779
    %v3109 = vpack.c.b16 %v2794, %v2787
    %v3110 = vpack.c.b16 %v2795, %v2788
    %v3111 = vpack.c.b16 %v2796, %v2789
    %v3112 = vpack.c.b16 %v2797, %v2790
    %v3113 = vpack.c.b16 %v2798, %v2791
    %v3114 = vpack.c.b16 %v2799, %v2792
    %v3115 = vpack.c.b16 %v2800, %v2793
    %v3116 = vpack.c.b16 %v2808, %v2801
    %v3117 = vpack.c.b16 %v2809, %v2802
    %v3118 = vpack.c.b16 %v2810, %v2803
    %v3119 = vpack.c.b16 %v2811, %v2804
    %v3120 = vpack.c.b16 %v2812, %v2805
    %v3121 = vpack.c.b16 %v2813, %v2806
    %v3122 = vpack.c.b16 %v2814, %v2807
    %v3123 = vpack.c.b16 %v2822, %v2815
    %v3124 = vpack.c.b16 %v2823, %v2816
    %v3125 = vpack.c.b16 %v2824, %v2817
    %v3126 = vpack.c.b16 %v2825, %v2818
    %v3127 = vpack.c.b16 %v2826, %v2819
    %v3128 = vpack.c.b16 %v2827, %v2820
    %v3129 = vpack.c.b16 %v2828, %v2821
    %v3130 = vpack.c.b16 %v2836, %v2829
    %v3131 = vpack.c.b16 %v2837, %v2830
    %v3132 = vpack.c.b16 %v2838, %v2831
    %v3133 = vpack.c.b16 %v2839, %v2832
    %v3134 = vpack.c.b16 %v2840, %v2833
    %v3135 = vpack.c.b16 %v2841, %v2834
    %v3136 = vpack.c.b16 %v2842, %v2835
    %v3137 = vpack.c.b16 %v2850, %v2843
    %v3138 = vpack.c.b16 %v2851, %v2844
    %v3139 = vpack.c.b16 %v2852, %v2845
    %v3140 = vpack.c.b16 %v2853, %v2846
    %v3141 = vpack.c.b16 %v2854, %v2847
    %v3142 = vpack.c.b16 %v2855, %v2848
    %v3143 = vpack.c.b16 %v2856, %v2849
    %v3144 = vpack.c.b16 %v2864, %v2857
    %v3145 = vpack.c.b16 %v2865, %v2858
    %v3146 = vpack.c.b16 %v2866, %v2859
    %v3147 = vpack.c.b16 %v2867, %v2860
    %v3148 = vpack.c.b16 %v2868, %v2861
    %v3149 = vpack.c.b16 %v2869, %v2862
    %v3150 = vpack.c.b16 %v2870, %v2863
    %v3151 = vpack.c.b16 %v2878, %v2871
    %v3152 = vpack.c.b16 %v2879, %v2872
    %v3153 = vpack.c.b16 %v2880, %v2873
    %v3154 = vpack.c.b16 %v2881, %v2874
    %v3155 = vpack.c.b16 %v2882, %v2875
    %v3156 = vpack.c.b16 %v2883, %v2876
    %v3157 = vpack.c.b16 %v2884, %v2877
    %v3158 = vpack.c.b16 %v2892, %v2885
    %v3159 = vpack.c.b16 %v2893, %v2886
    %v3160 = vpack.c.b16 %v2894, %v2887
    %v3161 = vpack.c.b16 %v2895, %v2888
    %v3162 = vpack.c.b16 %v2896, %v2889
    %v3163 = vpack.c.b16 %v2897, %v2890
    %v3164 = vpack.c.b16 %v2898, %v2891
    %v3165 = vpack.c.b16 %v2906, %v2899
    %v3166 = vpack.c.b16 %v2907, %v2900
    %v3167 = vpack.c.b16 %v2908, %v2901
    %v3168 = vpack.c.b16 %v2909, %v2902
    %v3169 = vpack.c.b16 %v2910, %v2903
    %v3170 = vpack.c.b16 %v2911, %v2904
    %v3171 = vpack.c.b16 %v2912, %v2905
    %v3172 = vpack.c.b16 %v2920, %v2913
    %v3173 = vpack.c.b16 %v2921, %v2914
    %v3174 = vpack.c.b16 %v2922, %v2915
    %v3175 = vpack.c.b16 %v2923, %v2916
    %v3176 = vpack.c.b16 %v2924, %v2917
    %v3177 = vpack.c.b16 %v2925, %v2918
    %v3178 = vpack.c.b16 %v2926, %v2919
    %v3179 = vpack.c.b16 %v2934, %v2927
    %v3180 = vpack.c.b16 %v2935, %v2928
    %v3181 = vpack.c.b16 %v2936, %v2929
    %v3182 = vpack.c.b16 %v2937, %v2930
    %v3183 = vpack.c.b16 %v2938, %v2931
    %v3184 = vpack.c.b16 %v2939, %v2932
    %v3185 = vpack.c.b16 %v2940, %v2933
    %v3186 = vpack.c.b16 %v2948, %v2941
    %v3187 = vpack.c.b16 %v2949, %v2942
    %v3188 = vpack.c.b16 %v2950, %v2943
    %v3189 = vpack.c.b16 %v2951, %v2944
    %v3190 = vpack.c.b16 %v2952, %v2945
    %v3191 = vpack.c.b16 %v2953, %v2946
    %v3192 = vpack.c.b16 %v2954, %v2947
    %v3193 = vpack.c.b16 %v2962, %v2955
    %v3194 = vpack.c.b16 %v2963, %v2956
    %v3195 = vpack.c.b16 %v2964, %v2957
    %v3196 = vpack.c.b16 %v2965, %v2958
    %v3197 = vpack.c.b16 %v2966, %v2959
    %v3198 = vpack.c.b16 %v2967, %v2960
    %v3199 = vpack.c.b16 %v2968, %v2961
    %v3200 = vpack.c.b16 %v2976, %v2969
    %v3201 = vpack.c.b16 %v2977, %v2970
    %v3202 = vpack.c.b16 %v2978, %v2971
    %v3203 = vpack.c.b16 %v2979, %v2972
    %v3204 = vpack.c.b16 %v2980, %v2973
    %v3205 = vpack.c.b16 %v2981, %v2974
    %v3206 = vpack.c.b16 %v2982, %v2975
    %v3207 = vpack.c.b16 %v2990, %v2983
    %v3208 = vpack.c.b16 %v2991, %v2984
    %v3209 = vpack.c.b16 %v2992, %v2985
    %v3210 = vpack.c.b16 %v2993, %v2986
    %v3211 = vpack.c.b16 %v2994, %v2987
    %v3212 = vpack.c.b16 %v2995, %v2988
    %v3213 = vpack.c.b16 %v2996, %v2989
    %v3214 = vpack.c.b16 %v3004, %v2997
    %v3215 = vpack.c.b16 %v3005, %v2998
    %v3216 = vpack.c.b16 %v3006, %v2999
    %v3217 = vpack.c.b16 %v3007, %v3000
    %v3218 = vpack.c.b16 %v3008, %v3001
    %v3219 = vpack.c.b16 %v3009, %v3002
    %v3220 = vpack.c.b16 %v3010, %v3003
    %v3221 = vpack.c.b16 %v3018, %v3011
    %v3222 = vpack.c.b16 %v3019, %v3012
    %v3223 = vpack.c.b16 %v3020, %v3013
    %v3224 = vpack.c.b16 %v3021, %v3014
    %v3225 = vpack.c.b16 %v3022, %v3015
    %v3226 = vpack.c.b16 %v3023, %v3016
    %v3227 = vpack.c.b16 %v3024, %v3017
    %v3228 = vpack.c.b16 %v3032, %v3025
    %v3229 = vpack.c.b16 %v3033, %v3026
    %v3230 = vpack.c.b16 %v3034, %v3027
    %v3231 = vpack.c.b16 %v3035, %v3028
    %v3232 = vpack.c.b16 %v3036, %v3029
    %v3233 = vpack.c.b16 %v3037, %v3030
    %v3234 = vpack.c.b16 %v3038, %v3031
    %v3235 = vpack.c.b16 %v3046, %v3039
    %v3236 = vpack.c.b16 %v3047, %v3040
    %v3237 = vpack.c.b16 %v3048, %v3041
    %v3238 = vpack.c.b16 %v3049, %v3042
    %v3239 = vpack.c.b16 %v3050, %v3043
    %v3240 = vpack.c.b16 %v3051, %v3044
    %v3241 = vpack.c.b16 %v3052, %v3045
    %v3242 = vpack.c.b16 %v3060, %v3053
    %v3243 = vpack.c.b16 %v3061, %v3054
    %v3244 = vpack.c.b16 %v3062, %v3055
    %v3245 = vpack.c.b16 %v3063, %v3056
    %v3246 = vpack.c.b16 %v3064, %v3057
    %v3247 = vpack.c.b16 %v3065, %v3058
    %v3248 = vpack.c.b16 %v3066, %v3059
    %v3249 = vpack.c.b16 %v3074, %v3067
    %v3250 = vpack.c.b16 %v3075, %v3068
    %v3251 = vpack.c.b16 %v3076, %v3069
    %v3252 = vpack.c.b16 %v3077, %v3070
    %v3253 = vpack.c.b16 %v3078, %v3071
    %v3254 = vpack.c.b16 %v3079, %v3072
    %v3255 = vpack.c.b16 %v3080, %v3073
    %v3432 = vsel %vm1268, %v2293, 0
    %3434 = vmatprep.subr.bf16.mxu0 %v3131
    %3435 = vmatpush1.bf16.msra.mxu0 %v3130
    %3436 = vmatprep.subr.bf16.mxu0 %v3124
    %3437 = vmatpush1.bf16.msra.mxu0 %v3123
    %3438 = vmatprep.subr.bf16.mxu0 %v3117
    %3439 = vmatpush1.bf16.msra.mxu0 %v3116
    %3440 = vmatprep.subr.bf16.mxu0 %v3110
    %3441 = vmatpush1.bf16.msra.mxu0 %v3109
    %3442 = vmatprep.subr.bf16.mxu0 %v3103
    %3443 = vmatpush1.bf16.msra.mxu0 %v3102
    %3444 = vmatprep.subr.bf16.mxu0 %v3096
    %3445 = vmatpush1.bf16.msra.mxu0 %v3095
    %3446 = vmatprep.subr.bf16.mxu0 %v3089
    %3447 = vmatpush1.bf16.msra.mxu0 %v3088
    %3448 = vmatprep.subr.bf16.mxu0 %v3082
    %3449 = vmatpush1.bf16.msra.mxu0 %v3081
    %3450 = vmatprep.subr.bf16.mxu0 %v3187
    %3451 = vmatpush2.bf16.msra.mxu0 %v3186
    %3452 = vmatprep.subr.bf16.mxu0 %v3180
    %3453 = vmatpush2.bf16.msra.mxu0 %v3179
    %3454 = vmatprep.subr.bf16.mxu0 %v3173
    %3455 = vmatpush2.bf16.msra.mxu0 %v3172
    %3456 = vmatprep.subr.bf16.mxu0 %v3166
    %3457 = vmatpush2.bf16.msra.mxu0 %v3165
    %3458 = vmatprep.subr.bf16.mxu0 %v3159
    %3459 = vmatpush2.bf16.msra.mxu0 %v3158
    %3460 = vmatprep.subr.bf16.mxu0 %v3152
    %3461 = vmatpush2.bf16.msra.mxu0 %v3151
    %3462 = vmatprep.subr.bf16.mxu0 %v3145
    %3463 = vmatpush2.bf16.msra.mxu0 %v3144
    %3464 = vmatprep.subr.bf16.mxu0 %v3138
    %3465 = vmatpush2.bf16.msra.mxu0 %v3137
    %3466 = vmatprep.mubr.bf16.mxu0 %v2291
    %3467 = vmatmul.mubr.bf16.gmra.mxu0 %v2290
    %v3468 = vpop.f32.mrf.mxu0
    %v3469 = vadd.f32 %v2499, %v3468
    %v3470 = vpop.f32.mrf.mxu0
    %v3471 = vadd.f32 %v2503, %v3470
    %v3472 = vpop.f32.mrf.mxu0
    %v3473 = vpop.f32.mrf.mxu0
    %3474 = vdwg.mxu0
    %3475 = vmatprep.subr.bf16.mxu0 %v3243
    %3476 = vmatpush1.bf16.msra.mxu0 %v3242
    %3477 = vmatprep.subr.bf16.mxu0 %v3236
    %3478 = vmatpush1.bf16.msra.mxu0 %v3235
    %3479 = vmatprep.subr.bf16.mxu0 %v3229
    %3480 = vmatpush1.bf16.msra.mxu0 %v3228
    %3481 = vmatprep.subr.bf16.mxu0 %v3222
    %3482 = vmatpush1.bf16.msra.mxu0 %v3221
    %3483 = vmatprep.subr.bf16.mxu0 %v3215
    %3484 = vmatpush1.bf16.msra.mxu0 %v3214
    %3485 = vmatprep.subr.bf16.mxu0 %v3208
    %3486 = vmatpush1.bf16.msra.mxu0 %v3207
    %3487 = vmatprep.subr.bf16.mxu0 %v3201
    %3488 = vmatpush1.bf16.msra.mxu0 %v3200
    %3489 = vmatprep.subr.bf16.mxu0 %v3194
    %3490 = vmatpush1.bf16.msra.mxu0 %v3193
    %3491 = vmatprep.subr.bf16.mxu0 0
    %3492 = vmatpush2.bf16.msra.mxu0 0
    %3493 = vmatprep.subr.bf16.mxu0 0
    %3494 = vmatpush2.bf16.msra.mxu0 0
    %3495 = vmatprep.subr.bf16.mxu0 0
    %3496 = vmatpush2.bf16.msra.mxu0 0
    %3497 = vmatprep.subr.bf16.mxu0 0
    %3498 = vmatpush2.bf16.msra.mxu0 0
    %3499 = vmatprep.subr.bf16.mxu0 0
    %3500 = vmatpush2.bf16.msra.mxu0 0
    %3501 = vmatprep.subr.bf16.mxu0 0
    %3502 = vmatpush2.bf16.msra.mxu0 0
    %3503 = vmatprep.subr.bf16.mxu0 0
    %3504 = vmatpush2.bf16.msra.mxu0 0
    %3505 = vmatprep.subr.bf16.mxu0 %v3250
    %3506 = vmatpush2.bf16.msra.mxu0 %v3249
    %3507 = vmatprep.mubr.bf16.mxu0 %v3432
    %3508 = vmatmul.mubr.bf16.gmra.mxu0 %v2292
    %v3509 = vpop.f32.mrf.mxu0
    %v3510 = vadd.f32 %v3469, %v3509
    %v3511 = vpop.f32.mrf.mxu0
    %v3512 = vadd.f32 %v3471, %v3511
    %v3513 = vpop.f32.mrf.mxu0
    %v3514 = vpop.f32.mrf.mxu0
    %3515 = vdwg.mxu0
    %3516 = vmatprep.subr.bf16.mxu0 %v3133
    %3517 = vmatpush1.bf16.msra.mxu0 %v3132
    %3518 = vmatprep.subr.bf16.mxu0 %v3126
    %3519 = vmatpush1.bf16.msra.mxu0 %v3125
    %3520 = vmatprep.subr.bf16.mxu0 %v3119
    %3521 = vmatpush1.bf16.msra.mxu0 %v3118
    %3522 = vmatprep.subr.bf16.mxu0 %v3112
    %3523 = vmatpush1.bf16.msra.mxu0 %v3111
    %3524 = vmatprep.subr.bf16.mxu0 %v3105
    %3525 = vmatpush1.bf16.msra.mxu0 %v3104
    %3526 = vmatprep.subr.bf16.mxu0 %v3098
    %3527 = vmatpush1.bf16.msra.mxu0 %v3097
    %3528 = vmatprep.subr.bf16.mxu0 %v3091
    %3529 = vmatpush1.bf16.msra.mxu0 %v3090
    %3530 = vmatprep.subr.bf16.mxu0 %v3084
    %3531 = vmatpush1.bf16.msra.mxu0 %v3083
    %3532 = vmatprep.subr.bf16.mxu0 %v3189
    %3533 = vmatpush2.bf16.msra.mxu0 %v3188
    %3534 = vmatprep.subr.bf16.mxu0 %v3182
    %3535 = vmatpush2.bf16.msra.mxu0 %v3181
    %3536 = vmatprep.subr.bf16.mxu0 %v3175
    %3537 = vmatpush2.bf16.msra.mxu0 %v3174
    %3538 = vmatprep.subr.bf16.mxu0 %v3168
    %3539 = vmatpush2.bf16.msra.mxu0 %v3167
    %3540 = vmatprep.subr.bf16.mxu0 %v3161
    %3541 = vmatpush2.bf16.msra.mxu0 %v3160
    %3542 = vmatprep.subr.bf16.mxu0 %v3154
    %3543 = vmatpush2.bf16.msra.mxu0 %v3153
    %3544 = vmatprep.subr.bf16.mxu0 %v3147
    %3545 = vmatpush2.bf16.msra.mxu0 %v3146
    %3546 = vmatprep.subr.bf16.mxu0 %v3140
    %3547 = vmatpush2.bf16.msra.mxu0 %v3139
    %3548 = vmatprep.mubr.bf16.mxu0 %v2291
    %3549 = vmatmul.mubr.bf16.gmra.mxu0 %v2290
    %v3550 = vpop.f32.mrf.mxu0
    %v3551 = vadd.f32 %v2507, %v3550
    %v3552 = vpop.f32.mrf.mxu0
    %v3553 = vadd.f32 %v2511, %v3552
    %v3554 = vpop.f32.mrf.mxu0
    %v3555 = vpop.f32.mrf.mxu0
    %3556 = vdwg.mxu0
    %3557 = vmatprep.subr.bf16.mxu0 %v3245
    %3558 = vmatpush1.bf16.msra.mxu0 %v3244
    %3559 = vmatprep.subr.bf16.mxu0 %v3238
    %3560 = vmatpush1.bf16.msra.mxu0 %v3237
    %3561 = vmatprep.subr.bf16.mxu0 %v3231
    %3562 = vmatpush1.bf16.msra.mxu0 %v3230
    %3563 = vmatprep.subr.bf16.mxu0 %v3224
    %3564 = vmatpush1.bf16.msra.mxu0 %v3223
    %3565 = vmatprep.subr.bf16.mxu0 %v3217
    %3566 = vmatpush1.bf16.msra.mxu0 %v3216
    %3567 = vmatprep.subr.bf16.mxu0 %v3210
    %3568 = vmatpush1.bf16.msra.mxu0 %v3209
    %3569 = vmatprep.subr.bf16.mxu0 %v3203
    %3570 = vmatpush1.bf16.msra.mxu0 %v3202
    %3571 = vmatprep.subr.bf16.mxu0 %v3196
    %3572 = vmatpush1.bf16.msra.mxu0 %v3195
    %3573 = vmatprep.subr.bf16.mxu0 0
    %3574 = vmatpush2.bf16.msra.mxu0 0
    %3575 = vmatprep.subr.bf16.mxu0 0
    %3576 = vmatpush2.bf16.msra.mxu0 0
    %3577 = vmatprep.subr.bf16.mxu0 0
    %3578 = vmatpush2.bf16.msra.mxu0 0
    %3579 = vmatprep.subr.bf16.mxu0 0
    %3580 = vmatpush2.bf16.msra.mxu0 0
    %3581 = vmatprep.subr.bf16.mxu0 0
    %3582 = vmatpush2.bf16.msra.mxu0 0
    %3583 = vmatprep.subr.bf16.mxu0 0
    %3584 = vmatpush2.bf16.msra.mxu0 0
    %3585 = vmatprep.subr.bf16.mxu0 0
    %3586 = vmatpush2.bf16.msra.mxu0 0
    %3587 = vmatprep.subr.bf16.mxu0 %v3252
    %3588 = vmatpush2.bf16.msra.mxu0 %v3251
    %3589 = vmatprep.mubr.bf16.mxu0 %v3432
    %3590 = vmatmul.mubr.bf16.gmra.mxu0 %v2292
    %v3591 = vpop.f32.mrf.mxu0
    %v3592 = vadd.f32 %v3551, %v3591
    %v3593 = vpop.f32.mrf.mxu0
    %v3594 = vadd.f32 %v3553, %v3593
    %v3595 = vpop.f32.mrf.mxu0
    %v3596 = vpop.f32.mrf.mxu0
    %3597 = vdwg.mxu0
    %3598 = vmatprep.subr.bf16.mxu0 %v3135
    %3599 = vmatpush1.bf16.msra.mxu0 %v3134
    %3600 = vmatprep.subr.bf16.mxu0 %v3128
    %3601 = vmatpush1.bf16.msra.mxu0 %v3127
    %3602 = vmatprep.subr.bf16.mxu0 %v3121
    %3603 = vmatpush1.bf16.msra.mxu0 %v3120
    %3604 = vmatprep.subr.bf16.mxu0 %v3114
    %3605 = vmatpush1.bf16.msra.mxu0 %v3113
    %3606 = vmatprep.subr.bf16.mxu0 %v3107
    %3607 = vmatpush1.bf16.msra.mxu0 %v3106
    %3608 = vmatprep.subr.bf16.mxu0 %v3100
    %3609 = vmatpush1.bf16.msra.mxu0 %v3099
    %3610 = vmatprep.subr.bf16.mxu0 %v3093
    %3611 = vmatpush1.bf16.msra.mxu0 %v3092
    %3612 = vmatprep.subr.bf16.mxu0 %v3086
    %3613 = vmatpush1.bf16.msra.mxu0 %v3085
    %3614 = vmatprep.subr.bf16.mxu0 %v3191
    %3615 = vmatpush2.bf16.msra.mxu0 %v3190
    %3616 = vmatprep.subr.bf16.mxu0 %v3184
    %3617 = vmatpush2.bf16.msra.mxu0 %v3183
    %3618 = vmatprep.subr.bf16.mxu0 %v3177
    %3619 = vmatpush2.bf16.msra.mxu0 %v3176
    %3620 = vmatprep.subr.bf16.mxu0 %v3170
    %3621 = vmatpush2.bf16.msra.mxu0 %v3169
    %3622 = vmatprep.subr.bf16.mxu0 %v3163
    %3623 = vmatpush2.bf16.msra.mxu0 %v3162
    %3624 = vmatprep.subr.bf16.mxu0 %v3156
    %3625 = vmatpush2.bf16.msra.mxu0 %v3155
    %3626 = vmatprep.subr.bf16.mxu0 %v3149
    %3627 = vmatpush2.bf16.msra.mxu0 %v3148
    %3628 = vmatprep.subr.bf16.mxu0 %v3142
    %3629 = vmatpush2.bf16.msra.mxu0 %v3141
    %3630 = vmatprep.mubr.bf16.mxu0 %v2291
    %3631 = vmatmul.mubr.bf16.gmra.mxu0 %v2290
    %v3632 = vpop.f32.mrf.mxu0
    %v3633 = vadd.f32 %v2515, %v3632
    %v3634 = vpop.f32.mrf.mxu0
    %v3635 = vadd.f32 %v2519, %v3634
    %v3636 = vpop.f32.mrf.mxu0
    %v3637 = vpop.f32.mrf.mxu0
    %3638 = vdwg.mxu0
    %3639 = vmatprep.subr.bf16.mxu0 %v3247
    %3640 = vmatpush1.bf16.msra.mxu0 %v3246
    %3641 = vmatprep.subr.bf16.mxu0 %v3240
    %3642 = vmatpush1.bf16.msra.mxu0 %v3239
    %3643 = vmatprep.subr.bf16.mxu0 %v3233
    %3644 = vmatpush1.bf16.msra.mxu0 %v3232
    %3645 = vmatprep.subr.bf16.mxu0 %v3226
    %3646 = vmatpush1.bf16.msra.mxu0 %v3225
    %3647 = vmatprep.subr.bf16.mxu0 %v3219
    %3648 = vmatpush1.bf16.msra.mxu0 %v3218
    %3649 = vmatprep.subr.bf16.mxu0 %v3212
    %3650 = vmatpush1.bf16.msra.mxu0 %v3211
    %3651 = vmatprep.subr.bf16.mxu0 %v3205
    %3652 = vmatpush1.bf16.msra.mxu0 %v3204
    %3653 = vmatprep.subr.bf16.mxu0 %v3198
    %3654 = vmatpush1.bf16.msra.mxu0 %v3197
    %3655 = vmatprep.subr.bf16.mxu0 0
    %3656 = vmatpush2.bf16.msra.mxu0 0
    %3657 = vmatprep.subr.bf16.mxu0 0
    %3658 = vmatpush2.bf16.msra.mxu0 0
    %3659 = vmatprep.subr.bf16.mxu0 0
    %3660 = vmatpush2.bf16.msra.mxu0 0
    %3661 = vmatprep.subr.bf16.mxu0 0
    %3662 = vmatpush2.bf16.msra.mxu0 0
    %3663 = vmatprep.subr.bf16.mxu0 0
    %3664 = vmatpush2.bf16.msra.mxu0 0
    %3665 = vmatprep.subr.bf16.mxu0 0
    %3666 = vmatpush2.bf16.msra.mxu0 0
    %3667 = vmatprep.subr.bf16.mxu0 0
    %3668 = vmatpush2.bf16.msra.mxu0 0
    %3669 = vmatprep.subr.bf16.mxu0 %v3254
    %3670 = vmatpush2.bf16.msra.mxu0 %v3253
    %3671 = vmatprep.mubr.bf16.mxu0 %v3432
    %3672 = vmatmul.mubr.bf16.gmra.mxu0 %v2292
    %v3673 = vpop.f32.mrf.mxu0
    %v3674 = vadd.f32 %v3633, %v3673
    %v3675 = vpop.f32.mrf.mxu0
    %v3676 = vadd.f32 %v3635, %v3675
    %v3677 = vpop.f32.mrf.mxu0
    %v3678 = vpop.f32.mrf.mxu0
    %3679 = vdwg.mxu0
    %3680 = vmatprep.subr.bf16.mxu0 0
    %3681 = vmatpush1.bf16.msra.mxu0 %v3136
    %3682 = vmatprep.subr.bf16.mxu0 0
    %3683 = vmatpush1.bf16.msra.mxu0 %v3129
    %3684 = vmatprep.subr.bf16.mxu0 0
    %3685 = vmatpush1.bf16.msra.mxu0 %v3122
    %3686 = vmatprep.subr.bf16.mxu0 0
    %3687 = vmatpush1.bf16.msra.mxu0 %v3115
    %3688 = vmatprep.subr.bf16.mxu0 0
    %3689 = vmatpush1.bf16.msra.mxu0 %v3108
    %3690 = vmatprep.subr.bf16.mxu0 0
    %3691 = vmatpush1.bf16.msra.mxu0 %v3101
    %3692 = vmatprep.subr.bf16.mxu0 0
    %3693 = vmatpush1.bf16.msra.mxu0 %v3094
    %3694 = vmatprep.subr.bf16.mxu0 0
    %3695 = vmatpush1.bf16.msra.mxu0 %v3087
    %3696 = vmatprep.subr.bf16.mxu0 0
    %3697 = vmatpush2.bf16.msra.mxu0 %v3192
    %3698 = vmatprep.subr.bf16.mxu0 0
    %3699 = vmatpush2.bf16.msra.mxu0 %v3185
    %3700 = vmatprep.subr.bf16.mxu0 0
    %3701 = vmatpush2.bf16.msra.mxu0 %v3178
    %3702 = vmatprep.subr.bf16.mxu0 0
    %3703 = vmatpush2.bf16.msra.mxu0 %v3171
    %3704 = vmatprep.subr.bf16.mxu0 0
    %3705 = vmatpush2.bf16.msra.mxu0 %v3164
    %3706 = vmatprep.subr.bf16.mxu0 0
    %3707 = vmatpush2.bf16.msra.mxu0 %v3157
    %3708 = vmatprep.subr.bf16.mxu0 0
    %3709 = vmatpush2.bf16.msra.mxu0 %v3150
    %3710 = vmatprep.subr.bf16.mxu0 0
    %3711 = vmatpush2.bf16.msra.mxu0 %v3143
    %3712 = vmatprep.mubr.bf16.mxu0 %v2291
    %3713 = vmatmul.mubr.bf16.gmra.mxu0 %v2290
    %v3714 = vpop.f32.mrf.mxu0
    %v3715 = vadd.f32 %v2523, %v3714
    %v3716 = vpop.f32.mrf.mxu0
    %v3717 = vpop.f32.mrf.mxu0
    %v3718 = vpop.f32.mrf.mxu0
    %3719 = vdwg.mxu0
    %3720 = vmatprep.subr.bf16.mxu0 0
    %3721 = vmatpush1.bf16.msra.mxu0 %v3248
    %3722 = vmatprep.subr.bf16.mxu0 0
    %3723 = vmatpush1.bf16.msra.mxu0 %v3241
    %3724 = vmatprep.subr.bf16.mxu0 0
    %3725 = vmatpush1.bf16.msra.mxu0 %v3234
    %3726 = vmatprep.subr.bf16.mxu0 0
    %3727 = vmatpush1.bf16.msra.mxu0 %v3227
    %3728 = vmatprep.subr.bf16.mxu0 0
    %3729 = vmatpush1.bf16.msra.mxu0 %v3220
    %3730 = vmatprep.subr.bf16.mxu0 0
    %3731 = vmatpush1.bf16.msra.mxu0 %v3213
    %3732 = vmatprep.subr.bf16.mxu0 0
    %3733 = vmatpush1.bf16.msra.mxu0 %v3206
    %3734 = vmatprep.subr.bf16.mxu0 0
    %3735 = vmatpush1.bf16.msra.mxu0 %v3199
    %3736 = vmatprep.subr.bf16.mxu0 0
    %3737 = vmatpush2.bf16.msra.mxu0 0
    %3738 = vmatprep.subr.bf16.mxu0 0
    %3739 = vmatpush2.bf16.msra.mxu0 0
    %3740 = vmatprep.subr.bf16.mxu0 0
    %3741 = vmatpush2.bf16.msra.mxu0 0
    %3742 = vmatprep.subr.bf16.mxu0 0
    %3743 = vmatpush2.bf16.msra.mxu0 0
    %3744 = vmatprep.subr.bf16.mxu0 0
    %3745 = vmatpush2.bf16.msra.mxu0 0
    %3746 = vmatprep.subr.bf16.mxu0 0
    %3747 = vmatpush2.bf16.msra.mxu0 0
    %3748 = vmatprep.subr.bf16.mxu0 0
    %3749 = vmatpush2.bf16.msra.mxu0 0
    %3750 = vmatprep.subr.bf16.mxu0 0
    %3751 = vmatpush2.bf16.msra.mxu0 %v3255
    %3752 = vmatprep.mubr.bf16.mxu0 %v3432
    %3753 = vmatmul.mubr.bf16.gmra.mxu0 %v2292
    %v3754 = vpop.f32.mrf.mxu0
    %v3755 = vadd.f32 %v3715, %v3754
    %v3756 = vpop.f32.mrf.mxu0
    %v3757 = vpop.f32.mrf.mxu0
    %v3758 = vpop.f32.mrf.mxu0
    %3759 = vdwg.mxu0
    %v3760 = vsub.f32 0.0, %v3510
    %v3761 = vsub.f32 0.0, %v3512
    %v3762 = vsub.f32 0.0, %v3592
    %v3763 = vsub.f32 0.0, %v3594
    %v3764 = vsub.f32 0.0, %v3674
    %v3765 = vsub.f32 0.0, %v3676
    %v3766 = vsub.f32 0.0, %v3755
    %v3767 = vmin.f32 %v3760, 80.0
    %v3768 = vmin.f32 %v3761, 80.0
    %v3769 = vmin.f32 %v3762, 80.0
    %v3770 = vmin.f32 %v3763, 80.0
    %v3771 = vmin.f32 %v3764, 80.0
    %v3772 = vmin.f32 %v3765, 80.0
    %v3773 = vmin.f32 %v3766, 80.0
    %v3774 = vmul.f32 %v3767, 1.442695
    %v3775 = vpow.pop %v3774
    %v3776 = vmul.f32 %v3768, 1.442695
    %v3777 = vpow.pop %v3776
    %v3778 = vmul.f32 %v3769, 1.442695
    %v3779 = vpow.pop %v3778
    %v3780 = vmul.f32 %v3770, 1.442695
    %v3781 = vpow.pop %v3780
    %v3782 = vmul.f32 %v3771, 1.442695
    %v3783 = vpow.pop %v3782
    %v3784 = vmul.f32 %v3772, 1.442695
    %v3785 = vpow.pop %v3784
    %v3786 = vmul.f32 %v3773, 1.442695
    %v3787 = vpow.pop %v3786
    %v3788 = vadd.f32 %v3775, 1.0
    %v3789 = vadd.f32 %v3777, 1.0
    %v3790 = vadd.f32 %v3779, 1.0
    %v3791 = vadd.f32 %v3781, 1.0
    %v3792 = vadd.f32 %v3783, 1.0
    %v3793 = vadd.f32 %v3785, 1.0
    %v3794 = vadd.f32 %v3787, 1.0
    %v3795 = vrcp.pop %v3788
    %v3796 = vrcp.pop %v3789
    %v3797 = vrcp.pop %v3790
    %v3798 = vrcp.pop %v3791
    %v3799 = vrcp.pop %v3792
    %v3800 = vrcp.pop %v3793
    %v3801 = vrcp.pop %v3794
    %3802 = vst [vmem:[#allocation2] sm:$0xff] %v3795
    %3803 = vst [vmem:[#allocation2 + $0x8] sm:$0xff] %v3796
    %3804 = vst [vmem:[#allocation2 + $0x10] sm:$0xff] %v3797
    %3805 = vst [vmem:[#allocation2 + $0x18] sm:$0xff] %v3798
    %3806 = vst [vmem:[#allocation2 + $0x20] sm:$0xff] %v3799
    %3807 = vst [vmem:[#allocation2 + $0x28] sm:$0xff] %v3800
    %3808 = vst.msk [vmem:[#allocation2 + $0x30] sm:$0xff] %vm1268, %v3801
    // Predicated region
    $region62: #{tpu_custom_call.1} parent=1 // pred_check
      _
    $region63: #{tpu_custom_call.1} parent=1 // pred_check_branch
      %3810 = sbr.rel (0) target = $region65
    $region64: #{tpu_custom_call.1} parent=1 // pred_region
      %s3812 = ssub.s32 896, 896
      %3813 = vsyncadd [#allocation3], %s3812
      %s3815 = sshll.u32 [#allocation2], 4
      %s3816 = int_to_ptr.vmem [resolvable:$true] %s3815
      %3818 = dma.vmem_to_hbm [thread:$0]  %s3816, 896, %s15, [#allocation3]
    $region65: #{tpu_custom_call.1} parent=1 // pred_fallthru
      _
    // Predicated region
    $region66: #{tpu_custom_call.1} parent=1 // pred_check
      _
    $region67: #{tpu_custom_call.1} parent=1 // pred_check_branch
      %3820 = sbr.rel (0) target = $region69
    $region68: #{tpu_custom_call.1} parent=1 // pred_region
      %s3822 = ssub.s32 128, 128
      %3823 = vsyncadd [#allocation5], %s3822
      %s3825 = sshll.u32 [#allocation4], 4
      %s3826 = int_to_ptr.vmem [resolvable:$true] %s3825
      %3828 = dma.vmem_to_hbm [thread:$0]  %s3826, 128, %s16, [#allocation5]
    $region69: #{tpu_custom_call.1} parent=1 // pred_fallthru
      _
    // Predicated region
    $region70: #{tpu_custom_call.1} parent=1 // pred_check
      _
    $region71: #{tpu_custom_call.1} parent=1 // pred_check_branch
      %3830 = sbr.rel (0) target = $region73
    $region72: #{tpu_custom_call.1} parent=1 // pred_region
      %s3832 = ssub.s32 128, 128
      %3833 = vsyncadd [#allocation5], %s3832
      %s3835 = sshll.u32 [#allocation6], 4
      %s3836 = int_to_ptr.vmem [resolvable:$true] %s3835
      %3838 = dma.vmem_to_hbm [thread:$0]  %s3836, 128, %s17, [#allocation5]
    $region73: #{tpu_custom_call.1} parent=1 // pred_fallthru
      _
    // Predicated region
    $region74: #{tpu_custom_call.1} parent=1 // pred_check
      _
    $region75: #{tpu_custom_call.1} parent=1 // pred_check_branch
      %3840 = sbr.rel (0) target = $region77
    $region76: #{tpu_custom_call.1} parent=1 // pred_region
      %3841 = dma.done [#allocation3], 896
    $region77: #{tpu_custom_call.1} parent=1 // pred_fallthru
      _
    // Predicated region
    $region78: #{tpu_custom_call.1} parent=1 // pred_check
      _
    $region79: #{tpu_custom_call.1} parent=1 // pred_check_branch
      %3843 = sbr.rel (0) target = $region81
    $region80: #{tpu_custom_call.1} parent=1 // pred_region
      %3844 = dma.done [#allocation5], 128
    $region81: #{tpu_custom_call.1} parent=1 // pred_fallthru
      _
    // Predicated region
    $region82: #{tpu_custom_call.1} parent=1 // pred_check
      _
    $region83: #{tpu_custom_call.1} parent=1 // pred_check_branch
      %3846 = sbr.rel (0) target = $region85
    $region84: #{tpu_custom_call.1} parent=1 // pred_region
      %3847 = dma.done [#allocation5], 128
    $region85: #{tpu_custom_call.1} parent=1 // pred_fallthru
      _
    %3848 = vsyncpa [#allocation3], 1
    %3849 = vsyncpa [#allocation5], 1

</llo_original>
